<compile_context>
chip_gen: v6e
topology: v6e:2x2x1
jax: 0.10.0
libtpu: 0.0.40
codegen_flags: <defaults>
</compile_context>

<pallas_src>
import math
import functools

import jax
import jax.numpy as jnp
from jax.experimental import pallas as pl
from jax.experimental.pallas import tpu as pltpu

PAD = 2  # halo for k=5 conv / moving-average window 5


def _dual_branch_pallas(x, w1, b1, w2, b2,                 # periodic
                        w3, b3, w5, b5,                    # multi-scale convs
                        wf3, wf5, wft, bfu,                # aperiodic fusion MLP
                        wpq, wakv, wo, bg,                 # adaptive fusion
                        wa1, ba1, wa2, ba2,                # anomaly MLP
                        wpr, bpr, gamma, beta):            # output projection
    B, T, C = x.shape
    H = wa1.shape[1]
    scale = 1.0 / math.sqrt(C)
    bf16 = jnp.bfloat16

    def kernel(x_ref, w1_ref, b1_ref, w2_ref, b2_ref,
               w3_ref, b3_ref, w5_ref, b5_ref,
               wf3_ref, wf5_ref, wft_ref, bfu_ref,
               wpq_ref, wakv_ref, wo_ref, bg_ref,
               wa1_ref, ba1_ref, wa2_ref, ba2_ref,
               wpr_ref, bpr_ref, g_ref, be_ref,
               o_ref, s_ref, pad_ref):
        xv = x_ref[...]                                     # (T, C) f32, loaded once

        # ---------------- periodic branch (pointwise PKI mixing) ----------------
        xb = xv.astype(bf16)
        h1 = jax.nn.gelu(
            jnp.dot(xb, w1_ref[...], preferred_element_type=jnp.float32) + b1_ref[...])
        p = xv + jnp.dot(h1.astype(bf16), w2_ref[...],
                         preferred_element_type=jnp.float32) + b2_ref[...]

        # ---------------- aperiodic branch (MSTC k=3,5 + VPU trend) -------------
        pad_ref[...] = jnp.zeros_like(pad_ref)              # zero halo rows
        pad_ref[PAD:PAD + T, :] = xv                        # center rows = x
        s3acc = jnp.zeros((T, C), jnp.float32)
        s5acc = jnp.zeros((T, C), jnp.float32)
        trend = jnp.zeros((T, C), jnp.float32)
        for idx, d in enumerate(range(-PAD, PAD + 1)):      # static, unrolled
            xs = pad_ref[PAD + d:PAD + d + T, :]            # shifted (zero-padded) slice
            xsb = xs.astype(bf16)
            s5acc = s5acc + jnp.dot(xsb, w5_ref[idx],
                                    preferred_element_type=jnp.float32)
            if abs(d) <= 1:
                s3acc = s3acc + jnp.dot(xsb, w3_ref[d + 1],
                                        preferred_element_type=jnp.float32)
            trend = trend + xs                              # VPU moving average
        s3 = jax.nn.gelu(s3acc + b3_ref[...])
        s5 = jax.nn.gelu(s5acc + b5_ref[...])
        trend = trend * (1.0 / (2 * PAD + 1))
        fpre = (jnp.dot(s3.astype(bf16), wf3_ref[...], preferred_element_type=jnp.float32)
                + jnp.dot(s5.astype(bf16), wf5_ref[...], preferred_element_type=jnp.float32)
                + jnp.dot(trend.astype(bf16), wft_ref[...], preferred_element_type=jnp.float32)
                + bfu_ref[...])
        a = xv + jax.nn.gelu(fpre)

        # ---------------- adaptive fusion (cross-attn + dynamic gate) -----------
        pb = p.astype(bf16)
        ab = a.astype(bf16)
        pq = jnp.dot(pb, wpq_ref[...], preferred_element_type=jnp.float32)   # (T, 2C)
        akv = jnp.dot(ab, wakv_ref[...], preferred_element_type=jnp.float32) # (T, 3C)
        q = pq[:, :C]
        gp = pq[:, C:2 * C]
        k = akv[:, :C]
        v = akv[:, C:2 * C]
        ga = akv[:, 2 * C:3 * C]
        s = jax.lax.dot_general(q.astype(bf16), k.astype(bf16),
                                (((1,), (1,)), ((), ())),
                                preferred_element_type=jnp.float32) * scale  # (T, T)
        s = s - jnp.max(s, axis=-1, keepdims=True)          # stabilized softmax
        e = jnp.exp(s)
        attn = e / jnp.sum(e, axis=-1, keepdims=True)
        cross = jnp.dot(attn.astype(bf16), v.astype(bf16),
                        preferred_element_type=jnp.float32)
        cross = jnp.dot(cross.astype(bf16), wo_ref[...],
                        preferred_element_type=jnp.float32)
        gate = jax.nn.sigmoid(gp + ga + bg_ref[...])
        fused = gate * p + (1.0 - gate) * a + cross

        # ---------------- anomaly-aware fusion ----------------------------------
        diff = jnp.abs(p - a)
        h = jnp.maximum(
            jnp.dot(diff.astype(bf16), wa1_ref[...],
                    preferred_element_type=jnp.float32) + ba1_ref[...], 0.0)
        logit = jnp.sum(h * wa2_ref[...], axis=-1, keepdims=True) + ba2_ref[...]
        score = jax.nn.sigmoid(logit)                        # (T, 1)
        feat = p * (1.0 - score) + a * score

        # ---------------- output projection: Linear -> LN -> ReLU (+ residual) --
        comb = (fused + feat) * 0.5
        y = jnp.dot(comb.astype(bf16), wpr_ref[...],
                    preferred_element_type=jnp.float32) + bpr_ref[...]
        mu = jnp.mean(y, axis=-1, keepdims=True)
        var = jnp.mean((y - mu) ** 2, axis=-1, keepdims=True)
        yn = (y - mu) * jax.lax.rsqrt(var + 1e-5)
        yn = yn * g_ref[...] + be_ref[...]
        o_ref[...] = jnp.maximum(yn, 0.0) + xv               # Dropout = identity
        # score stays in VMEM for the blend above; this narrow (T,1) store is only
        # the user-facing output of the module.
        s_ref[...] = score

    def wspec(shape):
        return pl.BlockSpec(shape, lambda b: (0,) * len(shape))

    grid_spec = pltpu.PrefetchScalarGridSpec(
        num_scalar_prefetch=0,
        grid=(B,),
        in_specs=[
            pl.BlockSpec((None, T, C), lambda b: (b, 0, 0)),          # x
            wspec((C, C)), wspec((1, C)), wspec((C, C)), wspec((1, C)),
            wspec((3, C, C)), wspec((1, C)), wspec((5, C, C)), wspec((1, C)),
            wspec((C, C)), wspec((C, C)), wspec((C, C)), wspec((1, C)),
            wspec((C, 2 * C)), wspec((C, 3 * C)), wspec((C, C)), wspec((1, C)),
            wspec((C, H)), wspec((1, H)), wspec((1, H)), wspec((1, 1)),
            wspec((C, C)), wspec((1, C)), wspec((1, C)), wspec((1, C)),
        ],
        out_specs=[
            pl.BlockSpec((None, T, C), lambda b: (b, 0, 0)),
            pl.BlockSpec((None, T, 1), lambda b: (b, 0, 0)),
        ],
        scratch_shapes=[pltpu.VMEM((T + 2 * PAD, C), jnp.float32)],
    )

    return pl.pallas_call(
        kernel,
        out_shape=(jax.ShapeDtypeStruct((B, T, C), jnp.float32),
                   jax.ShapeDtypeStruct((B, T, 1), jnp.float32)),
        grid_spec=grid_spec,
        compiler_params=pltpu.CompilerParams(
            dimension_semantics=("parallel",)),   # shard batch across TCs (v7x)
    )(x, w1, b1, w2, b2, w3, b3, w5, b5, wf3, wf5, wft, bfu,
      wpq, wakv, wo, bg, wa1, ba1, wa2, ba2, wpr, bpr, gamma, beta)


@jax.jit
def dual_branch_block(x, params):
    """Returns (output (B,T,C), anomaly_scores (B,T,1))."""
    B, T, C = x.shape
    bf16 = jnp.bfloat16
    pp, ap = params["periodic"], params["aperiodic"]
    fu, an, pr = params["fusion"], params["anomaly"], params["proj"]
    H = an["w1"].shape[1]

    # One-time weight packing (bf16 for MXU operands, fused projection matrices).
    w1 = pp["w1"].astype(bf16); b1 = pp["b1"].reshape(1, C)
    w2 = pp["w2"].astype(bf16); b2 = pp["b2"].reshape(1, C)
    w3 = ap["w_k3"].astype(bf16); b3 = ap["b_k3"].reshape(1, C)
    w5 = ap["w_k5"].astype(bf16); b5 = ap["b_k5"].reshape(1, C)
    wf = ap["w_fuse"]
    wf3 = wf[:C].astype(bf16); wf5 = wf[C:2 * C].astype(bf16); wft = wf[2 * C:].astype(bf16)
    bfu = ap["b_fuse"].reshape(1, C)
    wpq = jnp.concatenate([fu["wq"], fu["wg1"]], axis=1).astype(bf16)          # (C, 2C)
    wakv = jnp.concatenate([fu["wk"], fu["wv"], fu["wg2"]], axis=1).astype(bf16)  # (C, 3C)
    wo = fu["wo"].astype(bf16); bg = fu["bg"].reshape(1, C)
    wa1 = an["w1"].astype(bf16); ba1 = an["b1"].reshape(1, H)
    wa2 = an["w2"].reshape(1, H)        # (H,1) -> row vector for VPU reduction
    ba2 = an["b2"].reshape(1, 1)
    wpr = pr["w"].astype(bf16); bpr = pr["b"].reshape(1, C)
    gamma = pr["gamma"].reshape(1, C); beta = pr["beta"].reshape(1, C)

    return _dual_branch_pallas(x, w1, b1, w2, b2, w3, b3, w5, b5,
                               wf3, wf5, wft, bfu, wpq, wakv, wo, bg,
                               wa1, ba1, wa2, ba2, wpr, bpr, gamma, beta)


# ----------------------------------------------------------------------------
# Deterministic parameter init
# ----------------------------------------------------------------------------

def init_params(key, d_model):
    C = d_model
    H = C // 2
    ks = jax.random.split(key, 16)
    n = lambda k, shape: (0.02 * jax.random.normal(k, shape)).astype(jnp.float32)
    z = lambda shape: jnp.zeros(shape, jnp.float32)
    # (moving-average "trend" has no weights: it is computed on the VPU in-kernel)
    return {
        "periodic": {"w1": n(ks[0], (C, C)), "b1": z((C,)),
                     "w2": n(ks[1], (C, C)), "b2": z((C,))},
        "aperiodic": {"w_k3": n(ks[2], (3, C, C)), "b_k3": z((C,)),
                      "w_k5": n(ks[3], (5, C, C)), "b_k5": z((C,)),
                      "w_fuse": n(ks[4], (3 * C, C)), "b_fuse": z((C,))},
        "fusion": {"wq": n(ks[5], (C, C)), "wk": n(ks[6], (C, C)),
                   "wv": n(ks[7], (C, C)), "wo": n(ks[8], (C, C)),
                   "wg1": n(ks[9], (C, C)), "wg2": n(ks[10], (C, C)), "bg": z((C,))},
        "anomaly": {"w1": n(ks[11], (C, H)), "b1": z((H,)),
                    "w2": n(ks[12], (H, 1)), "b2": z((1,))},
        "proj": {"w": n(ks[13], (C, C)), "b": z((C,)),
                 "gamma": jnp.ones((C,), jnp.float32), "beta": z((C,))},
    }


# ----------------------------------------------------------------------------
# Main
# ----------------------------------------------------------------------------

if __name__ == "__main__":
    B, T, C = 2, 16, 32  # batch, seq_len, d_model
    key = jax.random.PRNGKey(0)
    k_x, k_p = jax.random.split(key)
    x = jax.random.normal(k_x, (B, T, C), dtype=jnp.float32)
    params = init_params(k_p, C)

    out, scores = dual_branch_block(x, params)
    out = jax.block_until_ready(out)
    scores = jax.block_until_ready(scores)

    assert out.shape == (B, T, C), out.shape
    assert scores.shape == (B, T, 1), scores.shape
    assert bool(jnp.all(jnp.isfinite(out))) and bool(jnp.all(jnp.isfinite(scores)))
    print("KERNEL_OK")
</pallas_src>

<mosaic_0001>
module attributes {stable_mosaic.version = 11 : i64} {
  func.func @kernel(%arg0: i32, %arg1: memref<1x16x32xf32, #tpu.memory_space<vmem>>, %arg2: memref<32x32xbf16, #tpu.memory_space<vmem>>, %arg3: memref<1x32xf32, #tpu.memory_space<vmem>>, %arg4: memref<32x32xbf16, #tpu.memory_space<vmem>>, %arg5: memref<1x32xf32, #tpu.memory_space<vmem>>, %arg6: memref<3x32x32xbf16, #tpu.memory_space<vmem>>, %arg7: memref<1x32xf32, #tpu.memory_space<vmem>>, %arg8: memref<5x32x32xbf16, #tpu.memory_space<vmem>>, %arg9: memref<1x32xf32, #tpu.memory_space<vmem>>, %arg10: memref<32x32xbf16, #tpu.memory_space<vmem>>, %arg11: memref<32x32xbf16, #tpu.memory_space<vmem>>, %arg12: memref<32x32xbf16, #tpu.memory_space<vmem>>, %arg13: memref<1x32xf32, #tpu.memory_space<vmem>>, %arg14: memref<32x64xbf16, #tpu.memory_space<vmem>>, %arg15: memref<32x96xbf16, #tpu.memory_space<vmem>>, %arg16: memref<32x32xbf16, #tpu.memory_space<vmem>>, %arg17: memref<1x32xf32, #tpu.memory_space<vmem>>, %arg18: memref<32x16xbf16, #tpu.memory_space<vmem>>, %arg19: memref<1x16xf32, #tpu.memory_space<vmem>>, %arg20: memref<1x16xf32, #tpu.memory_space<vmem>>, %arg21: memref<1x1xf32, #tpu.memory_space<vmem>>, %arg22: memref<32x32xbf16, #tpu.memory_space<vmem>>, %arg23: memref<1x32xf32, #tpu.memory_space<vmem>>, %arg24: memref<1x32xf32, #tpu.memory_space<vmem>>, %arg25: memref<1x32xf32, #tpu.memory_space<vmem>>, %arg26: memref<1x16x32xf32, #tpu.memory_space<vmem>>, %arg27: memref<1x16x1xf32, #tpu.memory_space<vmem>>, %arg28: memref<20x32xf32, #tpu.memory_space<vmem>>) attributes {dimension_semantics = [#tpu.dimension_semantics<parallel>], iteration_bounds = array<i64: 2>, scalar_prefetch = 0 : i64, scratch_operands = 1 : i64, tpu.core_type = #tpu.core_type<tc>, window_params = [{transform_indices = @transform_0, window_bounds = array<i64: 1, 16, 32>}, {pipeline_mode = #tpu.pipeline_mode<synchronous>, transform_indices = @transform_1, window_bounds = array<i64: 32, 32>}, {pipeline_mode = #tpu.pipeline_mode<synchronous>, transform_indices = @transform_2, window_bounds = array<i64: 1, 32>}, {pipeline_mode = #tpu.pipeline_mode<synchronous>, transform_indices = @transform_3, window_bounds = array<i64: 32, 32>}, {pipeline_mode = #tpu.pipeline_mode<synchronous>, transform_indices = @transform_4, window_bounds = array<i64: 1, 32>}, {pipeline_mode = #tpu.pipeline_mode<synchronous>, transform_indices = @transform_5, window_bounds = array<i64: 3, 32, 32>}, {pipeline_mode = #tpu.pipeline_mode<synchronous>, transform_indices = @transform_6, window_bounds = array<i64: 1, 32>}, {pipeline_mode = #tpu.pipeline_mode<synchronous>, transform_indices = @transform_7, window_bounds = array<i64: 5, 32, 32>}, {pipeline_mode = #tpu.pipeline_mode<synchronous>, transform_indices = @transform_8, window_bounds = array<i64: 1, 32>}, {pipeline_mode = #tpu.pipeline_mode<synchronous>, transform_indices = @transform_9, window_bounds = array<i64: 32, 32>}, {pipeline_mode = #tpu.pipeline_mode<synchronous>, transform_indices = @transform_10, window_bounds = array<i64: 32, 32>}, {pipeline_mode = #tpu.pipeline_mode<synchronous>, transform_indices = @transform_11, window_bounds = array<i64: 32, 32>}, {pipeline_mode = #tpu.pipeline_mode<synchronous>, transform_indices = @transform_12, window_bounds = array<i64: 1, 32>}, {pipeline_mode = #tpu.pipeline_mode<synchronous>, transform_indices = @transform_13, window_bounds = array<i64: 32, 64>}, {pipeline_mode = #tpu.pipeline_mode<synchronous>, transform_indices = @transform_14, window_bounds = array<i64: 32, 96>}, {pipeline_mode = #tpu.pipeline_mode<synchronous>, transform_indices = @transform_15, window_bounds = array<i64: 32, 32>}, {pipeline_mode = #tpu.pipeline_mode<synchronous>, transform_indices = @transform_16, window_bounds = array<i64: 1, 32>}, {pipeline_mode = #tpu.pipeline_mode<synchronous>, transform_indices = @transform_17, window_bounds = array<i64: 32, 16>}, {pipeline_mode = #tpu.pipeline_mode<synchronous>, transform_indices = @transform_18, window_bounds = array<i64: 1, 16>}, {pipeline_mode = #tpu.pipeline_mode<synchronous>, transform_indices = @transform_19, window_bounds = array<i64: 1, 16>}, {pipeline_mode = #tpu.pipeline_mode<synchronous>, transform_indices = @transform_20, window_bounds = array<i64: 1, 1>}, {pipeline_mode = #tpu.pipeline_mode<synchronous>, transform_indices = @transform_21, window_bounds = array<i64: 32, 32>}, {pipeline_mode = #tpu.pipeline_mode<synchronous>, transform_indices = @transform_22, window_bounds = array<i64: 1, 32>}, {pipeline_mode = #tpu.pipeline_mode<synchronous>, transform_indices = @transform_23, window_bounds = array<i64: 1, 32>}, {pipeline_mode = #tpu.pipeline_mode<synchronous>, transform_indices = @transform_24, window_bounds = array<i64: 1, 32>}, {transform_indices = @transform_25, window_bounds = array<i64: 1, 16, 32>}, {transform_indices = @transform_26, window_bounds = array<i64: 1, 16, 1>}]} {
    %c0 = arith.constant 0 : index
    %c0_0 = arith.constant 0 : index
    %c0_1 = arith.constant 0 : index
    %0 = vector.load %arg1[%c0, %c0_0, %c0_1] : memref<1x16x32xf32, #tpu.memory_space<vmem>>, vector<1x16x32xf32>
    %1 = vector.shape_cast %0 : vector<1x16x32xf32> to vector<16x32xf32>
    %2 = arith.truncf %1 : vector<16x32xf32> to vector<16x32xbf16>
    %c0_2 = arith.constant 0 : index
    %c0_3 = arith.constant 0 : index
    %3 = vector.load %arg2[%c0_2, %c0_3] : memref<32x32xbf16, #tpu.memory_space<vmem>>, vector<32x32xbf16>
    %cst = arith.constant dense<0.000000e+00> : vector<16x32xf32>
    %4 = tpu.matmul %2, %3, %cst {dimension_numbers = #tpu.dot_dimension_numbers<[1], [0], [0], [1], [0, 0, 1, 1], [], []>} : vector<16x32xbf16>, vector<32x32xbf16>, vector<16x32xf32> -> vector<16x32xf32>
    %c0_4 = arith.constant 0 : index
    %c0_5 = arith.constant 0 : index
    %5 = vector.load %arg3[%c0_4, %c0_5] : memref<1x32xf32, #tpu.memory_space<vmem>>, vector<1x32xf32>
    %6 = vector.broadcast %5 : vector<1x32xf32> to vector<16x32xf32>
    %7 = arith.addf %4, %6 : vector<16x32xf32>
    %8 = arith.mulf %7, %7 : vector<16x32xf32>
    %9 = arith.mulf %7, %8 : vector<16x32xf32>
    %cst_6 = arith.constant 4.471500e-02 : f32
    %10 = vector.broadcast %cst_6 : f32 to vector<16x32xf32>
    %11 = arith.mulf %10, %9 : vector<16x32xf32>
    %12 = arith.addf %7, %11 : vector<16x32xf32>
    %cst_7 = arith.constant 0.797884583 : f32
    %13 = vector.broadcast %cst_7 : f32 to vector<16x32xf32>
    %14 = arith.mulf %13, %12 : vector<16x32xf32>
    %15 = math.tanh %14 : vector<16x32xf32>
    %cst_8 = arith.constant 1.000000e+00 : f32
    %16 = vector.broadcast %cst_8 : f32 to vector<16x32xf32>
    %17 = arith.addf %16, %15 : vector<16x32xf32>
    %cst_9 = arith.constant 5.000000e-01 : f32
    %18 = vector.broadcast %cst_9 : f32 to vector<16x32xf32>
    %19 = arith.mulf %18, %17 : vector<16x32xf32>
    %20 = arith.mulf %7, %19 : vector<16x32xf32>
    %21 = arith.truncf %20 : vector<16x32xf32> to vector<16x32xbf16>
    %c0_10 = arith.constant 0 : index
    %c0_11 = arith.constant 0 : index
    %22 = vector.load %arg4[%c0_10, %c0_11] : memref<32x32xbf16, #tpu.memory_space<vmem>>, vector<32x32xbf16>
    %cst_12 = arith.constant dense<0.000000e+00> : vector<16x32xf32>
    %23 = tpu.matmul %21, %22, %cst_12 {dimension_numbers = #tpu.dot_dimension_numbers<[1], [0], [0], [1], [0, 0, 1, 1], [], []>} : vector<16x32xbf16>, vector<32x32xbf16>, vector<16x32xf32> -> vector<16x32xf32>
    %24 = arith.addf %1, %23 : vector<16x32xf32>
    %c0_13 = arith.constant 0 : index
    %c0_14 = arith.constant 0 : index
    %25 = vector.load %arg5[%c0_13, %c0_14] : memref<1x32xf32, #tpu.memory_space<vmem>>, vector<1x32xf32>
    %26 = vector.broadcast %25 : vector<1x32xf32> to vector<16x32xf32>
    %27 = arith.addf %24, %26 : vector<16x32xf32>
    %cst_15 = arith.constant 0.000000e+00 : f32
    %28 = vector.broadcast %cst_15 : f32 to vector<20x32xf32>
    %c0_16 = arith.constant 0 : index
    %c0_17 = arith.constant 0 : index
    %29 = vector.load %arg28[%c0_16, %c0_17] : memref<20x32xf32, #tpu.memory_space<vmem>>, vector<20x32xf32>
    tpu.vector_store %arg28[%c0_16, %c0_17], %28 {strides = array<i32>} : memref<20x32xf32, #tpu.memory_space<vmem>>, vector<20x32xf32>,
    %c2 = arith.constant 2 : index
    %c0_18 = arith.constant 0 : index
    %30 = vector.load %arg28[%c2, %c0_18] : memref<20x32xf32, #tpu.memory_space<vmem>>, vector<16x32xf32>
    tpu.vector_store %arg28[%c2, %c0_18], %1 {strides = array<i32>} : memref<20x32xf32, #tpu.memory_space<vmem>>, vector<16x32xf32>,
    %cst_19 = arith.constant 0.000000e+00 : f32
    %31 = vector.broadcast %cst_19 : f32 to vector<16x32xf32>
    %cst_20 = arith.constant 0.000000e+00 : f32
    %32 = vector.broadcast %cst_20 : f32 to vector<16x32xf32>
    %cst_21 = arith.constant 0.000000e+00 : f32
    %33 = vector.broadcast %cst_21 : f32 to vector<16x32xf32>
    %c0_22 = arith.constant 0 : index
    %c0_23 = arith.constant 0 : index
    %34 = vector.load %arg28[%c0_22, %c0_23] : memref<20x32xf32, #tpu.memory_space<vmem>>, vector<16x32xf32>
    %35 = arith.truncf %34 : vector<16x32xf32> to vector<16x32xbf16>
    %c0_24 = arith.constant 0 : index
    %c0_25 = arith.constant 0 : index
    %c0_26 = arith.constant 0 : index
    %36 = vector.load %arg8[%c0_24, %c0_25, %c0_26] : memref<5x32x32xbf16, #tpu.memory_space<vmem>>, vector<1x32x32xbf16>
    %37 = vector.shape_cast %36 : vector<1x32x32xbf16> to vector<32x32xbf16>
    %cst_27 = arith.constant dense<0.000000e+00> : vector<16x32xf32>
    %38 = tpu.matmul %35, %37, %cst_27 {dimension_numbers = #tpu.dot_dimension_numbers<[1], [0], [0], [1], [0, 0, 1, 1], [], []>} : vector<16x32xbf16>, vector<32x32xbf16>, vector<16x32xf32> -> vector<16x32xf32>
    %39 = arith.addf %32, %38 : vector<16x32xf32>
    %40 = arith.addf %33, %34 : vector<16x32xf32>
    %c1 = arith.constant 1 : index
    %c0_28 = arith.constant 0 : index
    %41 = vector.load %arg28[%c1, %c0_28] : memref<20x32xf32, #tpu.memory_space<vmem>>, vector<16x32xf32>
    %42 = arith.truncf %41 : vector<16x32xf32> to vector<16x32xbf16>
    %c1_29 = arith.constant 1 : index
    %c0_30 = arith.constant 0 : index
    %c0_31 = arith.constant 0 : index
    %43 = vector.load %arg8[%c1_29, %c0_30, %c0_31] : memref<5x32x32xbf16, #tpu.memory_space<vmem>>, vector<1x32x32xbf16>
    %44 = vector.shape_cast %43 : vector<1x32x32xbf16> to vector<32x32xbf16>
    %cst_32 = arith.constant dense<0.000000e+00> : vector<16x32xf32>
    %45 = tpu.matmul %42, %44, %cst_32 {dimension_numbers = #tpu.dot_dimension_numbers<[1], [0], [0], [1], [0, 0, 1, 1], [], []>} : vector<16x32xbf16>, vector<32x32xbf16>, vector<16x32xf32> -> vector<16x32xf32>
    %46 = arith.addf %39, %45 : vector<16x32xf32>
    %c0_33 = arith.constant 0 : index
    %c0_34 = arith.constant 0 : index
    %c0_35 = arith.constant 0 : index
    %47 = vector.load %arg6[%c0_33, %c0_34, %c0_35] : memref<3x32x32xbf16, #tpu.memory_space<vmem>>, vector<1x32x32xbf16>
    %48 = vector.shape_cast %47 : vector<1x32x32xbf16> to vector<32x32xbf16>
    %cst_36 = arith.constant dense<0.000000e+00> : vector<16x32xf32>
    %49 = tpu.matmul %42, %48, %cst_36 {dimension_numbers = #tpu.dot_dimension_numbers<[1], [0], [0], [1], [0, 0, 1, 1], [], []>} : vector<16x32xbf16>, vector<32x32xbf16>, vector<16x32xf32> -> vector<16x32xf32>
    %50 = arith.addf %31, %49 : vector<16x32xf32>
    %51 = arith.addf %40, %41 : vector<16x32xf32>
    %c2_37 = arith.constant 2 : index
    %c0_38 = arith.constant 0 : index
    %52 = vector.load %arg28[%c2_37, %c0_38] : memref<20x32xf32, #tpu.memory_space<vmem>>, vector<16x32xf32>
    %53 = arith.truncf %52 : vector<16x32xf32> to vector<16x32xbf16>
    %c2_39 = arith.constant 2 : index
    %c0_40 = arith.constant 0 : index
    %c0_41 = arith.constant 0 : index
    %54 = vector.load %arg8[%c2_39, %c0_40, %c0_41] : memref<5x32x32xbf16, #tpu.memory_space<vmem>>, vector<1x32x32xbf16>
    %55 = vector.shape_cast %54 : vector<1x32x32xbf16> to vector<32x32xbf16>
    %cst_42 = arith.constant dense<0.000000e+00> : vector<16x32xf32>
    %56 = tpu.matmul %53, %55, %cst_42 {dimension_numbers = #tpu.dot_dimension_numbers<[1], [0], [0], [1], [0, 0, 1, 1], [], []>} : vector<16x32xbf16>, vector<32x32xbf16>, vector<16x32xf32> -> vector<16x32xf32>
    %57 = arith.addf %46, %56 : vector<16x32xf32>
    %c1_43 = arith.constant 1 : index
    %c0_44 = arith.constant 0 : index
    %c0_45 = arith.constant 0 : index
    %58 = vector.load %arg6[%c1_43, %c0_44, %c0_45] : memref<3x32x32xbf16, #tpu.memory_space<vmem>>, vector<1x32x32xbf16>
    %59 = vector.shape_cast %58 : vector<1x32x32xbf16> to vector<32x32xbf16>
    %cst_46 = arith.constant dense<0.000000e+00> : vector<16x32xf32>
    %60 = tpu.matmul %53, %59, %cst_46 {dimension_numbers = #tpu.dot_dimension_numbers<[1], [0], [0], [1], [0, 0, 1, 1], [], []>} : vector<16x32xbf16>, vector<32x32xbf16>, vector<16x32xf32> -> vector<16x32xf32>
    %61 = arith.addf %50, %60 : vector<16x32xf32>
    %62 = arith.addf %51, %52 : vector<16x32xf32>
    %c3 = arith.constant 3 : index
    %c0_47 = arith.constant 0 : index
    %63 = vector.load %arg28[%c3, %c0_47] : memref<20x32xf32, #tpu.memory_space<vmem>>, vector<16x32xf32>
    %64 = arith.truncf %63 : vector<16x32xf32> to vector<16x32xbf16>
    %c3_48 = arith.constant 3 : index
    %c0_49 = arith.constant 0 : index
    %c0_50 = arith.constant 0 : index
    %65 = vector.load %arg8[%c3_48, %c0_49, %c0_50] : memref<5x32x32xbf16, #tpu.memory_space<vmem>>, vector<1x32x32xbf16>
    %66 = vector.shape_cast %65 : vector<1x32x32xbf16> to vector<32x32xbf16>
    %cst_51 = arith.constant dense<0.000000e+00> : vector<16x32xf32>
    %67 = tpu.matmul %64, %66, %cst_51 {dimension_numbers = #tpu.dot_dimension_numbers<[1], [0], [0], [1], [0, 0, 1, 1], [], []>} : vector<16x32xbf16>, vector<32x32xbf16>, vector<16x32xf32> -> vector<16x32xf32>
    %68 = arith.addf %57, %67 : vector<16x32xf32>
    %c2_52 = arith.constant 2 : index
    %c0_53 = arith.constant 0 : index
    %c0_54 = arith.constant 0 : index
    %69 = vector.load %arg6[%c2_52, %c0_53, %c0_54] : memref<3x32x32xbf16, #tpu.memory_space<vmem>>, vector<1x32x32xbf16>
    %70 = vector.shape_cast %69 : vector<1x32x32xbf16> to vector<32x32xbf16>
    %cst_55 = arith.constant dense<0.000000e+00> : vector<16x32xf32>
    %71 = tpu.matmul %64, %70, %cst_55 {dimension_numbers = #tpu.dot_dimension_numbers<[1], [0], [0], [1], [0, 0, 1, 1], [], []>} : vector<16x32xbf16>, vector<32x32xbf16>, vector<16x32xf32> -> vector<16x32xf32>
    %72 = arith.addf %61, %71 : vector<16x32xf32>
    %73 = arith.addf %62, %63 : vector<16x32xf32>
    %c4 = arith.constant 4 : index
    %c0_56 = arith.constant 0 : index
    %74 = vector.load %arg28[%c4, %c0_56] : memref<20x32xf32, #tpu.memory_space<vmem>>, vector<16x32xf32>
    %75 = arith.truncf %74 : vector<16x32xf32> to vector<16x32xbf16>
    %c4_57 = arith.constant 4 : index
    %c0_58 = arith.constant 0 : index
    %c0_59 = arith.constant 0 : index
    %76 = vector.load %arg8[%c4_57, %c0_58, %c0_59] : memref<5x32x32xbf16, #tpu.memory_space<vmem>>, vector<1x32x32xbf16>
    %77 = vector.shape_cast %76 : vector<1x32x32xbf16> to vector<32x32xbf16>
    %cst_60 = arith.constant dense<0.000000e+00> : vector<16x32xf32>
    %78 = tpu.matmul %75, %77, %cst_60 {dimension_numbers = #tpu.dot_dimension_numbers<[1], [0], [0], [1], [0, 0, 1, 1], [], []>} : vector<16x32xbf16>, vector<32x32xbf16>, vector<16x32xf32> -> vector<16x32xf32>
    %79 = arith.addf %68, %78 : vector<16x32xf32>
    %80 = arith.addf %73, %74 : vector<16x32xf32>
    %c0_61 = arith.constant 0 : index
    %c0_62 = arith.constant 0 : index
    %81 = vector.load %arg7[%c0_61, %c0_62] : memref<1x32xf32, #tpu.memory_space<vmem>>, vector<1x32xf32>
    %82 = vector.broadcast %81 : vector<1x32xf32> to vector<16x32xf32>
    %83 = arith.addf %72, %82 : vector<16x32xf32>
    %84 = arith.mulf %83, %83 : vector<16x32xf32>
    %85 = arith.mulf %83, %84 : vector<16x32xf32>
    %cst_63 = arith.constant 4.471500e-02 : f32
    %86 = vector.broadcast %cst_63 : f32 to vector<16x32xf32>
    %87 = arith.mulf %86, %85 : vector<16x32xf32>
    %88 = arith.addf %83, %87 : vector<16x32xf32>
    %cst_64 = arith.constant 0.797884583 : f32
    %89 = vector.broadcast %cst_64 : f32 to vector<16x32xf32>
    %90 = arith.mulf %89, %88 : vector<16x32xf32>
    %91 = math.tanh %90 : vector<16x32xf32>
    %cst_65 = arith.constant 1.000000e+00 : f32
    %92 = vector.broadcast %cst_65 : f32 to vector<16x32xf32>
    %93 = arith.addf %92, %91 : vector<16x32xf32>
    %cst_66 = arith.constant 5.000000e-01 : f32
    %94 = vector.broadcast %cst_66 : f32 to vector<16x32xf32>
    %95 = arith.mulf %94, %93 : vector<16x32xf32>
    %96 = arith.mulf %83, %95 : vector<16x32xf32>
    %c0_67 = arith.constant 0 : index
    %c0_68 = arith.constant 0 : index
    %97 = vector.load %arg9[%c0_67, %c0_68] : memref<1x32xf32, #tpu.memory_space<vmem>>, vector<1x32xf32>
    %98 = vector.broadcast %97 : vector<1x32xf32> to vector<16x32xf32>
    %99 = arith.addf %79, %98 : vector<16x32xf32>
    %100 = arith.mulf %99, %99 : vector<16x32xf32>
    %101 = arith.mulf %99, %100 : vector<16x32xf32>
    %cst_69 = arith.constant 4.471500e-02 : f32
    %102 = vector.broadcast %cst_69 : f32 to vector<16x32xf32>
    %103 = arith.mulf %102, %101 : vector<16x32xf32>
    %104 = arith.addf %99, %103 : vector<16x32xf32>
    %cst_70 = arith.constant 0.797884583 : f32
    %105 = vector.broadcast %cst_70 : f32 to vector<16x32xf32>
    %106 = arith.mulf %105, %104 : vector<16x32xf32>
    %107 = math.tanh %106 : vector<16x32xf32>
    %cst_71 = arith.constant 1.000000e+00 : f32
    %108 = vector.broadcast %cst_71 : f32 to vector<16x32xf32>
    %109 = arith.addf %108, %107 : vector<16x32xf32>
    %cst_72 = arith.constant 5.000000e-01 : f32
    %110 = vector.broadcast %cst_72 : f32 to vector<16x32xf32>
    %111 = arith.mulf %110, %109 : vector<16x32xf32>
    %112 = arith.mulf %99, %111 : vector<16x32xf32>
    %cst_73 = arith.constant 2.000000e-01 : f32
    %113 = vector.broadcast %cst_73 : f32 to vector<16x32xf32>
    %114 = arith.mulf %80, %113 : vector<16x32xf32>
    %115 = arith.truncf %96 : vector<16x32xf32> to vector<16x32xbf16>
    %c0_74 = arith.constant 0 : index
    %c0_75 = arith.constant 0 : index
    %116 = vector.load %arg10[%c0_74, %c0_75] : memref<32x32xbf16, #tpu.memory_space<vmem>>, vector<32x32xbf16>
    %cst_76 = arith.constant dense<0.000000e+00> : vector<16x32xf32>
    %117 = tpu.matmul %115, %116, %cst_76 {dimension_numbers = #tpu.dot_dimension_numbers<[1], [0], [0], [1], [0, 0, 1, 1], [], []>} : vector<16x32xbf16>, vector<32x32xbf16>, vector<16x32xf32> -> vector<16x32xf32>
    %118 = arith.truncf %112 : vector<16x32xf32> to vector<16x32xbf16>
    %c0_77 = arith.constant 0 : index
    %c0_78 = arith.constant 0 : index
    %119 = vector.load %arg11[%c0_77, %c0_78] : memref<32x32xbf16, #tpu.memory_space<vmem>>, vector<32x32xbf16>
    %cst_79 = arith.constant dense<0.000000e+00> : vector<16x32xf32>
    %120 = tpu.matmul %118, %119, %cst_79 {dimension_numbers = #tpu.dot_dimension_numbers<[1], [0], [0], [1], [0, 0, 1, 1], [], []>} : vector<16x32xbf16>, vector<32x32xbf16>, vector<16x32xf32> -> vector<16x32xf32>
    %121 = arith.addf %117, %120 : vector<16x32xf32>
    %122 = arith.truncf %114 : vector<16x32xf32> to vector<16x32xbf16>
    %c0_80 = arith.constant 0 : index
    %c0_81 = arith.constant 0 : index
    %123 = vector.load %arg12[%c0_80, %c0_81] : memref<32x32xbf16, #tpu.memory_space<vmem>>, vector<32x32xbf16>
    %cst_82 = arith.constant dense<0.000000e+00> : vector<16x32xf32>
    %124 = tpu.matmul %122, %123, %cst_82 {dimension_numbers = #tpu.dot_dimension_numbers<[1], [0], [0], [1], [0, 0, 1, 1], [], []>} : vector<16x32xbf16>, vector<32x32xbf16>, vector<16x32xf32> -> vector<16x32xf32>
    %125 = arith.addf %121, %124 : vector<16x32xf32>
    %c0_83 = arith.constant 0 : index
    %c0_84 = arith.constant 0 : index
    %126 = vector.load %arg13[%c0_83, %c0_84] : memref<1x32xf32, #tpu.memory_space<vmem>>, vector<1x32xf32>
    %127 = vector.broadcast %126 : vector<1x32xf32> to vector<16x32xf32>
    %128 = arith.addf %125, %127 : vector<16x32xf32>
    %129 = arith.mulf %128, %128 : vector<16x32xf32>
    %130 = arith.mulf %128, %129 : vector<16x32xf32>
    %cst_85 = arith.constant 4.471500e-02 : f32
    %131 = vector.broadcast %cst_85 : f32 to vector<16x32xf32>
    %132 = arith.mulf %131, %130 : vector<16x32xf32>
    %133 = arith.addf %128, %132 : vector<16x32xf32>
    %cst_86 = arith.constant 0.797884583 : f32
    %134 = vector.broadcast %cst_86 : f32 to vector<16x32xf32>
    %135 = arith.mulf %134, %133 : vector<16x32xf32>
    %136 = math.tanh %135 : vector<16x32xf32>
    %cst_87 = arith.constant 1.000000e+00 : f32
    %137 = vector.broadcast %cst_87 : f32 to vector<16x32xf32>
    %138 = arith.addf %137, %136 : vector<16x32xf32>
    %cst_88 = arith.constant 5.000000e-01 : f32
    %139 = vector.broadcast %cst_88 : f32 to vector<16x32xf32>
    %140 = arith.mulf %139, %138 : vector<16x32xf32>
    %141 = arith.mulf %128, %140 : vector<16x32xf32>
    %142 = arith.addf %1, %141 : vector<16x32xf32>
    %143 = arith.truncf %27 : vector<16x32xf32> to vector<16x32xbf16>
    %144 = arith.truncf %142 : vector<16x32xf32> to vector<16x32xbf16>
    %c0_89 = arith.constant 0 : index
    %c0_90 = arith.constant 0 : index
    %145 = vector.load %arg14[%c0_89, %c0_90] : memref<32x64xbf16, #tpu.memory_space<vmem>>, vector<32x64xbf16>
    %cst_91 = arith.constant dense<0.000000e+00> : vector<16x64xf32>
    %146 = tpu.matmul %143, %145, %cst_91 {dimension_numbers = #tpu.dot_dimension_numbers<[1], [0], [0], [1], [0, 0, 1, 1], [], []>} : vector<16x32xbf16>, vector<32x64xbf16>, vector<16x64xf32> -> vector<16x64xf32>
    %c0_92 = arith.constant 0 : index
    %c0_93 = arith.constant 0 : index
    %147 = vector.load %arg15[%c0_92, %c0_93] : memref<32x96xbf16, #tpu.memory_space<vmem>>, vector<32x96xbf16>
    %cst_94 = arith.constant dense<0.000000e+00> : vector<16x96xf32>
    %148 = tpu.matmul %144, %147, %cst_94 {dimension_numbers = #tpu.dot_dimension_numbers<[1], [0], [0], [1], [0, 0, 1, 1], [], []>} : vector<16x32xbf16>, vector<32x96xbf16>, vector<16x96xf32> -> vector<16x96xf32>
    %149 = vector.extract_strided_slice %146 {offsets = [0, 0], sizes = [16, 32], strides = [1, 1]} : vector<16x64xf32> to vector<16x32xf32>
    %150 = vector.extract_strided_slice %146 {offsets = [0, 32], sizes = [16, 32], strides = [1, 1]} : vector<16x64xf32> to vector<16x32xf32>
    %151 = vector.extract_strided_slice %148 {offsets = [0, 0], sizes = [16, 32], strides = [1, 1]} : vector<16x96xf32> to vector<16x32xf32>
    %152 = vector.extract_strided_slice %148 {offsets = [0, 32], sizes = [16, 32], strides = [1, 1]} : vector<16x96xf32> to vector<16x32xf32>
    %153 = vector.extract_strided_slice %148 {offsets = [0, 64], sizes = [16, 32], strides = [1, 1]} : vector<16x96xf32> to vector<16x32xf32>
    %154 = arith.truncf %149 : vector<16x32xf32> to vector<16x32xbf16>
    %155 = arith.truncf %151 : vector<16x32xf32> to vector<16x32xbf16>
    %cst_95 = arith.constant dense<0.000000e+00> : vector<16x16xf32>
    %156 = tpu.matmul %154, %155, %cst_95 {dimension_numbers = #tpu.dot_dimension_numbers<[1], [1], [0], [0], [0, 0, 1, 0], [], []>} : vector<16x32xbf16>, vector<16x32xbf16>, vector<16x16xf32> -> vector<16x16xf32>
    %cst_96 = arith.constant 0.176776692 : f32
    %157 = vector.broadcast %cst_96 : f32 to vector<16x16xf32>
    %158 = arith.mulf %156, %157 : vector<16x16xf32>
    %cst_97 = arith.constant dense<0xFF800000> : vector<16xf32>
    %159 = vector.multi_reduction <maximumf>, %158, %cst_97 [1] : vector<16x16xf32> to vector<16xf32>
    %160 = vector.shape_cast %159 : vector<16xf32> to vector<16x1xf32>
    %161 = vector.broadcast %160 : vector<16x1xf32> to vector<16x16xf32>
    %162 = arith.subf %158, %161 : vector<16x16xf32>
    %163 = math.exp %162 : vector<16x16xf32>
    %cst_98 = arith.constant dense<0.000000e+00> : vector<16xf32>
    %164 = vector.multi_reduction <add>, %163, %cst_98 [1] : vector<16x16xf32> to vector<16xf32>
    %165 = vector.shape_cast %164 : vector<16xf32> to vector<16x1xf32>
    %166 = vector.broadcast %165 : vector<16x1xf32> to vector<16x16xf32>
    %167 = arith.divf %163, %166 : vector<16x16xf32>
    %168 = arith.truncf %167 : vector<16x16xf32> to vector<16x16xbf16>
    %169 = arith.truncf %152 : vector<16x32xf32> to vector<16x32xbf16>
    %cst_99 = arith.constant dense<0.000000e+00> : vector<16x32xf32>
    %170 = tpu.matmul %168, %169, %cst_99 {dimension_numbers = #tpu.dot_dimension_numbers<[1], [0], [0], [1], [0, 0, 1, 1], [], []>} : vector<16x16xbf16>, vector<16x32xbf16>, vector<16x32xf32> -> vector<16x32xf32>
    %171 = arith.truncf %170 : vector<16x32xf32> to vector<16x32xbf16>
    %c0_100 = arith.constant 0 : index
    %c0_101 = arith.constant 0 : index
    %172 = vector.load %arg16[%c0_100, %c0_101] : memref<32x32xbf16, #tpu.memory_space<vmem>>, vector<32x32xbf16>
    %cst_102 = arith.constant dense<0.000000e+00> : vector<16x32xf32>
    %173 = tpu.matmul %171, %172, %cst_102 {dimension_numbers = #tpu.dot_dimension_numbers<[1], [0], [0], [1], [0, 0, 1, 1], [], []>} : vector<16x32xbf16>, vector<32x32xbf16>, vector<16x32xf32> -> vector<16x32xf32>
    %174 = arith.addf %150, %153 : vector<16x32xf32>
    %c0_103 = arith.constant 0 : index
    %c0_104 = arith.constant 0 : index
    %175 = vector.load %arg17[%c0_103, %c0_104] : memref<1x32xf32, #tpu.memory_space<vmem>>, vector<1x32xf32>
    %176 = vector.broadcast %175 : vector<1x32xf32> to vector<16x32xf32>
    %177 = arith.addf %174, %176 : vector<16x32xf32>
    %178 = arith.negf %177 : vector<16x32xf32>
    %179 = math.exp %178 : vector<16x32xf32>
    %cst_105 = arith.constant 1.000000e+00 : f32
    %180 = vector.broadcast %cst_105 : f32 to vector<16x32xf32>
    %181 = arith.addf %180, %179 : vector<16x32xf32>
    %182 = arith.divf %180, %181 : vector<16x32xf32>
    %183 = arith.mulf %182, %27 : vector<16x32xf32>
    %cst_106 = arith.constant 1.000000e+00 : f32
    %184 = vector.broadcast %cst_106 : f32 to vector<16x32xf32>
    %185 = arith.subf %184, %182 : vector<16x32xf32>
    %186 = arith.mulf %185, %142 : vector<16x32xf32>
    %187 = arith.addf %183, %186 : vector<16x32xf32>
    %188 = arith.addf %187, %173 : vector<16x32xf32>
    %189 = arith.subf %27, %142 : vector<16x32xf32>
    %190 = math.absf %189 : vector<16x32xf32>
    %191 = arith.truncf %190 : vector<16x32xf32> to vector<16x32xbf16>
    %c0_107 = arith.constant 0 : index
    %c0_108 = arith.constant 0 : index
    %192 = vector.load %arg18[%c0_107, %c0_108] : memref<32x16xbf16, #tpu.memory_space<vmem>>, vector<32x16xbf16>
    %cst_109 = arith.constant dense<0.000000e+00> : vector<16x16xf32>
    %193 = tpu.matmul %191, %192, %cst_109 {dimension_numbers = #tpu.dot_dimension_numbers<[1], [0], [0], [1], [0, 0, 1, 1], [], []>} : vector<16x32xbf16>, vector<32x16xbf16>, vector<16x16xf32> -> vector<16x16xf32>
    %c0_110 = arith.constant 0 : index
    %c0_111 = arith.constant 0 : index
    %194 = vector.load %arg19[%c0_110, %c0_111] : memref<1x16xf32, #tpu.memory_space<vmem>>, vector<1x16xf32>
    %195 = vector.broadcast %194 : vector<1x16xf32> to vector<16x16xf32>
    %196 = arith.addf %193, %195 : vector<16x16xf32>
    %cst_112 = arith.constant 0.000000e+00 : f32
    %197 = vector.broadcast %cst_112 : f32 to vector<16x16xf32>
    %198 = arith.maximumf %196, %197 : vector<16x16xf32>
    %c0_113 = arith.constant 0 : index
    %c0_114 = arith.constant 0 : index
    %199 = vector.load %arg20[%c0_113, %c0_114] : memref<1x16xf32, #tpu.memory_space<vmem>>, vector<1x16xf32>
    %200 = vector.broadcast %199 : vector<1x16xf32> to vector<16x16xf32>
    %201 = arith.mulf %198, %200 : vector<16x16xf32>
    %cst_115 = arith.constant dense<0.000000e+00> : vector<16xf32>
    %202 = vector.multi_reduction <add>, %201, %cst_115 [1] : vector<16x16xf32> to vector<16xf32>
    %203 = vector.shape_cast %202 : vector<16xf32> to vector<16x1xf32>
    %c0_116 = arith.constant 0 : index
    %c0_117 = arith.constant 0 : index
    %204 = vector.load %arg21[%c0_116, %c0_117] : memref<1x1xf32, #tpu.memory_space<vmem>>, vector<1x1xf32>
    %205 = vector.broadcast %204 : vector<1x1xf32> to vector<16x1xf32>
    %206 = arith.addf %203, %205 : vector<16x1xf32>
    %207 = arith.negf %206 : vector<16x1xf32>
    %208 = math.exp %207 : vector<16x1xf32>
    %cst_118 = arith.constant 1.000000e+00 : f32
    %209 = vector.broadcast %cst_118 : f32 to vector<16x1xf32>
    %210 = arith.addf %209, %208 : vector<16x1xf32>
    %211 = arith.divf %209, %210 : vector<16x1xf32>
    %cst_119 = arith.constant 1.000000e+00 : f32
    %212 = vector.broadcast %cst_119 : f32 to vector<16x1xf32>
    %213 = arith.subf %212, %211 : vector<16x1xf32>
    %214 = vector.broadcast %213 : vector<16x1xf32> to vector<16x32xf32>
    %215 = arith.mulf %27, %214 : vector<16x32xf32>
    %216 = vector.broadcast %211 : vector<16x1xf32> to vector<16x32xf32>
    %217 = arith.mulf %142, %216 : vector<16x32xf32>
    %218 = arith.addf %215, %217 : vector<16x32xf32>
    %219 = arith.addf %188, %218 : vector<16x32xf32>
    %cst_120 = arith.constant 5.000000e-01 : f32
    %220 = vector.broadcast %cst_120 : f32 to vector<16x32xf32>
    %221 = arith.mulf %219, %220 : vector<16x32xf32>
    %222 = arith.truncf %221 : vector<16x32xf32> to vector<16x32xbf16>
    %c0_121 = arith.constant 0 : index
    %c0_122 = arith.constant 0 : index
    %223 = vector.load %arg22[%c0_121, %c0_122] : memref<32x32xbf16, #tpu.memory_space<vmem>>, vector<32x32xbf16>
    %cst_123 = arith.constant dense<0.000000e+00> : vector<16x32xf32>
    %224 = tpu.matmul %222, %223, %cst_123 {dimension_numbers = #tpu.dot_dimension_numbers<[1], [0], [0], [1], [0, 0, 1, 1], [], []>} : vector<16x32xbf16>, vector<32x32xbf16>, vector<16x32xf32> -> vector<16x32xf32>
    %c0_124 = arith.constant 0 : index
    %c0_125 = arith.constant 0 : index
    %225 = vector.load %arg23[%c0_124, %c0_125] : memref<1x32xf32, #tpu.memory_space<vmem>>, vector<1x32xf32>
    %226 = vector.broadcast %225 : vector<1x32xf32> to vector<16x32xf32>
    %227 = arith.addf %224, %226 : vector<16x32xf32>
    %cst_126 = arith.constant dense<0.000000e+00> : vector<16xf32>
    %228 = vector.multi_reduction <add>, %227, %cst_126 [1] : vector<16x32xf32> to vector<16xf32>
    %229 = vector.shape_cast %228 : vector<16xf32> to vector<16x1xf32>
    %cst_127 = arith.constant 3.200000e+01 : f32
    %230 = vector.broadcast %cst_127 : f32 to vector<16x1xf32>
    %231 = arith.divf %229, %230 : vector<16x1xf32>
    %232 = vector.broadcast %231 : vector<16x1xf32> to vector<16x32xf32>
    %233 = arith.subf %227, %232 : vector<16x32xf32>
    %234 = arith.mulf %233, %233 : vector<16x32xf32>
    %cst_128 = arith.constant dense<0.000000e+00> : vector<16xf32>
    %235 = vector.multi_reduction <add>, %234, %cst_128 [1] : vector<16x32xf32> to vector<16xf32>
    %236 = vector.shape_cast %235 : vector<16xf32> to vector<16x1xf32>
    %cst_129 = arith.constant 3.200000e+01 : f32
    %237 = vector.broadcast %cst_129 : f32 to vector<16x1xf32>
    %238 = arith.divf %236, %237 : vector<16x1xf32>
    %239 = vector.broadcast %231 : vector<16x1xf32> to vector<16x32xf32>
    %240 = arith.subf %227, %239 : vector<16x32xf32>
    %cst_130 = arith.constant 9.99999974E-6 : f32
    %241 = vector.broadcast %cst_130 : f32 to vector<16x1xf32>
    %242 = arith.addf %238, %241 : vector<16x1xf32>
    %243 = math.rsqrt %242 : vector<16x1xf32>
    %244 = vector.broadcast %243 : vector<16x1xf32> to vector<16x32xf32>
    %245 = arith.mulf %240, %244 : vector<16x32xf32>
    %c0_131 = arith.constant 0 : index
    %c0_132 = arith.constant 0 : index
    %246 = vector.load %arg24[%c0_131, %c0_132] : memref<1x32xf32, #tpu.memory_space<vmem>>, vector<1x32xf32>
    %247 = vector.broadcast %246 : vector<1x32xf32> to vector<16x32xf32>
    %248 = arith.mulf %245, %247 : vector<16x32xf32>
    %c0_133 = arith.constant 0 : index
    %c0_134 = arith.constant 0 : index
    %249 = vector.load %arg25[%c0_133, %c0_134] : memref<1x32xf32, #tpu.memory_space<vmem>>, vector<1x32xf32>
    %250 = vector.broadcast %249 : vector<1x32xf32> to vector<16x32xf32>
    %251 = arith.addf %248, %250 : vector<16x32xf32>
    %cst_135 = arith.constant 0.000000e+00 : f32
    %252 = vector.broadcast %cst_135 : f32 to vector<16x32xf32>
    %253 = arith.maximumf %251, %252 : vector<16x32xf32>
    %254 = arith.addf %253, %1 : vector<16x32xf32>
    %c0_136 = arith.constant 0 : index
    %c0_137 = arith.constant 0 : index
    %c0_138 = arith.constant 0 : index
    %255 = vector.load %arg26[%c0_136, %c0_137, %c0_138] : memref<1x16x32xf32, #tpu.memory_space<vmem>>, vector<1x16x32xf32>
    %256 = vector.shape_cast %255 : vector<1x16x32xf32> to vector<16x32xf32>
    %257 = vector.shape_cast %254 : vector<16x32xf32> to vector<1x16x32xf32>
    tpu.vector_store %arg26[%c0_136, %c0_137, %c0_138], %257 {strides = array<i32>} : memref<1x16x32xf32, #tpu.memory_space<vmem>>, vector<1x16x32xf32>,
    %c0_139 = arith.constant 0 : index
    %c0_140 = arith.constant 0 : index
    %c0_141 = arith.constant 0 : index
    %258 = vector.load %arg27[%c0_139, %c0_140, %c0_141] : memref<1x16x1xf32, #tpu.memory_space<vmem>>, vector<1x16x1xf32>
    %259 = vector.shape_cast %258 : vector<1x16x1xf32> to vector<16x1xf32>
    %260 = vector.shape_cast %211 : vector<16x1xf32> to vector<1x16x1xf32>
    tpu.vector_store %arg27[%c0_139, %c0_140, %c0_141], %260 {strides = array<i32>} : memref<1x16x1xf32, #tpu.memory_space<vmem>>, vector<1x16x1xf32>,
    return
  }
  func.func @transform_0(%arg0: i32) -> (i32, i32, i32) {
    %c0_i32 = arith.constant 0 : i32
    %c0_i32_0 = arith.constant 0 : i32
    %c0_i32_1 = arith.constant 0 : i32
    return %arg0, %c0_i32, %c0_i32_0 : i32, i32, i32
  }
  func.func @transform_1(%arg0: i32) -> (i32, i32) {
    %c0_i32 = arith.constant 0 : i32
    %c0_i32_0 = arith.constant 0 : i32
    %c0_i32_1 = arith.constant 0 : i32
    return %c0_i32, %c0_i32_0 : i32, i32
  }
  func.func @transform_2(%arg0: i32) -> (i32, i32) {
    %c0_i32 = arith.constant 0 : i32
    %c0_i32_0 = arith.constant 0 : i32
    %c0_i32_1 = arith.constant 0 : i32
    return %c0_i32, %c0_i32_0 : i32, i32
  }
  func.func @transform_3(%arg0: i32) -> (i32, i32) {
    %c0_i32 = arith.constant 0 : i32
    %c0_i32_0 = arith.constant 0 : i32
    %c0_i32_1 = arith.constant 0 : i32
    return %c0_i32, %c0_i32_0 : i32, i32
  }
  func.func @transform_4(%arg0: i32) -> (i32, i32) {
    %c0_i32 = arith.constant 0 : i32
    %c0_i32_0 = arith.constant 0 : i32
    %c0_i32_1 = arith.constant 0 : i32
    return %c0_i32, %c0_i32_0 : i32, i32
  }
  func.func @transform_5(%arg0: i32) -> (i32, i32, i32) {
    %c0_i32 = arith.constant 0 : i32
    %c0_i32_0 = arith.constant 0 : i32
    %c0_i32_1 = arith.constant 0 : i32
    %c0_i32_2 = arith.constant 0 : i32
    return %c0_i32, %c0_i32_0, %c0_i32_1 : i32, i32, i32
  }
  func.func @transform_6(%arg0: i32) -> (i32, i32) {
    %c0_i32 = arith.constant 0 : i32
    %c0_i32_0 = arith.constant 0 : i32
    %c0_i32_1 = arith.constant 0 : i32
    return %c0_i32, %c0_i32_0 : i32, i32
  }
  func.func @transform_7(%arg0: i32) -> (i32, i32, i32) {
    %c0_i32 = arith.constant 0 : i32
    %c0_i32_0 = arith.constant 0 : i32
    %c0_i32_1 = arith.constant 0 : i32
    %c0_i32_2 = arith.constant 0 : i32
    return %c0_i32, %c0_i32_0, %c0_i32_1 : i32, i32, i32
  }
  func.func @transform_8(%arg0: i32) -> (i32, i32) {
    %c0_i32 = arith.constant 0 : i32
    %c0_i32_0 = arith.constant 0 : i32
    %c0_i32_1 = arith.constant 0 : i32
    return %c0_i32, %c0_i32_0 : i32, i32
  }
  func.func @transform_9(%arg0: i32) -> (i32, i32) {
    %c0_i32 = arith.constant 0 : i32
    %c0_i32_0 = arith.constant 0 : i32
    %c0_i32_1 = arith.constant 0 : i32
    return %c0_i32, %c0_i32_0 : i32, i32
  }
  func.func @transform_10(%arg0: i32) -> (i32, i32) {
    %c0_i32 = arith.constant 0 : i32
    %c0_i32_0 = arith.constant 0 : i32
    %c0_i32_1 = arith.constant 0 : i32
    return %c0_i32, %c0_i32_0 : i32, i32
  }
  func.func @transform_11(%arg0: i32) -> (i32, i32) {
    %c0_i32 = arith.constant 0 : i32
    %c0_i32_0 = arith.constant 0 : i32
    %c0_i32_1 = arith.constant 0 : i32
    return %c0_i32, %c0_i32_0 : i32, i32
  }
  func.func @transform_12(%arg0: i32) -> (i32, i32) {
    %c0_i32 = arith.constant 0 : i32
    %c0_i32_0 = arith.constant 0 : i32
    %c0_i32_1 = arith.constant 0 : i32
    return %c0_i32, %c0_i32_0 : i32, i32
  }
  func.func @transform_13(%arg0: i32) -> (i32, i32) {
    %c0_i32 = arith.constant 0 : i32
    %c0_i32_0 = arith.constant 0 : i32
    %c0_i32_1 = arith.constant 0 : i32
    return %c0_i32, %c0_i32_0 : i32, i32
  }
  func.func @transform_14(%arg0: i32) -> (i32, i32) {
    %c0_i32 = arith.constant 0 : i32
    %c0_i32_0 = arith.constant 0 : i32
    %c0_i32_1 = arith.constant 0 : i32
    return %c0_i32, %c0_i32_0 : i32, i32
  }
  func.func @transform_15(%arg0: i32) -> (i32, i32) {
    %c0_i32 = arith.constant 0 : i32
    %c0_i32_0 = arith.constant 0 : i32
    %c0_i32_1 = arith.constant 0 : i32
    return %c0_i32, %c0_i32_0 : i32, i32
  }
  func.func @transform_16(%arg0: i32) -> (i32, i32) {
    %c0_i32 = arith.constant 0 : i32
    %c0_i32_0 = arith.constant 0 : i32
    %c0_i32_1 = arith.constant 0 : i32
    return %c0_i32, %c0_i32_0 : i32, i32
  }
  func.func @transform_17(%arg0: i32) -> (i32, i32) {
    %c0_i32 = arith.constant 0 : i32
    %c0_i32_0 = arith.constant 0 : i32
    %c0_i32_1 = arith.constant 0 : i32
    return %c0_i32, %c0_i32_0 : i32, i32
  }
  func.func @transform_18(%arg0: i32) -> (i32, i32) {
    %c0_i32 = arith.constant 0 : i32
    %c0_i32_0 = arith.constant 0 : i32
    %c0_i32_1 = arith.constant 0 : i32
    return %c0_i32, %c0_i32_0 : i32, i32
  }
  func.func @transform_19(%arg0: i32) -> (i32, i32) {
    %c0_i32 = arith.constant 0 : i32
    %c0_i32_0 = arith.constant 0 : i32
    %c0_i32_1 = arith.constant 0 : i32
    return %c0_i32, %c0_i32_0 : i32, i32
  }
  func.func @transform_20(%arg0: i32) -> (i32, i32) {
    %c0_i32 = arith.constant 0 : i32
    %c0_i32_0 = arith.constant 0 : i32
    %c0_i32_1 = arith.constant 0 : i32
    return %c0_i32, %c0_i32_0 : i32, i32
  }
  func.func @transform_21(%arg0: i32) -> (i32, i32) {
    %c0_i32 = arith.constant 0 : i32
    %c0_i32_0 = arith.constant 0 : i32
    %c0_i32_1 = arith.constant 0 : i32
    return %c0_i32, %c0_i32_0 : i32, i32
  }
  func.func @transform_22(%arg0: i32) -> (i32, i32) {
    %c0_i32 = arith.constant 0 : i32
    %c0_i32_0 = arith.constant 0 : i32
    %c0_i32_1 = arith.constant 0 : i32
    return %c0_i32, %c0_i32_0 : i32, i32
  }
  func.func @transform_23(%arg0: i32) -> (i32, i32) {
    %c0_i32 = arith.constant 0 : i32
    %c0_i32_0 = arith.constant 0 : i32
    %c0_i32_1 = arith.constant 0 : i32
    return %c0_i32, %c0_i32_0 : i32, i32
  }
  func.func @transform_24(%arg0: i32) -> (i32, i32) {
    %c0_i32 = arith.constant 0 : i32
    %c0_i32_0 = arith.constant 0 : i32
    %c0_i32_1 = arith.constant 0 : i32
    return %c0_i32, %c0_i32_0 : i32, i32
  }
  func.func @transform_25(%arg0: i32) -> (i32, i32, i32) {
    %c0_i32 = arith.constant 0 : i32
    %c0_i32_0 = arith.constant 0 : i32
    %c0_i32_1 = arith.constant 0 : i32
    return %arg0, %c0_i32, %c0_i32_0 : i32, i32, i32
  }
  func.func @transform_26(%arg0: i32) -> (i32, i32, i32) {
    %c0_i32 = arith.constant 0 : i32
    %c0_i32_0 = arith.constant 0 : i32
    %c0_i32_1 = arith.constant 0 : i32
    return %arg0, %c0_i32, %c0_i32_0 : i32, i32, i32
  }
}

</mosaic_0001>

<llo_original>
// kernel: dual_branch_block.1
$region0: #{dual_branch_block.1}
  #allocation0 [shape = 'u32[]', space=smem, size = 0x4, offset = 0x4, fixed_abs, tag = 'smem constant byte address 0x4 - core index']
  #allocation1 [shape = 'u32[144,128]{1,0:T(1,128)}', space=vmem, size = 0x12000, scoped, tag = 'internal scratch']
  #allocation2 [shape = 'f32[20,32]{1,0:T(8,128)}', space=vmem, size = 0x3000, scoped, tag = 'scratch operand']
  #allocation3 [shape = 'f32[1,1]{1,0:T(1,128)S(1)}', space=vmem, size = 0x200, scoped, tag = 'scoped memory for dual_branch_block.1']
  %s0 = inlined_call_operand.vmem [shape: f32[2,16,32], index: 0, kind: input, shape index: {}]
  %s1 = inlined_call_operand.vmem [shape: bf16[32,32], index: 1, kind: input, shape index: {}]
  %s2 = inlined_call_operand.vmem [shape: f32[1,32], index: 2, kind: input, shape index: {}]
  %s3 = inlined_call_operand.vmem [shape: bf16[32,32], index: 3, kind: input, shape index: {}]
  %s4 = inlined_call_operand.vmem [shape: f32[1,32], index: 4, kind: input, shape index: {}]
  %s5 = inlined_call_operand.vmem [shape: bf16[3,32,32], index: 5, kind: input, shape index: {}]
  %s6 = inlined_call_operand.vmem [shape: f32[1,32], index: 6, kind: input, shape index: {}]
  %s7 = inlined_call_operand.vmem [shape: bf16[5,32,32], index: 7, kind: input, shape index: {}]
  %s8 = inlined_call_operand.vmem [shape: f32[1,32], index: 8, kind: input, shape index: {}]
  %s9 = inlined_call_operand.vmem [shape: bf16[32,32], index: 9, kind: input, shape index: {}]
  %s10 = inlined_call_operand.vmem [shape: bf16[32,32], index: 10, kind: input, shape index: {}]
  %s11 = inlined_call_operand.vmem [shape: bf16[32,32], index: 11, kind: input, shape index: {}]
  %s12 = inlined_call_operand.vmem [shape: f32[1,32], index: 12, kind: input, shape index: {}]
  %s13 = inlined_call_operand.vmem [shape: bf16[32,64], index: 13, kind: input, shape index: {}]
  %s14 = inlined_call_operand.vmem [shape: bf16[32,96], index: 14, kind: input, shape index: {}]
  %s15 = inlined_call_operand.vmem [shape: bf16[32,32], index: 15, kind: input, shape index: {}]
  %s16 = inlined_call_operand.vmem [shape: f32[1,32], index: 16, kind: input, shape index: {}]
  %s17 = inlined_call_operand.vmem [shape: bf16[32,16], index: 17, kind: input, shape index: {}]
  %s18 = inlined_call_operand.vmem [shape: f32[1,16], index: 18, kind: input, shape index: {}]
  %s19 = inlined_call_operand.vmem [shape: f32[1,16], index: 19, kind: input, shape index: {}]
  %s20 = inlined_call_operand.<no memory space> [shape: f32[1,1], index: 20, kind: input, shape index: {}]
  %s21 = inlined_call_operand.vmem [shape: bf16[32,32], index: 21, kind: input, shape index: {}]
  %s22 = inlined_call_operand.vmem [shape: f32[1,32], index: 22, kind: input, shape index: {}]
  %s23 = inlined_call_operand.vmem [shape: f32[1,32], index: 23, kind: input, shape index: {}]
  %s24 = inlined_call_operand.vmem [shape: f32[1,32], index: 24, kind: input, shape index: {}]
  %s25 = inlined_call_operand.hbm [shape: f32[2,16,32], index: 25, kind: output, shape index: {0}]
  %s26 = inlined_call_operand.vmem [shape: f32[2,16,1], index: 26, kind: output, shape index: {1}]
  %27 = xla_tuple %s25, %s26
  %s28 = sld [smem:[#allocation0]]
  $region141: #{dual_branch_block.1} parent=0
    _
  %s30 = ssub.s32 1, %s28
  %s31 = scalar_select 0, %s30, %s28
  %v32 = vstv %s20
  %33 = vst [vmem:[#allocation3] sm:$0x1] %v32
  $region1: #{dual_branch_block.1} parent=0
    #allocation4 [shape = 'u8[16384]{0}', space=vmem, size = 0x4000, scoped, tag = 'output window, operand 0']
    #allocation5 [shape = 's32[2]{0}', space=sflag, size = 0x8, scoped, tag = 'scoped memory for dual_branch_block.1']
    %34 = vsyncpa [#allocation5], 0
    %s35 = scalar_lea.sflag [#allocation5], 1
    %36 = vsyncpa %s35, 0
    loop: start=0, step=1, limit=4
    $region2: #{dual_branch_block.1} parent=1 // loop_pre_header
      _
    $region3: #{dual_branch_block.1} parent=1 // loop_header
      %s38 = sphi 0, %s42
      %p39 = scmp.ge.s32.totalorder %s38, 4
      %s48 = sphi 0, %s50
      %s51 = sphi 0, %s48
      %s52 = sphi 0, %s51
      %s68 = sphi 0, %s52
      %s72 = sphi 0, %s72
      %s74 = sphi 0, %s72
      %s75 = sphi 0, %s74
      %s89 = sphi 0, %s75
      %s93 = sphi 0, %s93
      %s95 = sphi 0, %s93
      %s96 = sphi 0, %s95
      %s110 = sphi 0, %s96
      %s114 = sphi 0, %s114
      %s116 = sphi 0, %s114
      %s117 = sphi 0, %s116
      %s131 = sphi 0, %s117
      %s135 = sphi 0, %s135
      %s137 = sphi 0, %s135
      %s138 = sphi 0, %s137
      %s152 = sphi 0, %s138
      %s156 = sphi 0, %s156
      %s158 = sphi 0, %s156
      %s159 = sphi 0, %s158
      %s173 = sphi 0, %s159
      %s177 = sphi 0, %s177
      %s179 = sphi 0, %s177
      %s180 = sphi 0, %s179
      %s194 = sphi 0, %s180
      %s198 = sphi 0, %s198
      %s200 = sphi 0, %s198
      %s201 = sphi 0, %s200
      %s215 = sphi 0, %s201
      %s219 = sphi 0, %s219
      %s221 = sphi 0, %s219
      %s222 = sphi 0, %s221
      %s236 = sphi 0, %s222
      %s240 = sphi 0, %s240
      %s242 = sphi 0, %s240
      %s243 = sphi 0, %s242
      %s257 = sphi 0, %s243
      %s261 = sphi 0, %s261
      %s263 = sphi 0, %s261
      %s264 = sphi 0, %s263
      %s278 = sphi 0, %s264
      %s282 = sphi 0, %s282
      %s284 = sphi 0, %s282
      %s285 = sphi 0, %s284
      %s299 = sphi 0, %s285
      %s303 = sphi 0, %s303
      %s305 = sphi 0, %s303
      %s306 = sphi 0, %s305
      %s320 = sphi 0, %s306
      %s324 = sphi 0, %s324
      %s326 = sphi 0, %s324
      %s327 = sphi 0, %s326
      %s341 = sphi 0, %s327
      %s345 = sphi 0, %s345
      %s347 = sphi 0, %s345
      %s348 = sphi 0, %s347
      %s362 = sphi 0, %s348
      %s366 = sphi 0, %s366
      %s368 = sphi 0, %s366
      %s369 = sphi 0, %s368
      %s383 = sphi 0, %s369
      %s387 = sphi 0, %s387
      %s389 = sphi 0, %s387
      %s390 = sphi 0, %s389
      %s404 = sphi 0, %s390
      %s408 = sphi 0, %s408
      %s410 = sphi 0, %s408
      %s411 = sphi 0, %s410
      %s425 = sphi 0, %s411
      %s429 = sphi 0, %s429
      %s431 = sphi 0, %s429
      %s432 = sphi 0, %s431
      %s446 = sphi 0, %s432
      %s450 = sphi 0, %s450
      %s452 = sphi 0, %s450
      %s453 = sphi 0, %s452
      %s467 = sphi 0, %s453
      %s471 = sphi 0, %s471
      %s473 = sphi 0, %s471
      %s474 = sphi 0, %s473
      %s488 = sphi 0, %s474
      %s492 = sphi 0, %s492
      %s494 = sphi 0, %s492
      %s495 = sphi 0, %s494
      %s509 = sphi 0, %s495
      %s513 = sphi 0, %s513
      %s515 = sphi 0, %s513
      %s516 = sphi 0, %s515
      %s530 = sphi 0, %s516
      %s534 = sphi 0, %s534
      %s536 = sphi 0, %s534
      %s537 = sphi 0, %s536
      %s551 = sphi 0, %s537
      %s555 = sphi 0, %s555
      %s557 = sphi 0, %s555
      %s558 = sphi 0, %s557
      %s572 = sphi 0, %s558
      %s578 = sphi 0, %s580
      %s581 = sphi 0, %s578
      %s582 = sphi 0, %s581
      %s598 = sphi 0, %s582
      %s604 = sphi 0, %s606
      %s607 = sphi 0, %s604
      %s608 = sphi 0, %s607
      %s624 = sphi 0, %s608
    $region4: #{dual_branch_block.1} parent=1 // loop_header_branch
      %41 = sbr.rel (%p39) target = $region8
    $region5: #{dual_branch_block.1} parent=1 // loop_body
      %s43 = ssub.s32 %s38, 1
      %s44 = ssub.s32 %s38, 2
      %s45 = sadd.s32 %s38, 1
      %s46 = ssub.s32 %s38, %s45
      %p47 = scmp.eq.s32.totalorder %s46, 0
      %s49 = sadd.s32 %s48, 1
      %s50 = scalar_select %p47, %s48, %s49
      %p53 = pneg %p47
      %p54 = scmp.eq.s32.totalorder %s38, 1
      %p55 = por %p53, %p54
      %p56 = scmp.ne.s32.totalorder %s48, %s51
      %p57 = scmp.eq.s32.totalorder %s38, 0
      %p58 = por %p56, %p57
      %p59 = scmp.ne.s32.totalorder %s48, %s51
      %p60 = scmp.eq.s32.totalorder %s43, 1
      %p61 = por %p59, %p60
      %p62 = scmp.ne.s32.totalorder %s51, %s52
      %p63 = scmp.eq.s32.totalorder %s43, 0
      %p64 = por %p62, %p63
      %p65 = scmp.ne.s32.totalorder %s51, %s52
      %p66 = scmp.eq.s32.totalorder %s44, 1
      %p67 = por %p65, %p66
      %p69 = scmp.ne.s32.totalorder %s52, %s68
      %p70 = scmp.eq.s32.totalorder %s44, 0
      %p71 = por %p69, %p70
      %s73 = sadd.s32 %s72, 1
      %p76 = scmp.eq.s32.totalorder %s38, 1
      %p77 = scmp.ne.s32.totalorder %s72, %s74
      %p78 = scmp.eq.s32.totalorder %s38, 0
      %p79 = por %p77, %p78
      %p80 = scmp.ne.s32.totalorder %s72, %s74
      %p81 = scmp.eq.s32.totalorder %s43, 1
      %p82 = por %p80, %p81
      %p83 = scmp.ne.s32.totalorder %s74, %s75
      %p84 = scmp.eq.s32.totalorder %s43, 0
      %p85 = por %p83, %p84
      %p86 = scmp.ne.s32.totalorder %s74, %s75
      %p87 = scmp.eq.s32.totalorder %s44, 1
      %p88 = por %p86, %p87
      %p90 = scmp.ne.s32.totalorder %s75, %s89
      %p91 = scmp.eq.s32.totalorder %s44, 0
      %p92 = por %p90, %p91
      %s94 = sadd.s32 %s93, 1
      %p97 = scmp.eq.s32.totalorder %s38, 1
      %p98 = scmp.ne.s32.totalorder %s93, %s95
      %p99 = scmp.eq.s32.totalorder %s38, 0
      %p100 = por %p98, %p99
      %p101 = scmp.ne.s32.totalorder %s93, %s95
      %p102 = scmp.eq.s32.totalorder %s43, 1
      %p103 = por %p101, %p102
      %p104 = scmp.ne.s32.totalorder %s95, %s96
      %p105 = scmp.eq.s32.totalorder %s43, 0
      %p106 = por %p104, %p105
      %p107 = scmp.ne.s32.totalorder %s95, %s96
      %p108 = scmp.eq.s32.totalorder %s44, 1
      %p109 = por %p107, %p108
      %p111 = scmp.ne.s32.totalorder %s96, %s110
      %p112 = scmp.eq.s32.totalorder %s44, 0
      %p113 = por %p111, %p112
      %s115 = sadd.s32 %s114, 1
      %p118 = scmp.eq.s32.totalorder %s38, 1
      %p119 = scmp.ne.s32.totalorder %s114, %s116
      %p120 = scmp.eq.s32.totalorder %s38, 0
      %p121 = por %p119, %p120
      %p122 = scmp.ne.s32.totalorder %s114, %s116
      %p123 = scmp.eq.s32.totalorder %s43, 1
      %p124 = por %p122, %p123
      %p125 = scmp.ne.s32.totalorder %s116, %s117
      %p126 = scmp.eq.s32.totalorder %s43, 0
      %p127 = por %p125, %p126
      %p128 = scmp.ne.s32.totalorder %s116, %s117
      %p129 = scmp.eq.s32.totalorder %s44, 1
      %p130 = por %p128, %p129
      %p132 = scmp.ne.s32.totalorder %s117, %s131
      %p133 = scmp.eq.s32.totalorder %s44, 0
      %p134 = por %p132, %p133
      %s136 = sadd.s32 %s135, 1
      %p139 = scmp.eq.s32.totalorder %s38, 1
      %p140 = scmp.ne.s32.totalorder %s135, %s137
      %p141 = scmp.eq.s32.totalorder %s38, 0
      %p142 = por %p140, %p141
      %p143 = scmp.ne.s32.totalorder %s135, %s137
      %p144 = scmp.eq.s32.totalorder %s43, 1
      %p145 = por %p143, %p144
      %p146 = scmp.ne.s32.totalorder %s137, %s138
      %p147 = scmp.eq.s32.totalorder %s43, 0
      %p148 = por %p146, %p147
      %p149 = scmp.ne.s32.totalorder %s137, %s138
      %p150 = scmp.eq.s32.totalorder %s44, 1
      %p151 = por %p149, %p150
      %p153 = scmp.ne.s32.totalorder %s138, %s152
      %p154 = scmp.eq.s32.totalorder %s44, 0
      %p155 = por %p153, %p154
      %s157 = sadd.s32 %s156, 1
      %p160 = scmp.eq.s32.totalorder %s38, 1
      %p161 = scmp.ne.s32.totalorder %s156, %s158
      %p162 = scmp.eq.s32.totalorder %s38, 0
      %p163 = por %p161, %p162
      %p164 = scmp.ne.s32.totalorder %s156, %s158
      %p165 = scmp.eq.s32.totalorder %s43, 1
      %p166 = por %p164, %p165
      %p167 = scmp.ne.s32.totalorder %s158, %s159
      %p168 = scmp.eq.s32.totalorder %s43, 0
      %p169 = por %p167, %p168
      %p170 = scmp.ne.s32.totalorder %s158, %s159
      %p171 = scmp.eq.s32.totalorder %s44, 1
      %p172 = por %p170, %p171
      %p174 = scmp.ne.s32.totalorder %s159, %s173
      %p175 = scmp.eq.s32.totalorder %s44, 0
      %p176 = por %p174, %p175
      %s178 = sadd.s32 %s177, 1
      %p181 = scmp.eq.s32.totalorder %s38, 1
      %p182 = scmp.ne.s32.totalorder %s177, %s179
      %p183 = scmp.eq.s32.totalorder %s38, 0
      %p184 = por %p182, %p183
      %p185 = scmp.ne.s32.totalorder %s177, %s179
      %p186 = scmp.eq.s32.totalorder %s43, 1
      %p187 = por %p185, %p186
      %p188 = scmp.ne.s32.totalorder %s179, %s180
      %p189 = scmp.eq.s32.totalorder %s43, 0
      %p190 = por %p188, %p189
      %p191 = scmp.ne.s32.totalorder %s179, %s180
      %p192 = scmp.eq.s32.totalorder %s44, 1
      %p193 = por %p191, %p192
      %p195 = scmp.ne.s32.totalorder %s180, %s194
      %p196 = scmp.eq.s32.totalorder %s44, 0
      %p197 = por %p195, %p196
      %s199 = sadd.s32 %s198, 1
      %p202 = scmp.eq.s32.totalorder %s38, 1
      %p203 = scmp.ne.s32.totalorder %s198, %s200
      %p204 = scmp.eq.s32.totalorder %s38, 0
      %p205 = por %p203, %p204
      %p206 = scmp.ne.s32.totalorder %s198, %s200
      %p207 = scmp.eq.s32.totalorder %s43, 1
      %p208 = por %p206, %p207
      %p209 = scmp.ne.s32.totalorder %s200, %s201
      %p210 = scmp.eq.s32.totalorder %s43, 0
      %p211 = por %p209, %p210
      %p212 = scmp.ne.s32.totalorder %s200, %s201
      %p213 = scmp.eq.s32.totalorder %s44, 1
      %p214 = por %p212, %p213
      %p216 = scmp.ne.s32.totalorder %s201, %s215
      %p217 = scmp.eq.s32.totalorder %s44, 0
      %p218 = por %p216, %p217
      %s220 = sadd.s32 %s219, 1
      %p223 = scmp.eq.s32.totalorder %s38, 1
      %p224 = scmp.ne.s32.totalorder %s219, %s221
      %p225 = scmp.eq.s32.totalorder %s38, 0
      %p226 = por %p224, %p225
      %p227 = scmp.ne.s32.totalorder %s219, %s221
      %p228 = scmp.eq.s32.totalorder %s43, 1
      %p229 = por %p227, %p228
      %p230 = scmp.ne.s32.totalorder %s221, %s222
      %p231 = scmp.eq.s32.totalorder %s43, 0
      %p232 = por %p230, %p231
      %p233 = scmp.ne.s32.totalorder %s221, %s222
      %p234 = scmp.eq.s32.totalorder %s44, 1
      %p235 = por %p233, %p234
      %p237 = scmp.ne.s32.totalorder %s222, %s236
      %p238 = scmp.eq.s32.totalorder %s44, 0
      %p239 = por %p237, %p238
      %s241 = sadd.s32 %s240, 1
      %p244 = scmp.eq.s32.totalorder %s38, 1
      %p245 = scmp.ne.s32.totalorder %s240, %s242
      %p246 = scmp.eq.s32.totalorder %s38, 0
      %p247 = por %p245, %p246
      %p248 = scmp.ne.s32.totalorder %s240, %s242
      %p249 = scmp.eq.s32.totalorder %s43, 1
      %p250 = por %p248, %p249
      %p251 = scmp.ne.s32.totalorder %s242, %s243
      %p252 = scmp.eq.s32.totalorder %s43, 0
      %p253 = por %p251, %p252
      %p254 = scmp.ne.s32.totalorder %s242, %s243
      %p255 = scmp.eq.s32.totalorder %s44, 1
      %p256 = por %p254, %p255
      %p258 = scmp.ne.s32.totalorder %s243, %s257
      %p259 = scmp.eq.s32.totalorder %s44, 0
      %p260 = por %p258, %p259
      %s262 = sadd.s32 %s261, 1
      %p265 = scmp.eq.s32.totalorder %s38, 1
      %p266 = scmp.ne.s32.totalorder %s261, %s263
      %p267 = scmp.eq.s32.totalorder %s38, 0
      %p268 = por %p266, %p267
      %p269 = scmp.ne.s32.totalorder %s261, %s263
      %p270 = scmp.eq.s32.totalorder %s43, 1
      %p271 = por %p269, %p270
      %p272 = scmp.ne.s32.totalorder %s263, %s264
      %p273 = scmp.eq.s32.totalorder %s43, 0
      %p274 = por %p272, %p273
      %p275 = scmp.ne.s32.totalorder %s263, %s264
      %p276 = scmp.eq.s32.totalorder %s44, 1
      %p277 = por %p275, %p276
      %p279 = scmp.ne.s32.totalorder %s264, %s278
      %p280 = scmp.eq.s32.totalorder %s44, 0
      %p281 = por %p279, %p280
      %s283 = sadd.s32 %s282, 1
      %p286 = scmp.eq.s32.totalorder %s38, 1
      %p287 = scmp.ne.s32.totalorder %s282, %s284
      %p288 = scmp.eq.s32.totalorder %s38, 0
      %p289 = por %p287, %p288
      %p290 = scmp.ne.s32.totalorder %s282, %s284
      %p291 = scmp.eq.s32.totalorder %s43, 1
      %p292 = por %p290, %p291
      %p293 = scmp.ne.s32.totalorder %s284, %s285
      %p294 = scmp.eq.s32.totalorder %s43, 0
      %p295 = por %p293, %p294
      %p296 = scmp.ne.s32.totalorder %s284, %s285
      %p297 = scmp.eq.s32.totalorder %s44, 1
      %p298 = por %p296, %p297
      %p300 = scmp.ne.s32.totalorder %s285, %s299
      %p301 = scmp.eq.s32.totalorder %s44, 0
      %p302 = por %p300, %p301
      %s304 = sadd.s32 %s303, 1
      %p307 = scmp.eq.s32.totalorder %s38, 1
      %p308 = scmp.ne.s32.totalorder %s303, %s305
      %p309 = scmp.eq.s32.totalorder %s38, 0
      %p310 = por %p308, %p309
      %p311 = scmp.ne.s32.totalorder %s303, %s305
      %p312 = scmp.eq.s32.totalorder %s43, 1
      %p313 = por %p311, %p312
      %p314 = scmp.ne.s32.totalorder %s305, %s306
      %p315 = scmp.eq.s32.totalorder %s43, 0
      %p316 = por %p314, %p315
      %p317 = scmp.ne.s32.totalorder %s305, %s306
      %p318 = scmp.eq.s32.totalorder %s44, 1
      %p319 = por %p317, %p318
      %p321 = scmp.ne.s32.totalorder %s306, %s320
      %p322 = scmp.eq.s32.totalorder %s44, 0
      %p323 = por %p321, %p322
      %s325 = sadd.s32 %s324, 1
      %p328 = scmp.eq.s32.totalorder %s38, 1
      %p329 = scmp.ne.s32.totalorder %s324, %s326
      %p330 = scmp.eq.s32.totalorder %s38, 0
      %p331 = por %p329, %p330
      %p332 = scmp.ne.s32.totalorder %s324, %s326
      %p333 = scmp.eq.s32.totalorder %s43, 1
      %p334 = por %p332, %p333
      %p335 = scmp.ne.s32.totalorder %s326, %s327
      %p336 = scmp.eq.s32.totalorder %s43, 0
      %p337 = por %p335, %p336
      %p338 = scmp.ne.s32.totalorder %s326, %s327
      %p339 = scmp.eq.s32.totalorder %s44, 1
      %p340 = por %p338, %p339
      %p342 = scmp.ne.s32.totalorder %s327, %s341
      %p343 = scmp.eq.s32.totalorder %s44, 0
      %p344 = por %p342, %p343
      %s346 = sadd.s32 %s345, 1
      %p349 = scmp.eq.s32.totalorder %s38, 1
      %p350 = scmp.ne.s32.totalorder %s345, %s347
      %p351 = scmp.eq.s32.totalorder %s38, 0
      %p352 = por %p350, %p351
      %p353 = scmp.ne.s32.totalorder %s345, %s347
      %p354 = scmp.eq.s32.totalorder %s43, 1
      %p355 = por %p353, %p354
      %p356 = scmp.ne.s32.totalorder %s347, %s348
      %p357 = scmp.eq.s32.totalorder %s43, 0
      %p358 = por %p356, %p357
      %p359 = scmp.ne.s32.totalorder %s347, %s348
      %p360 = scmp.eq.s32.totalorder %s44, 1
      %p361 = por %p359, %p360
      %p363 = scmp.ne.s32.totalorder %s348, %s362
      %p364 = scmp.eq.s32.totalorder %s44, 0
      %p365 = por %p363, %p364
      %s367 = sadd.s32 %s366, 1
      %p370 = scmp.eq.s32.totalorder %s38, 1
      %p371 = scmp.ne.s32.totalorder %s366, %s368
      %p372 = scmp.eq.s32.totalorder %s38, 0
      %p373 = por %p371, %p372
      %p374 = scmp.ne.s32.totalorder %s366, %s368
      %p375 = scmp.eq.s32.totalorder %s43, 1
      %p376 = por %p374, %p375
      %p377 = scmp.ne.s32.totalorder %s368, %s369
      %p378 = scmp.eq.s32.totalorder %s43, 0
      %p379 = por %p377, %p378
      %p380 = scmp.ne.s32.totalorder %s368, %s369
      %p381 = scmp.eq.s32.totalorder %s44, 1
      %p382 = por %p380, %p381
      %p384 = scmp.ne.s32.totalorder %s369, %s383
      %p385 = scmp.eq.s32.totalorder %s44, 0
      %p386 = por %p384, %p385
      %s388 = sadd.s32 %s387, 1
      %p391 = scmp.eq.s32.totalorder %s38, 1
      %p392 = scmp.ne.s32.totalorder %s387, %s389
      %p393 = scmp.eq.s32.totalorder %s38, 0
      %p394 = por %p392, %p393
      %p395 = scmp.ne.s32.totalorder %s387, %s389
      %p396 = scmp.eq.s32.totalorder %s43, 1
      %p397 = por %p395, %p396
      %p398 = scmp.ne.s32.totalorder %s389, %s390
      %p399 = scmp.eq.s32.totalorder %s43, 0
      %p400 = por %p398, %p399
      %p401 = scmp.ne.s32.totalorder %s389, %s390
      %p402 = scmp.eq.s32.totalorder %s44, 1
      %p403 = por %p401, %p402
      %p405 = scmp.ne.s32.totalorder %s390, %s404
      %p406 = scmp.eq.s32.totalorder %s44, 0
      %p407 = por %p405, %p406
      %s409 = sadd.s32 %s408, 1
      %p412 = scmp.eq.s32.totalorder %s38, 1
      %p413 = scmp.ne.s32.totalorder %s408, %s410
      %p414 = scmp.eq.s32.totalorder %s38, 0
      %p415 = por %p413, %p414
      %p416 = scmp.ne.s32.totalorder %s408, %s410
      %p417 = scmp.eq.s32.totalorder %s43, 1
      %p418 = por %p416, %p417
      %p419 = scmp.ne.s32.totalorder %s410, %s411
      %p420 = scmp.eq.s32.totalorder %s43, 0
      %p421 = por %p419, %p420
      %p422 = scmp.ne.s32.totalorder %s410, %s411
      %p423 = scmp.eq.s32.totalorder %s44, 1
      %p424 = por %p422, %p423
      %p426 = scmp.ne.s32.totalorder %s411, %s425
      %p427 = scmp.eq.s32.totalorder %s44, 0
      %p428 = por %p426, %p427
      %s430 = sadd.s32 %s429, 1
      %p433 = scmp.eq.s32.totalorder %s38, 1
      %p434 = scmp.ne.s32.totalorder %s429, %s431
      %p435 = scmp.eq.s32.totalorder %s38, 0
      %p436 = por %p434, %p435
      %p437 = scmp.ne.s32.totalorder %s429, %s431
      %p438 = scmp.eq.s32.totalorder %s43, 1
      %p439 = por %p437, %p438
      %p440 = scmp.ne.s32.totalorder %s431, %s432
      %p441 = scmp.eq.s32.totalorder %s43, 0
      %p442 = por %p440, %p441
      %p443 = scmp.ne.s32.totalorder %s431, %s432
      %p444 = scmp.eq.s32.totalorder %s44, 1
      %p445 = por %p443, %p444
      %p447 = scmp.ne.s32.totalorder %s432, %s446
      %p448 = scmp.eq.s32.totalorder %s44, 0
      %p449 = por %p447, %p448
      %s451 = sadd.s32 %s450, 1
      %p454 = scmp.eq.s32.totalorder %s38, 1
      %p455 = scmp.ne.s32.totalorder %s450, %s452
      %p456 = scmp.eq.s32.totalorder %s38, 0
      %p457 = por %p455, %p456
      %p458 = scmp.ne.s32.totalorder %s450, %s452
      %p459 = scmp.eq.s32.totalorder %s43, 1
      %p460 = por %p458, %p459
      %p461 = scmp.ne.s32.totalorder %s452, %s453
      %p462 = scmp.eq.s32.totalorder %s43, 0
      %p463 = por %p461, %p462
      %p464 = scmp.ne.s32.totalorder %s452, %s453
      %p465 = scmp.eq.s32.totalorder %s44, 1
      %p466 = por %p464, %p465
      %p468 = scmp.ne.s32.totalorder %s453, %s467
      %p469 = scmp.eq.s32.totalorder %s44, 0
      %p470 = por %p468, %p469
      %s472 = sadd.s32 %s471, 1
      %p475 = scmp.eq.s32.totalorder %s38, 1
      %p476 = scmp.ne.s32.totalorder %s471, %s473
      %p477 = scmp.eq.s32.totalorder %s38, 0
      %p478 = por %p476, %p477
      %p479 = scmp.ne.s32.totalorder %s471, %s473
      %p480 = scmp.eq.s32.totalorder %s43, 1
      %p481 = por %p479, %p480
      %p482 = scmp.ne.s32.totalorder %s473, %s474
      %p483 = scmp.eq.s32.totalorder %s43, 0
      %p484 = por %p482, %p483
      %p485 = scmp.ne.s32.totalorder %s473, %s474
      %p486 = scmp.eq.s32.totalorder %s44, 1
      %p487 = por %p485, %p486
      %p489 = scmp.ne.s32.totalorder %s474, %s488
      %p490 = scmp.eq.s32.totalorder %s44, 0
      %p491 = por %p489, %p490
      %s493 = sadd.s32 %s492, 1
      %p496 = scmp.eq.s32.totalorder %s38, 1
      %p497 = scmp.ne.s32.totalorder %s492, %s494
      %p498 = scmp.eq.s32.totalorder %s38, 0
      %p499 = por %p497, %p498
      %p500 = scmp.ne.s32.totalorder %s492, %s494
      %p501 = scmp.eq.s32.totalorder %s43, 1
      %p502 = por %p500, %p501
      %p503 = scmp.ne.s32.totalorder %s494, %s495
      %p504 = scmp.eq.s32.totalorder %s43, 0
      %p505 = por %p503, %p504
      %p506 = scmp.ne.s32.totalorder %s494, %s495
      %p507 = scmp.eq.s32.totalorder %s44, 1
      %p508 = por %p506, %p507
      %p510 = scmp.ne.s32.totalorder %s495, %s509
      %p511 = scmp.eq.s32.totalorder %s44, 0
      %p512 = por %p510, %p511
      %s514 = sadd.s32 %s513, 1
      %p517 = scmp.eq.s32.totalorder %s38, 1
      %p518 = scmp.ne.s32.totalorder %s513, %s515
      %p519 = scmp.eq.s32.totalorder %s38, 0
      %p520 = por %p518, %p519
      %p521 = scmp.ne.s32.totalorder %s513, %s515
      %p522 = scmp.eq.s32.totalorder %s43, 1
      %p523 = por %p521, %p522
      %p524 = scmp.ne.s32.totalorder %s515, %s516
      %p525 = scmp.eq.s32.totalorder %s43, 0
      %p526 = por %p524, %p525
      %p527 = scmp.ne.s32.totalorder %s515, %s516
      %p528 = scmp.eq.s32.totalorder %s44, 1
      %p529 = por %p527, %p528
      %p531 = scmp.ne.s32.totalorder %s516, %s530
      %p532 = scmp.eq.s32.totalorder %s44, 0
      %p533 = por %p531, %p532
      %s535 = sadd.s32 %s534, 1
      %p538 = scmp.eq.s32.totalorder %s38, 1
      %p539 = scmp.ne.s32.totalorder %s534, %s536
      %p540 = scmp.eq.s32.totalorder %s38, 0
      %p541 = por %p539, %p540
      %p542 = scmp.ne.s32.totalorder %s534, %s536
      %p543 = scmp.eq.s32.totalorder %s43, 1
      %p544 = por %p542, %p543
      %p545 = scmp.ne.s32.totalorder %s536, %s537
      %p546 = scmp.eq.s32.totalorder %s43, 0
      %p547 = por %p545, %p546
      %p548 = scmp.ne.s32.totalorder %s536, %s537
      %p549 = scmp.eq.s32.totalorder %s44, 1
      %p550 = por %p548, %p549
      %p552 = scmp.ne.s32.totalorder %s537, %s551
      %p553 = scmp.eq.s32.totalorder %s44, 0
      %p554 = por %p552, %p553
      %s556 = sadd.s32 %s555, 1
      %p559 = scmp.eq.s32.totalorder %s38, 1
      %p560 = scmp.ne.s32.totalorder %s555, %s557
      %p561 = scmp.eq.s32.totalorder %s38, 0
      %p562 = por %p560, %p561
      %p563 = scmp.ne.s32.totalorder %s555, %s557
      %p564 = scmp.eq.s32.totalorder %s43, 1
      %p565 = por %p563, %p564
      %p566 = scmp.ne.s32.totalorder %s557, %s558
      %p567 = scmp.eq.s32.totalorder %s43, 0
      %p568 = por %p566, %p567
      %p569 = scmp.ne.s32.totalorder %s557, %s558
      %p570 = scmp.eq.s32.totalorder %s44, 1
      %p571 = por %p569, %p570
      %p573 = scmp.ne.s32.totalorder %s558, %s572
      %p574 = scmp.eq.s32.totalorder %s44, 0
      %p575 = por %p573, %p574
      %s576 = ssub.s32 %s38, %s45
      %p577 = scmp.eq.s32.totalorder %s576, 0
      %s579 = sadd.s32 %s578, 1
      %s580 = scalar_select %p577, %s578, %s579
      %p583 = pneg %p577
      %p584 = scmp.eq.s32.totalorder %s38, 1
      %p585 = por %p583, %p584
      %p586 = scmp.ne.s32.totalorder %s578, %s581
      %p587 = scmp.eq.s32.totalorder %s38, 0
      %p588 = por %p586, %p587
      %p589 = scmp.ne.s32.totalorder %s578, %s581
      %p590 = scmp.eq.s32.totalorder %s43, 1
      %p591 = por %p589, %p590
      %p592 = scmp.ne.s32.totalorder %s581, %s582
      %p593 = scmp.eq.s32.totalorder %s43, 0
      %p594 = por %p592, %p593
      %p595 = scmp.ne.s32.totalorder %s581, %s582
      %p596 = scmp.eq.s32.totalorder %s44, 1
      %p597 = por %p595, %p596
      %p599 = scmp.ne.s32.totalorder %s582, %s598
      %p600 = scmp.eq.s32.totalorder %s44, 0
      %p601 = por %p599, %p600
      %s602 = ssub.s32 %s38, %s45
      %p603 = scmp.eq.s32.totalorder %s602, 0
      %s605 = sadd.s32 %s604, 1
      %s606 = scalar_select %p603, %s604, %s605
      %p609 = pneg %p603
      %p610 = scmp.eq.s32.totalorder %s38, 1
      %p611 = por %p609, %p610
      %p612 = scmp.ne.s32.totalorder %s604, %s607
      %p613 = scmp.eq.s32.totalorder %s38, 0
      %p614 = por %p612, %p613
      %p615 = scmp.ne.s32.totalorder %s604, %s607
      %p616 = scmp.eq.s32.totalorder %s43, 1
      %p617 = por %p615, %p616
      %p618 = scmp.ne.s32.totalorder %s607, %s608
      %p619 = scmp.eq.s32.totalorder %s43, 0
      %p620 = por %p618, %p619
      %p621 = scmp.ne.s32.totalorder %s607, %s608
      %p622 = scmp.eq.s32.totalorder %s44, 1
      %p623 = por %p621, %p622
      %p625 = scmp.ne.s32.totalorder %s608, %s624
      %p626 = scmp.eq.s32.totalorder %s44, 0
      %p627 = por %p625, %p626
      %p628 = scmp.le.s32.totalorder 1, %s38
      %p629 = scmp.lt.s32.totalorder %s38, 3
      %p630 = pnand %p628, %p629
      %p631 = pneg %p630
      // Predicated region
      $region9: #{dual_branch_block.1} parent=5 // pred_check
        _
      $region10: #{dual_branch_block.1} parent=5 // pred_check_branch
        %633 = sbr.rel (%p630) target = $region12
      $region11: #{dual_branch_block.1} parent=5 // pred_region
        %s634 = ssub.s32 %s38, 1
        // Predicated region
        $region13: #{dual_branch_block.1} parent=11 // pred_check
          %p635 = pneg %p85
        $region14: #{dual_branch_block.1} parent=11 // pred_check_branch
          %637 = sbr.rel (%p635) target = $region16
        $region15: #{dual_branch_block.1} parent=11 // pred_region
          _
        $region16: #{dual_branch_block.1} parent=11 // pred_fallthru
          _
        // Predicated region
        $region17: #{dual_branch_block.1} parent=11 // pred_check
          %p638 = pneg %p106
        $region18: #{dual_branch_block.1} parent=11 // pred_check_branch
          %640 = sbr.rel (%p638) target = $region20
        $region19: #{dual_branch_block.1} parent=11 // pred_region
          _
        $region20: #{dual_branch_block.1} parent=11 // pred_fallthru
          _
        // Predicated region
        $region21: #{dual_branch_block.1} parent=11 // pred_check
          %p641 = pneg %p127
        $region22: #{dual_branch_block.1} parent=11 // pred_check_branch
          %643 = sbr.rel (%p641) target = $region24
        $region23: #{dual_branch_block.1} parent=11 // pred_region
          _
        $region24: #{dual_branch_block.1} parent=11 // pred_fallthru
          _
        // Predicated region
        $region25: #{dual_branch_block.1} parent=11 // pred_check
          %p644 = pneg %p148
        $region26: #{dual_branch_block.1} parent=11 // pred_check_branch
          %646 = sbr.rel (%p644) target = $region28
        $region27: #{dual_branch_block.1} parent=11 // pred_region
          _
        $region28: #{dual_branch_block.1} parent=11 // pred_fallthru
          _
        // Predicated region
        $region29: #{dual_branch_block.1} parent=11 // pred_check
          %p647 = pneg %p169
        $region30: #{dual_branch_block.1} parent=11 // pred_check_branch
          %649 = sbr.rel (%p647) target = $region32
        $region31: #{dual_branch_block.1} parent=11 // pred_region
          _
        $region32: #{dual_branch_block.1} parent=11 // pred_fallthru
          _
        // Predicated region
        $region33: #{dual_branch_block.1} parent=11 // pred_check
          %p650 = pneg %p190
        $region34: #{dual_branch_block.1} parent=11 // pred_check_branch
          %652 = sbr.rel (%p650) target = $region36
        $region35: #{dual_branch_block.1} parent=11 // pred_region
          _
        $region36: #{dual_branch_block.1} parent=11 // pred_fallthru
          _
        // Predicated region
        $region37: #{dual_branch_block.1} parent=11 // pred_check
          %p653 = pneg %p211
        $region38: #{dual_branch_block.1} parent=11 // pred_check_branch
          %655 = sbr.rel (%p653) target = $region40
        $region39: #{dual_branch_block.1} parent=11 // pred_region
          _
        $region40: #{dual_branch_block.1} parent=11 // pred_fallthru
          _
        // Predicated region
        $region41: #{dual_branch_block.1} parent=11 // pred_check
          %p656 = pneg %p232
        $region42: #{dual_branch_block.1} parent=11 // pred_check_branch
          %658 = sbr.rel (%p656) target = $region44
        $region43: #{dual_branch_block.1} parent=11 // pred_region
          _
        $region44: #{dual_branch_block.1} parent=11 // pred_fallthru
          _
        // Predicated region
        $region45: #{dual_branch_block.1} parent=11 // pred_check
          %p659 = pneg %p253
        $region46: #{dual_branch_block.1} parent=11 // pred_check_branch
          %661 = sbr.rel (%p659) target = $region48
        $region47: #{dual_branch_block.1} parent=11 // pred_region
          _
        $region48: #{dual_branch_block.1} parent=11 // pred_fallthru
          _
        // Predicated region
        $region49: #{dual_branch_block.1} parent=11 // pred_check
          %p662 = pneg %p274
        $region50: #{dual_branch_block.1} parent=11 // pred_check_branch
          %664 = sbr.rel (%p662) target = $region52
        $region51: #{dual_branch_block.1} parent=11 // pred_region
          _
        $region52: #{dual_branch_block.1} parent=11 // pred_fallthru
          _
        // Predicated region
        $region53: #{dual_branch_block.1} parent=11 // pred_check
          %p665 = pneg %p295
        $region54: #{dual_branch_block.1} parent=11 // pred_check_branch
          %667 = sbr.rel (%p665) target = $region56
        $region55: #{dual_branch_block.1} parent=11 // pred_region
          _
        $region56: #{dual_branch_block.1} parent=11 // pred_fallthru
          _
        // Predicated region
        $region57: #{dual_branch_block.1} parent=11 // pred_check
          %p668 = pneg %p316
        $region58: #{dual_branch_block.1} parent=11 // pred_check_branch
          %670 = sbr.rel (%p668) target = $region60
        $region59: #{dual_branch_block.1} parent=11 // pred_region
          _
        $region60: #{dual_branch_block.1} parent=11 // pred_fallthru
          _
        // Predicated region
        $region61: #{dual_branch_block.1} parent=11 // pred_check
          %p671 = pneg %p337
        $region62: #{dual_branch_block.1} parent=11 // pred_check_branch
          %673 = sbr.rel (%p671) target = $region64
        $region63: #{dual_branch_block.1} parent=11 // pred_region
          _
        $region64: #{dual_branch_block.1} parent=11 // pred_fallthru
          _
        // Predicated region
        $region65: #{dual_branch_block.1} parent=11 // pred_check
          %p674 = pneg %p358
        $region66: #{dual_branch_block.1} parent=11 // pred_check_branch
          %676 = sbr.rel (%p674) target = $region68
        $region67: #{dual_branch_block.1} parent=11 // pred_region
          _
        $region68: #{dual_branch_block.1} parent=11 // pred_fallthru
          _
        // Predicated region
        $region69: #{dual_branch_block.1} parent=11 // pred_check
          %p677 = pneg %p379
        $region70: #{dual_branch_block.1} parent=11 // pred_check_branch
          %679 = sbr.rel (%p677) target = $region72
        $region71: #{dual_branch_block.1} parent=11 // pred_region
          _
        $region72: #{dual_branch_block.1} parent=11 // pred_fallthru
          _
        // Predicated region
        $region73: #{dual_branch_block.1} parent=11 // pred_check
          %p680 = pneg %p400
        $region74: #{dual_branch_block.1} parent=11 // pred_check_branch
          %682 = sbr.rel (%p680) target = $region76
        $region75: #{dual_branch_block.1} parent=11 // pred_region
          _
        $region76: #{dual_branch_block.1} parent=11 // pred_fallthru
          _
        // Predicated region
        $region77: #{dual_branch_block.1} parent=11 // pred_check
          %p683 = pneg %p421
        $region78: #{dual_branch_block.1} parent=11 // pred_check_branch
          %685 = sbr.rel (%p683) target = $region80
        $region79: #{dual_branch_block.1} parent=11 // pred_region
          _
        $region80: #{dual_branch_block.1} parent=11 // pred_fallthru
          _
        // Predicated region
        $region81: #{dual_branch_block.1} parent=11 // pred_check
          %p686 = pneg %p442
        $region82: #{dual_branch_block.1} parent=11 // pred_check_branch
          %688 = sbr.rel (%p686) target = $region84
        $region83: #{dual_branch_block.1} parent=11 // pred_region
          _
        $region84: #{dual_branch_block.1} parent=11 // pred_fallthru
          _
        // Predicated region
        $region85: #{dual_branch_block.1} parent=11 // pred_check
          %p689 = pneg %p463
        $region86: #{dual_branch_block.1} parent=11 // pred_check_branch
          %691 = sbr.rel (%p689) target = $region88
        $region87: #{dual_branch_block.1} parent=11 // pred_region
          _
        $region88: #{dual_branch_block.1} parent=11 // pred_fallthru
          _
        // Predicated region
        $region89: #{dual_branch_block.1} parent=11 // pred_check
          %p692 = pneg %p484
        $region90: #{dual_branch_block.1} parent=11 // pred_check_branch
          %694 = sbr.rel (%p692) target = $region92
        $region91: #{dual_branch_block.1} parent=11 // pred_region
          _
        $region92: #{dual_branch_block.1} parent=11 // pred_fallthru
          _
        // Predicated region
        $region93: #{dual_branch_block.1} parent=11 // pred_check
          %p695 = pneg %p505
        $region94: #{dual_branch_block.1} parent=11 // pred_check_branch
          %697 = sbr.rel (%p695) target = $region96
        $region95: #{dual_branch_block.1} parent=11 // pred_region
          _
        $region96: #{dual_branch_block.1} parent=11 // pred_fallthru
          _
        // Predicated region
        $region97: #{dual_branch_block.1} parent=11 // pred_check
          %p698 = pneg %p526
        $region98: #{dual_branch_block.1} parent=11 // pred_check_branch
          %700 = sbr.rel (%p698) target = $region100
        $region99: #{dual_branch_block.1} parent=11 // pred_region
          _
        $region100: #{dual_branch_block.1} parent=11 // pred_fallthru
          _
        // Predicated region
        $region101: #{dual_branch_block.1} parent=11 // pred_check
          %p701 = pneg %p547
        $region102: #{dual_branch_block.1} parent=11 // pred_check_branch
          %703 = sbr.rel (%p701) target = $region104
        $region103: #{dual_branch_block.1} parent=11 // pred_region
          _
        $region104: #{dual_branch_block.1} parent=11 // pred_fallthru
          _
        // Predicated region
        $region105: #{dual_branch_block.1} parent=11 // pred_check
          %p704 = pneg %p568
        $region106: #{dual_branch_block.1} parent=11 // pred_check_branch
          %706 = sbr.rel (%p704) target = $region108
        $region107: #{dual_branch_block.1} parent=11 // pred_region
          _
        $region108: #{dual_branch_block.1} parent=11 // pred_fallthru
          _
      $region12: #{dual_branch_block.1} parent=5 // pred_fallthru
        _
      %p707 = scmp.lt.s32.totalorder %s38, 2
      // Predicated region
      $region109: #{dual_branch_block.1} parent=5 // pred_check
        %p708 = pneg %p707
      $region110: #{dual_branch_block.1} parent=5 // pred_check_branch
        %710 = sbr.rel (%p708) target = $region112
      $region111: #{dual_branch_block.1} parent=5 // pred_region
        // Predicated region
        $region113: #{dual_branch_block.1} parent=111 // pred_check
          %p711 = pneg %p58
        $region114: #{dual_branch_block.1} parent=111 // pred_check_branch
          %713 = sbr.rel (%p711) target = $region116
        $region115: #{dual_branch_block.1} parent=111 // pred_region
          %p714 = scmp.lt.s32.totalorder %s38, 1
          %s715 = scalar_select %p714, %s38, 1
          %s716 = smul.addr %s715, 2
          %s717 = smul.addr %s716, 8
          %s718 = scalar_lea.vmem %s0, %s717
        $region116: #{dual_branch_block.1} parent=111 // pred_fallthru
          _
      $region112: #{dual_branch_block.1} parent=5 // pred_fallthru
        _
      %p719 = scmp.le.s32.totalorder 1, %s38
      %p720 = scmp.lt.s32.totalorder %s38, 3
      %p721 = pnand %p719, %p720
      %p722 = pneg %p721
      // Predicated region
      $region117: #{dual_branch_block.1} parent=5 // pred_check
        _
      $region118: #{dual_branch_block.1} parent=5 // pred_check_branch
        %724 = sbr.rel (%p721) target = $region120
      $region119: #{dual_branch_block.1} parent=5 // pred_region
        %s725 = ssub.s32 %s38, 1
        %p726 = scmp.lt.s32.totalorder %s43, 1
        %s727 = scalar_select %p726, %s43, 1
        %s728 = smul.addr %s727, 2
        %s729 = smul.addr %s728, 8
        %s730 = scalar_lea.vmem %s0, %s729
        %p731 = pneg %p64
        %p732 = pneg %p61
        %p733 = pneg %p85
        %p734 = pneg %p82
        %p735 = pneg %p106
        %p736 = pneg %p103
        %p737 = pneg %p127
        %p738 = pneg %p124
        %p739 = pneg %p148
        %p740 = pneg %p145
        %p741 = pneg %p169
        %p742 = pneg %p166
        %p743 = pneg %p190
        %p744 = pneg %p187
        %p745 = pneg %p211
        %p746 = pneg %p208
        %p747 = pneg %p232
        %p748 = pneg %p229
        %p749 = pneg %p253
        %p750 = pneg %p250
        %p751 = pneg %p274
        %p752 = pneg %p271
        %p753 = pneg %p295
        %p754 = pneg %p292
        %p755 = pneg %p316
        %p756 = pneg %p313
        %p757 = pneg %p337
        %p758 = pneg %p334
        %p759 = pneg %p358
        %p760 = pneg %p355
        %p761 = pneg %p379
        %p762 = pneg %p376
        %p763 = pneg %p400
        %p764 = pneg %p397
        %p765 = pneg %p421
        %p766 = pneg %p418
        %p767 = pneg %p442
        %p768 = pneg %p439
        %p769 = pneg %p463
        %p770 = pneg %p460
        %p771 = pneg %p484
        %p772 = pneg %p481
        %p773 = pneg %p505
        %p774 = pneg %p502
        %p775 = pneg %p526
        %p776 = pneg %p523
        %p777 = pneg %p547
        %p778 = pneg %p544
        %p779 = pneg %p568
        %p780 = pneg %p565
        %p781 = pneg %p594
        %p782 = pneg %p591
        %s783 = sand.u32 %s581, 1
        %s784 = scalar_lea.sflag [#allocation5], %s783
        %s785 = sand.u32 %s581, 1
        %s786 = smul.addr %s785, 16
        %s787 = scalar_lea.vmem [#allocation4], %s786
        %p788 = pneg %p620
        %p789 = pneg %p617
        %p790 = scmp.lt.s32.totalorder %s43, 1
        %s791 = scalar_select %p790, %s43, 1
        %s792 = smul.addr %s791, 2
        %s793 = smul.addr %s792, 8
        %s794 = scalar_lea.vmem %s26, %s793
        %p795 = scmp.lt.s32.totalorder %s43, 1
        %s796 = scalar_select %p795, %s43, 1
        %s797 = smul.addr %s796, 2
        %s798 = smul.addr %s797, 8
        %s799 = scalar_lea.vmem %s0, %s798
        %p800 = scmp.lt.s32.totalorder %s43, 1
        %s801 = scalar_select %p800, %s43, 1
        %s802 = smul.addr %s801, 2
        %s803 = smul.addr %s802, 8
        %s804 = scalar_lea.vmem %s26, %s803
        %v806 = vld [vmem:[%s799] sm:$0xff]
        %v807 = vld [vmem:[%s799 + $0x8] sm:$0xff]
        %v808 = vpack.c.bf16 %v807, %v806
        %v809 = vld [vmem:[%s1] sm:$0xf]
        %v810 = vld [vmem:[%s1 + $0x4] sm:$0xf]
        %v811 = vld [vmem:[%s1 + $0x8] sm:$0xf]
        %v812 = vld [vmem:[%s1 + $0xc] sm:$0xf]
        %v813 = vld [vmem:[%s2] sm:$0x1]
        %v815 = vlaneseq
        %v816 = vshrl.u32 %v815, 7
        %v817 = vsub.s32 0, %v816
        %v818 = vrot.slane %v813, %v817
        %v824 = vunpack.c.l.b16 %v809
        %v825 = vunpack.c.l.b16 %v810
        %v826 = vunpack.c.l.b16 %v811
        %v827 = vunpack.c.l.b16 %v812
        %v828 = vpack.c.b16 %v825, %v824
        %v829 = vpack.c.b16 %v827, %v826
        %vm832 = vcmask 261120
        %v834 = vsel %vm832, %v808, 0
        %836 = vmatprep.subr.bf16.mxu0 0
        %837 = vmatpush1.bf16.msra.mxu0 0
        %838 = vmatprep.subr.bf16.mxu0 0
        %839 = vmatpush1.bf16.msra.mxu0 0
        %840 = vmatprep.subr.bf16.mxu0 0
        %841 = vmatpush1.bf16.msra.mxu0 0
        %842 = vmatprep.subr.bf16.mxu0 0
        %843 = vmatpush1.bf16.msra.mxu0 0
        %844 = vmatprep.subr.bf16.mxu0 0
        %845 = vmatpush1.bf16.msra.mxu0 0
        %846 = vmatprep.subr.bf16.mxu0 0
        %847 = vmatpush1.bf16.msra.mxu0 0
        %848 = vmatprep.subr.bf16.mxu0 0
        %849 = vmatpush1.bf16.msra.mxu0 %v829
        %850 = vmatprep.subr.bf16.mxu0 0
        %851 = vmatpush1.bf16.msra.mxu0 %v828
        %852 = vmatprep.subr.bf16.mxu0 0
        %853 = vmatpush2.bf16.msra.mxu0 0
        %854 = vmatprep.subr.bf16.mxu0 0
        %855 = vmatpush2.bf16.msra.mxu0 0
        %856 = vmatprep.subr.bf16.mxu0 0
        %857 = vmatpush2.bf16.msra.mxu0 0
        %858 = vmatprep.subr.bf16.mxu0 0
        %859 = vmatpush2.bf16.msra.mxu0 0
        %860 = vmatprep.subr.bf16.mxu0 0
        %861 = vmatpush2.bf16.msra.mxu0 0
        %862 = vmatprep.subr.bf16.mxu0 0
        %863 = vmatpush2.bf16.msra.mxu0 0
        %864 = vmatprep.subr.bf16.mxu0 0
        %865 = vmatpush2.bf16.msra.mxu0 0
        %866 = vmatprep.subr.bf16.mxu0 0
        %867 = vmatpush2.bf16.msra.mxu0 0
        %868 = vmatprep.mubr.bf16.mxu0 0
        %869 = vmatmul.mubr.bf16.gmra.mxu0 %v834
        %v870 = vpop.f32.mrf.mxu0
        %v871 = vadd.f32 %v818, %v870
        %v872 = vpop.f32.mrf.mxu0
        %v873 = vpop.f32.mrf.mxu0
        %v874 = vadd.f32 %v818, %v873
        %v875 = vpop.f32.mrf.mxu0
        %876 = vdwg.mxu0
        %v877 = vmul.f32 %v871, %v871
        %v878 = vmul.f32 %v874, %v874
        %v879 = vmul.f32 %v871, %v877
        %v880 = vmul.f32 %v874, %v878
        %v881 = vmul.f32 %v879, 0.044715
        %v882 = vmul.f32 %v880, 0.044715
        %v883 = vadd.f32 %v871, %v881
        %v884 = vadd.f32 %v874, %v882
        %v885 = vmul.f32 %v883, 0.7978846
        %v886 = vmul.f32 %v884, 0.7978846
        %v887 = vtanh.pop %v885
        %v888 = vtanh.pop %v886
        %v889 = vadd.f32 %v887, 1.0
        %v890 = vadd.f32 %v888, 1.0
        %v891 = vmul.f32 %v889, 0.5
        %v892 = vmul.f32 %v890, 0.5
        %v893 = vmul.f32 %v871, %v891
        %v894 = vmul.f32 %v874, %v892
        %v895 = vpack.c.bf16 %v894, %v893
        %v896 = vld [vmem:[%s3] sm:$0xf]
        %v897 = vld [vmem:[%s3 + $0x4] sm:$0xf]
        %v898 = vld [vmem:[%s3 + $0x8] sm:$0xf]
        %v899 = vld [vmem:[%s3 + $0xc] sm:$0xf]
        %v904 = vunpack.c.l.b16 %v896
        %v905 = vunpack.c.l.b16 %v897
        %v906 = vunpack.c.l.b16 %v898
        %v907 = vunpack.c.l.b16 %v899
        %v908 = vpack.c.b16 %v905, %v904
        %v909 = vpack.c.b16 %v907, %v906
        %v913 = vsel %vm832, %v895, 0
        %915 = vmatprep.subr.bf16.mxu0 0
        %916 = vmatpush1.bf16.msra.mxu0 0
        %917 = vmatprep.subr.bf16.mxu0 0
        %918 = vmatpush1.bf16.msra.mxu0 0
        %919 = vmatprep.subr.bf16.mxu0 0
        %920 = vmatpush1.bf16.msra.mxu0 0
        %921 = vmatprep.subr.bf16.mxu0 0
        %922 = vmatpush1.bf16.msra.mxu0 0
        %923 = vmatprep.subr.bf16.mxu0 0
        %924 = vmatpush1.bf16.msra.mxu0 0
        %925 = vmatprep.subr.bf16.mxu0 0
        %926 = vmatpush1.bf16.msra.mxu0 0
        %927 = vmatprep.subr.bf16.mxu0 0
        %928 = vmatpush1.bf16.msra.mxu0 %v909
        %929 = vmatprep.subr.bf16.mxu0 0
        %930 = vmatpush1.bf16.msra.mxu0 %v908
        %931 = vmatprep.subr.bf16.mxu0 0
        %932 = vmatpush2.bf16.msra.mxu0 0
        %933 = vmatprep.subr.bf16.mxu0 0
        %934 = vmatpush2.bf16.msra.mxu0 0
        %935 = vmatprep.subr.bf16.mxu0 0
        %936 = vmatpush2.bf16.msra.mxu0 0
        %937 = vmatprep.subr.bf16.mxu0 0
        %938 = vmatpush2.bf16.msra.mxu0 0
        %939 = vmatprep.subr.bf16.mxu0 0
        %940 = vmatpush2.bf16.msra.mxu0 0
        %941 = vmatprep.subr.bf16.mxu0 0
        %942 = vmatpush2.bf16.msra.mxu0 0
        %943 = vmatprep.subr.bf16.mxu0 0
        %944 = vmatpush2.bf16.msra.mxu0 0
        %945 = vmatprep.subr.bf16.mxu0 0
        %946 = vmatpush2.bf16.msra.mxu0 0
        %947 = vmatprep.mubr.bf16.mxu0 0
        %948 = vmatmul.mubr.bf16.gmra.mxu0 %v913
        %v949 = vpop.f32.mrf.mxu0
        %v950 = vadd.f32 0.0, %v949
        %v951 = vpop.f32.mrf.mxu0
        %v952 = vpop.f32.mrf.mxu0
        %v953 = vadd.f32 0.0, %v952
        %v954 = vpop.f32.mrf.mxu0
        %955 = vdwg.mxu0
        %v956 = vadd.f32 %v806, %v950
        %v957 = vadd.f32 %v807, %v953
        %v958 = vld [vmem:[%s4] sm:$0x1]
        %v960 = vlaneseq
        %v961 = vshrl.u32 %v960, 7
        %v962 = vsub.s32 0, %v961
        %v963 = vrot.slane %v958, %v962
        %v965 = vadd.f32 %v956, %v963
        %v966 = vadd.f32 %v957, %v963
        %967 = vst.msk [vmem:[#allocation2] sm:$0xff] %vm832, 0.0
        %968 = vst.msk [vmem:[#allocation2 + $0x8] sm:$0xff] %vm832, 0.0
        %vm969 = vcmask 257024
        %970 = vst.msk [vmem:[#allocation2 + $0x10] sm:$0xf] %vm969, 0.0
        %971 = vst.msk [vmem:[#allocation2 + $0x2] sm:$0xff] %vm832, %v806
        %972 = vst.msk [vmem:[#allocation2 + $0xa] sm:$0xff] %vm832, %v807
        %v973 = vld [vmem:[#allocation2] sm:$0xff]
        %v974 = vld [vmem:[#allocation2 + $0x8] sm:$0xff]
        %v975 = vpack.c.bf16 %v974, %v973
        %v976 = vld [vmem:[%s7] sm:$0xf]
        %v977 = vld [vmem:[%s7 + $0x4] sm:$0xf]
        %v978 = vld [vmem:[%s7 + $0x8] sm:$0xf]
        %v979 = vld [vmem:[%s7 + $0xc] sm:$0xf]
        %v980 = vadd.f32 %v973, 0.0
        %v981 = vadd.f32 %v974, 0.0
        %v982 = vld [vmem:[#allocation2 + $0x1] sm:$0xff]
        %v983 = vld [vmem:[#allocation2 + $0x9] sm:$0xff]
        %v984 = vpack.c.bf16 %v983, %v982
        %s985 = scalar_lea.vmem %s7, 16
        %v986 = vld [vmem:[%s985] sm:$0xf]
        %v987 = vld [vmem:[%s985 + $0x4] sm:$0xf]
        %v988 = vld [vmem:[%s985 + $0x8] sm:$0xf]
        %v989 = vld [vmem:[%s985 + $0xc] sm:$0xf]
        %v994 = vunpack.c.l.b16 %v986
        %v995 = vunpack.c.l.b16 %v987
        %v996 = vunpack.c.l.b16 %v988
        %v997 = vunpack.c.l.b16 %v989
        %v998 = vpack.c.b16 %v995, %v994
        %v999 = vpack.c.b16 %v997, %v996
        %v1003 = vsel %vm832, %v984, 0
        %1005 = vmatprep.subr.bf16.mxu0 0
        %1006 = vmatpush1.bf16.msra.mxu0 0
        %1007 = vmatprep.subr.bf16.mxu0 0
        %1008 = vmatpush1.bf16.msra.mxu0 0
        %1009 = vmatprep.subr.bf16.mxu0 0
        %1010 = vmatpush1.bf16.msra.mxu0 0
        %1011 = vmatprep.subr.bf16.mxu0 0
        %1012 = vmatpush1.bf16.msra.mxu0 0
        %1013 = vmatprep.subr.bf16.mxu0 0
        %1014 = vmatpush1.bf16.msra.mxu0 0
        %1015 = vmatprep.subr.bf16.mxu0 0
        %1016 = vmatpush1.bf16.msra.mxu0 0
        %1017 = vmatprep.subr.bf16.mxu0 0
        %1018 = vmatpush1.bf16.msra.mxu0 %v999
        %1019 = vmatprep.subr.bf16.mxu0 0
        %1020 = vmatpush1.bf16.msra.mxu0 %v998
        %1021 = vmatprep.subr.bf16.mxu0 0
        %1022 = vmatpush2.bf16.msra.mxu0 0
        %1023 = vmatprep.subr.bf16.mxu0 0
        %1024 = vmatpush2.bf16.msra.mxu0 0
        %1025 = vmatprep.subr.bf16.mxu0 0
        %1026 = vmatpush2.bf16.msra.mxu0 0
        %1027 = vmatprep.subr.bf16.mxu0 0
        %1028 = vmatpush2.bf16.msra.mxu0 0
        %1029 = vmatprep.subr.bf16.mxu0 0
        %1030 = vmatpush2.bf16.msra.mxu0 0
        %1031 = vmatprep.subr.bf16.mxu0 0
        %1032 = vmatpush2.bf16.msra.mxu0 0
        %1033 = vmatprep.subr.bf16.mxu0 0
        %1034 = vmatpush2.bf16.msra.mxu0 0
        %1035 = vmatprep.subr.bf16.mxu0 0
        %1036 = vmatpush2.bf16.msra.mxu0 0
        %1037 = vmatprep.mubr.bf16.mxu0 0
        %1038 = vmatmul.mubr.bf16.gmra.mxu0 %v1003
        %v1039 = vpop.f32.mrf.mxu0
        %v1040 = vadd.f32 0.0, %v1039
        %v1041 = vpop.f32.mrf.mxu0
        %v1042 = vpop.f32.mrf.mxu0
        %v1043 = vadd.f32 0.0, %v1042
        %v1044 = vpop.f32.mrf.mxu0
        %1045 = vdwg.mxu0
        %v1050 = vunpack.c.l.b16 %v976
        %v1051 = vunpack.c.l.b16 %v977
        %v1052 = vunpack.c.l.b16 %v978
        %v1053 = vunpack.c.l.b16 %v979
        %v1054 = vpack.c.b16 %v1051, %v1050
        %v1055 = vpack.c.b16 %v1053, %v1052
        %v1059 = vsel %vm832, %v975, 0
        %1061 = vmatprep.subr.bf16.mxu0 0
        %1062 = vmatpush1.bf16.msra.mxu0 0
        %1063 = vmatprep.subr.bf16.mxu0 0
        %1064 = vmatpush1.bf16.msra.mxu0 0
        %1065 = vmatprep.subr.bf16.mxu0 0
        %1066 = vmatpush1.bf16.msra.mxu0 0
        %1067 = vmatprep.subr.bf16.mxu0 0
        %1068 = vmatpush1.bf16.msra.mxu0 0
        %1069 = vmatprep.subr.bf16.mxu0 0
        %1070 = vmatpush1.bf16.msra.mxu0 0
        %1071 = vmatprep.subr.bf16.mxu0 0
        %1072 = vmatpush1.bf16.msra.mxu0 0
        %1073 = vmatprep.subr.bf16.mxu0 0
        %1074 = vmatpush1.bf16.msra.mxu0 %v1055
        %1075 = vmatprep.subr.bf16.mxu0 0
        %1076 = vmatpush1.bf16.msra.mxu0 %v1054
        %1077 = vmatprep.subr.bf16.mxu0 0
        %1078 = vmatpush2.bf16.msra.mxu0 0
        %1079 = vmatprep.subr.bf16.mxu0 0
        %1080 = vmatpush2.bf16.msra.mxu0 0
        %1081 = vmatprep.subr.bf16.mxu0 0
        %1082 = vmatpush2.bf16.msra.mxu0 0
        %1083 = vmatprep.subr.bf16.mxu0 0
        %1084 = vmatpush2.bf16.msra.mxu0 0
        %1085 = vmatprep.subr.bf16.mxu0 0
        %1086 = vmatpush2.bf16.msra.mxu0 0
        %1087 = vmatprep.subr.bf16.mxu0 0
        %1088 = vmatpush2.bf16.msra.mxu0 0
        %1089 = vmatprep.subr.bf16.mxu0 0
        %1090 = vmatpush2.bf16.msra.mxu0 0
        %1091 = vmatprep.subr.bf16.mxu0 0
        %1092 = vmatpush2.bf16.msra.mxu0 0
        %1093 = vmatprep.mubr.bf16.mxu0 0
        %1094 = vmatmul.mubr.bf16.gmra.mxu0 %v1059
        %v1095 = vpop.f32.mrf.mxu0
        %v1096 = vadd.f32 %v1040, %v1095
        %v1097 = vpop.f32.mrf.mxu0
        %v1098 = vpop.f32.mrf.mxu0
        %v1099 = vadd.f32 %v1043, %v1098
        %v1100 = vpop.f32.mrf.mxu0
        %1101 = vdwg.mxu0
        %v1102 = vld [vmem:[%s5] sm:$0xf]
        %v1103 = vld [vmem:[%s5 + $0x4] sm:$0xf]
        %v1104 = vld [vmem:[%s5 + $0x8] sm:$0xf]
        %v1105 = vld [vmem:[%s5 + $0xc] sm:$0xf]
        %v1106 = vadd.f32 %v980, %v982
        %v1107 = vadd.f32 %v981, %v983
        %v1108 = vld [vmem:[#allocation2 + $0x2] sm:$0xff]
        %v1109 = vld [vmem:[#allocation2 + $0xa] sm:$0xff]
        %v1110 = vpack.c.bf16 %v1109, %v1108
        %s1111 = scalar_lea.vmem %s7, 32
        %v1112 = vld [vmem:[%s1111] sm:$0xf]
        %v1113 = vld [vmem:[%s1111 + $0x4] sm:$0xf]
        %v1114 = vld [vmem:[%s1111 + $0x8] sm:$0xf]
        %v1115 = vld [vmem:[%s1111 + $0xc] sm:$0xf]
        %v1120 = vunpack.c.l.b16 %v1112
        %v1121 = vunpack.c.l.b16 %v1113
        %v1122 = vunpack.c.l.b16 %v1114
        %v1123 = vunpack.c.l.b16 %v1115
        %v1124 = vpack.c.b16 %v1121, %v1120
        %v1125 = vpack.c.b16 %v1123, %v1122
        %v1129 = vsel %vm832, %v1110, 0
        %1131 = vmatprep.subr.bf16.mxu0 0
        %1132 = vmatpush1.bf16.msra.mxu0 0
        %1133 = vmatprep.subr.bf16.mxu0 0
        %1134 = vmatpush1.bf16.msra.mxu0 0
        %1135 = vmatprep.subr.bf16.mxu0 0
        %1136 = vmatpush1.bf16.msra.mxu0 0
        %1137 = vmatprep.subr.bf16.mxu0 0
        %1138 = vmatpush1.bf16.msra.mxu0 0
        %1139 = vmatprep.subr.bf16.mxu0 0
        %1140 = vmatpush1.bf16.msra.mxu0 0
        %1141 = vmatprep.subr.bf16.mxu0 0
        %1142 = vmatpush1.bf16.msra.mxu0 0
        %1143 = vmatprep.subr.bf16.mxu0 0
        %1144 = vmatpush1.bf16.msra.mxu0 %v1125
        %1145 = vmatprep.subr.bf16.mxu0 0
        %1146 = vmatpush1.bf16.msra.mxu0 %v1124
        %1147 = vmatprep.subr.bf16.mxu0 0
        %1148 = vmatpush2.bf16.msra.mxu0 0
        %1149 = vmatprep.subr.bf16.mxu0 0
        %1150 = vmatpush2.bf16.msra.mxu0 0
        %1151 = vmatprep.subr.bf16.mxu0 0
        %1152 = vmatpush2.bf16.msra.mxu0 0
        %1153 = vmatprep.subr.bf16.mxu0 0
        %1154 = vmatpush2.bf16.msra.mxu0 0
        %1155 = vmatprep.subr.bf16.mxu0 0
        %1156 = vmatpush2.bf16.msra.mxu0 0
        %1157 = vmatprep.subr.bf16.mxu0 0
        %1158 = vmatpush2.bf16.msra.mxu0 0
        %1159 = vmatprep.subr.bf16.mxu0 0
        %1160 = vmatpush2.bf16.msra.mxu0 0
        %1161 = vmatprep.subr.bf16.mxu0 0
        %1162 = vmatpush2.bf16.msra.mxu0 0
        %1163 = vmatprep.mubr.bf16.mxu0 0
        %1164 = vmatmul.mubr.bf16.gmra.mxu0 %v1129
        %v1165 = vpop.f32.mrf.mxu0
        %v1166 = vadd.f32 0.0, %v1165
        %v1167 = vpop.f32.mrf.mxu0
        %v1168 = vpop.f32.mrf.mxu0
        %v1169 = vadd.f32 0.0, %v1168
        %v1170 = vpop.f32.mrf.mxu0
        %1171 = vdwg.mxu0
        %v1172 = vadd.f32 %v1096, %v1166
        %v1173 = vadd.f32 %v1099, %v1169
        %s1174 = scalar_lea.vmem %s5, 16
        %v1175 = vld [vmem:[%s1174] sm:$0xf]
        %v1176 = vld [vmem:[%s1174 + $0x4] sm:$0xf]
        %v1177 = vld [vmem:[%s1174 + $0x8] sm:$0xf]
        %v1178 = vld [vmem:[%s1174 + $0xc] sm:$0xf]
        %v1183 = vunpack.c.l.b16 %v1175
        %v1184 = vunpack.c.l.b16 %v1176
        %v1185 = vunpack.c.l.b16 %v1177
        %v1186 = vunpack.c.l.b16 %v1178
        %v1187 = vpack.c.b16 %v1184, %v1183
        %v1188 = vpack.c.b16 %v1186, %v1185
        %1191 = vmatprep.subr.bf16.mxu0 0
        %1192 = vmatpush1.bf16.msra.mxu0 0
        %1193 = vmatprep.subr.bf16.mxu0 0
        %1194 = vmatpush1.bf16.msra.mxu0 0
        %1195 = vmatprep.subr.bf16.mxu0 0
        %1196 = vmatpush1.bf16.msra.mxu0 0
        %1197 = vmatprep.subr.bf16.mxu0 0
        %1198 = vmatpush1.bf16.msra.mxu0 0
        %1199 = vmatprep.subr.bf16.mxu0 0
        %1200 = vmatpush1.bf16.msra.mxu0 0
        %1201 = vmatprep.subr.bf16.mxu0 0
        %1202 = vmatpush1.bf16.msra.mxu0 0
        %1203 = vmatprep.subr.bf16.mxu0 0
        %1204 = vmatpush1.bf16.msra.mxu0 %v1188
        %1205 = vmatprep.subr.bf16.mxu0 0
        %1206 = vmatpush1.bf16.msra.mxu0 %v1187
        %1207 = vmatprep.subr.bf16.mxu0 0
        %1208 = vmatpush2.bf16.msra.mxu0 0
        %1209 = vmatprep.subr.bf16.mxu0 0
        %1210 = vmatpush2.bf16.msra.mxu0 0
        %1211 = vmatprep.subr.bf16.mxu0 0
        %1212 = vmatpush2.bf16.msra.mxu0 0
        %1213 = vmatprep.subr.bf16.mxu0 0
        %1214 = vmatpush2.bf16.msra.mxu0 0
        %1215 = vmatprep.subr.bf16.mxu0 0
        %1216 = vmatpush2.bf16.msra.mxu0 0
        %1217 = vmatprep.subr.bf16.mxu0 0
        %1218 = vmatpush2.bf16.msra.mxu0 0
        %1219 = vmatprep.subr.bf16.mxu0 0
        %1220 = vmatpush2.bf16.msra.mxu0 0
        %1221 = vmatprep.subr.bf16.mxu0 0
        %1222 = vmatpush2.bf16.msra.mxu0 0
        %1223 = vmatprep.mubr.bf16.mxu0 0
        %1224 = vmatmul.mubr.bf16.gmra.mxu0 %v1129
        %v1225 = vpop.f32.mrf.mxu0
        %v1226 = vadd.f32 0.0, %v1225
        %v1227 = vpop.f32.mrf.mxu0
        %v1228 = vpop.f32.mrf.mxu0
        %v1229 = vadd.f32 0.0, %v1228
        %v1230 = vpop.f32.mrf.mxu0
        %1231 = vdwg.mxu0
        %v1236 = vunpack.c.l.b16 %v1102
        %v1237 = vunpack.c.l.b16 %v1103
        %v1238 = vunpack.c.l.b16 %v1104
        %v1239 = vunpack.c.l.b16 %v1105
        %v1240 = vpack.c.b16 %v1237, %v1236
        %v1241 = vpack.c.b16 %v1239, %v1238
        %1244 = vmatprep.subr.bf16.mxu0 0
        %1245 = vmatpush1.bf16.msra.mxu0 0
        %1246 = vmatprep.subr.bf16.mxu0 0
        %1247 = vmatpush1.bf16.msra.mxu0 0
        %1248 = vmatprep.subr.bf16.mxu0 0
        %1249 = vmatpush1.bf16.msra.mxu0 0
        %1250 = vmatprep.subr.bf16.mxu0 0
        %1251 = vmatpush1.bf16.msra.mxu0 0
        %1252 = vmatprep.subr.bf16.mxu0 0
        %1253 = vmatpush1.bf16.msra.mxu0 0
        %1254 = vmatprep.subr.bf16.mxu0 0
        %1255 = vmatpush1.bf16.msra.mxu0 0
        %1256 = vmatprep.subr.bf16.mxu0 0
        %1257 = vmatpush1.bf16.msra.mxu0 %v1241
        %1258 = vmatprep.subr.bf16.mxu0 0
        %1259 = vmatpush1.bf16.msra.mxu0 %v1240
        %1260 = vmatprep.subr.bf16.mxu0 0
        %1261 = vmatpush2.bf16.msra.mxu0 0
        %1262 = vmatprep.subr.bf16.mxu0 0
        %1263 = vmatpush2.bf16.msra.mxu0 0
        %1264 = vmatprep.subr.bf16.mxu0 0
        %1265 = vmatpush2.bf16.msra.mxu0 0
        %1266 = vmatprep.subr.bf16.mxu0 0
        %1267 = vmatpush2.bf16.msra.mxu0 0
        %1268 = vmatprep.subr.bf16.mxu0 0
        %1269 = vmatpush2.bf16.msra.mxu0 0
        %1270 = vmatprep.subr.bf16.mxu0 0
        %1271 = vmatpush2.bf16.msra.mxu0 0
        %1272 = vmatprep.subr.bf16.mxu0 0
        %1273 = vmatpush2.bf16.msra.mxu0 0
        %1274 = vmatprep.subr.bf16.mxu0 0
        %1275 = vmatpush2.bf16.msra.mxu0 0
        %1276 = vmatprep.mubr.bf16.mxu0 0
        %1277 = vmatmul.mubr.bf16.gmra.mxu0 %v1003
        %v1278 = vpop.f32.mrf.mxu0
        %v1279 = vadd.f32 %v1226, %v1278
        %v1280 = vpop.f32.mrf.mxu0
        %v1281 = vpop.f32.mrf.mxu0
        %v1282 = vadd.f32 %v1229, %v1281
        %v1283 = vpop.f32.mrf.mxu0
        %1284 = vdwg.mxu0
        %v1285 = vadd.f32 %v1106, %v1108
        %v1286 = vadd.f32 %v1107, %v1109
        %v1287 = vld [vmem:[#allocation2 + $0x3] sm:$0xff]
        %v1288 = vld [vmem:[#allocation2 + $0xb] sm:$0xff]
        %v1289 = vpack.c.bf16 %v1288, %v1287
        %s1290 = scalar_lea.vmem %s7, 48
        %v1291 = vld [vmem:[%s1290] sm:$0xf]
        %v1292 = vld [vmem:[%s1290 + $0x4] sm:$0xf]
        %v1293 = vld [vmem:[%s1290 + $0x8] sm:$0xf]
        %v1294 = vld [vmem:[%s1290 + $0xc] sm:$0xf]
        %v1299 = vunpack.c.l.b16 %v1291
        %v1300 = vunpack.c.l.b16 %v1292
        %v1301 = vunpack.c.l.b16 %v1293
        %v1302 = vunpack.c.l.b16 %v1294
        %v1303 = vpack.c.b16 %v1300, %v1299
        %v1304 = vpack.c.b16 %v1302, %v1301
        %v1308 = vsel %vm832, %v1289, 0
        %1310 = vmatprep.subr.bf16.mxu0 0
        %1311 = vmatpush1.bf16.msra.mxu0 0
        %1312 = vmatprep.subr.bf16.mxu0 0
        %1313 = vmatpush1.bf16.msra.mxu0 0
        %1314 = vmatprep.subr.bf16.mxu0 0
        %1315 = vmatpush1.bf16.msra.mxu0 0
        %1316 = vmatprep.subr.bf16.mxu0 0
        %1317 = vmatpush1.bf16.msra.mxu0 0
        %1318 = vmatprep.subr.bf16.mxu0 0
        %1319 = vmatpush1.bf16.msra.mxu0 0
        %1320 = vmatprep.subr.bf16.mxu0 0
        %1321 = vmatpush1.bf16.msra.mxu0 0
        %1322 = vmatprep.subr.bf16.mxu0 0
        %1323 = vmatpush1.bf16.msra.mxu0 %v1304
        %1324 = vmatprep.subr.bf16.mxu0 0
        %1325 = vmatpush1.bf16.msra.mxu0 %v1303
        %1326 = vmatprep.subr.bf16.mxu0 0
        %1327 = vmatpush2.bf16.msra.mxu0 0
        %1328 = vmatprep.subr.bf16.mxu0 0
        %1329 = vmatpush2.bf16.msra.mxu0 0
        %1330 = vmatprep.subr.bf16.mxu0 0
        %1331 = vmatpush2.bf16.msra.mxu0 0
        %1332 = vmatprep.subr.bf16.mxu0 0
        %1333 = vmatpush2.bf16.msra.mxu0 0
        %1334 = vmatprep.subr.bf16.mxu0 0
        %1335 = vmatpush2.bf16.msra.mxu0 0
        %1336 = vmatprep.subr.bf16.mxu0 0
        %1337 = vmatpush2.bf16.msra.mxu0 0
        %1338 = vmatprep.subr.bf16.mxu0 0
        %1339 = vmatpush2.bf16.msra.mxu0 0
        %1340 = vmatprep.subr.bf16.mxu0 0
        %1341 = vmatpush2.bf16.msra.mxu0 0
        %1342 = vmatprep.mubr.bf16.mxu0 0
        %1343 = vmatmul.mubr.bf16.gmra.mxu0 %v1308
        %v1344 = vpop.f32.mrf.mxu0
        %v1345 = vadd.f32 0.0, %v1344
        %v1346 = vpop.f32.mrf.mxu0
        %v1347 = vpop.f32.mrf.mxu0
        %v1348 = vadd.f32 0.0, %v1347
        %v1349 = vpop.f32.mrf.mxu0
        %1350 = vdwg.mxu0
        %v1351 = vadd.f32 %v1172, %v1345
        %v1352 = vadd.f32 %v1173, %v1348
        %s1353 = scalar_lea.vmem %s5, 32
        %v1354 = vld [vmem:[%s1353] sm:$0xf]
        %v1355 = vld [vmem:[%s1353 + $0x4] sm:$0xf]
        %v1356 = vld [vmem:[%s1353 + $0x8] sm:$0xf]
        %v1357 = vld [vmem:[%s1353 + $0xc] sm:$0xf]
        %v1362 = vunpack.c.l.b16 %v1354
        %v1363 = vunpack.c.l.b16 %v1355
        %v1364 = vunpack.c.l.b16 %v1356
        %v1365 = vunpack.c.l.b16 %v1357
        %v1366 = vpack.c.b16 %v1363, %v1362
        %v1367 = vpack.c.b16 %v1365, %v1364
        %1370 = vmatprep.subr.bf16.mxu0 0
        %1371 = vmatpush1.bf16.msra.mxu0 0
        %1372 = vmatprep.subr.bf16.mxu0 0
        %1373 = vmatpush1.bf16.msra.mxu0 0
        %1374 = vmatprep.subr.bf16.mxu0 0
        %1375 = vmatpush1.bf16.msra.mxu0 0
        %1376 = vmatprep.subr.bf16.mxu0 0
        %1377 = vmatpush1.bf16.msra.mxu0 0
        %1378 = vmatprep.subr.bf16.mxu0 0
        %1379 = vmatpush1.bf16.msra.mxu0 0
        %1380 = vmatprep.subr.bf16.mxu0 0
        %1381 = vmatpush1.bf16.msra.mxu0 0
        %1382 = vmatprep.subr.bf16.mxu0 0
        %1383 = vmatpush1.bf16.msra.mxu0 %v1367
        %1384 = vmatprep.subr.bf16.mxu0 0
        %1385 = vmatpush1.bf16.msra.mxu0 %v1366
        %1386 = vmatprep.subr.bf16.mxu0 0
        %1387 = vmatpush2.bf16.msra.mxu0 0
        %1388 = vmatprep.subr.bf16.mxu0 0
        %1389 = vmatpush2.bf16.msra.mxu0 0
        %1390 = vmatprep.subr.bf16.mxu0 0
        %1391 = vmatpush2.bf16.msra.mxu0 0
        %1392 = vmatprep.subr.bf16.mxu0 0
        %1393 = vmatpush2.bf16.msra.mxu0 0
        %1394 = vmatprep.subr.bf16.mxu0 0
        %1395 = vmatpush2.bf16.msra.mxu0 0
        %1396 = vmatprep.subr.bf16.mxu0 0
        %1397 = vmatpush2.bf16.msra.mxu0 0
        %1398 = vmatprep.subr.bf16.mxu0 0
        %1399 = vmatpush2.bf16.msra.mxu0 0
        %1400 = vmatprep.subr.bf16.mxu0 0
        %1401 = vmatpush2.bf16.msra.mxu0 0
        %1402 = vmatprep.mubr.bf16.mxu0 0
        %1403 = vmatmul.mubr.bf16.gmra.mxu0 %v1308
        %v1404 = vpop.f32.mrf.mxu0
        %v1405 = vadd.f32 0.0, %v1404
        %v1406 = vpop.f32.mrf.mxu0
        %v1407 = vpop.f32.mrf.mxu0
        %v1408 = vadd.f32 0.0, %v1407
        %v1409 = vpop.f32.mrf.mxu0
        %1410 = vdwg.mxu0
        %v1411 = vadd.f32 %v1279, %v1405
        %v1412 = vadd.f32 %v1282, %v1408
        %v1413 = vadd.f32 %v1285, %v1287
        %v1414 = vadd.f32 %v1286, %v1288
        %v1415 = vld [vmem:[#allocation2 + $0x4] sm:$0xff]
        %v1416 = vld [vmem:[#allocation2 + $0xc] sm:$0xff]
        %v1417 = vpack.c.bf16 %v1416, %v1415
        %s1418 = scalar_lea.vmem %s7, 64
        %v1419 = vld [vmem:[%s1418] sm:$0xf]
        %v1420 = vld [vmem:[%s1418 + $0x4] sm:$0xf]
        %v1421 = vld [vmem:[%s1418 + $0x8] sm:$0xf]
        %v1422 = vld [vmem:[%s1418 + $0xc] sm:$0xf]
        %v1427 = vunpack.c.l.b16 %v1419
        %v1428 = vunpack.c.l.b16 %v1420
        %v1429 = vunpack.c.l.b16 %v1421
        %v1430 = vunpack.c.l.b16 %v1422
        %v1431 = vpack.c.b16 %v1428, %v1427
        %v1432 = vpack.c.b16 %v1430, %v1429
        %v1436 = vsel %vm832, %v1417, 0
        %1438 = vmatprep.subr.bf16.mxu0 0
        %1439 = vmatpush1.bf16.msra.mxu0 0
        %1440 = vmatprep.subr.bf16.mxu0 0
        %1441 = vmatpush1.bf16.msra.mxu0 0
        %1442 = vmatprep.subr.bf16.mxu0 0
        %1443 = vmatpush1.bf16.msra.mxu0 0
        %1444 = vmatprep.subr.bf16.mxu0 0
        %1445 = vmatpush1.bf16.msra.mxu0 0
        %1446 = vmatprep.subr.bf16.mxu0 0
        %1447 = vmatpush1.bf16.msra.mxu0 0
        %1448 = vmatprep.subr.bf16.mxu0 0
        %1449 = vmatpush1.bf16.msra.mxu0 0
        %1450 = vmatprep.subr.bf16.mxu0 0
        %1451 = vmatpush1.bf16.msra.mxu0 %v1432
        %1452 = vmatprep.subr.bf16.mxu0 0
        %1453 = vmatpush1.bf16.msra.mxu0 %v1431
        %1454 = vmatprep.subr.bf16.mxu0 0
        %1455 = vmatpush2.bf16.msra.mxu0 0
        %1456 = vmatprep.subr.bf16.mxu0 0
        %1457 = vmatpush2.bf16.msra.mxu0 0
        %1458 = vmatprep.subr.bf16.mxu0 0
        %1459 = vmatpush2.bf16.msra.mxu0 0
        %1460 = vmatprep.subr.bf16.mxu0 0
        %1461 = vmatpush2.bf16.msra.mxu0 0
        %1462 = vmatprep.subr.bf16.mxu0 0
        %1463 = vmatpush2.bf16.msra.mxu0 0
        %1464 = vmatprep.subr.bf16.mxu0 0
        %1465 = vmatpush2.bf16.msra.mxu0 0
        %1466 = vmatprep.subr.bf16.mxu0 0
        %1467 = vmatpush2.bf16.msra.mxu0 0
        %1468 = vmatprep.subr.bf16.mxu0 0
        %1469 = vmatpush2.bf16.msra.mxu0 0
        %1470 = vmatprep.mubr.bf16.mxu0 0
        %1471 = vmatmul.mubr.bf16.gmra.mxu0 %v1436
        %v1472 = vpop.f32.mrf.mxu0
        %v1473 = vadd.f32 0.0, %v1472
        %v1474 = vpop.f32.mrf.mxu0
        %v1475 = vpop.f32.mrf.mxu0
        %v1476 = vadd.f32 0.0, %v1475
        %v1477 = vpop.f32.mrf.mxu0
        %1478 = vdwg.mxu0
        %v1479 = vadd.f32 %v1351, %v1473
        %v1480 = vadd.f32 %v1352, %v1476
        %v1481 = vadd.f32 %v1413, %v1415
        %v1482 = vadd.f32 %v1414, %v1416
        %v1483 = vld [vmem:[%s6] sm:$0x1]
        %v1485 = vlaneseq
        %v1486 = vshrl.u32 %v1485, 7
        %v1487 = vsub.s32 0, %v1486
        %v1488 = vrot.slane %v1483, %v1487
        %v1490 = vadd.f32 %v1411, %v1488
        %v1491 = vadd.f32 %v1412, %v1488
        %v1492 = vmul.f32 %v1490, %v1490
        %v1493 = vmul.f32 %v1491, %v1491
        %v1494 = vmul.f32 %v1490, %v1492
        %v1495 = vmul.f32 %v1491, %v1493
        %v1496 = vmul.f32 %v1494, 0.044715
        %v1497 = vmul.f32 %v1495, 0.044715
        %v1498 = vadd.f32 %v1490, %v1496
        %v1499 = vadd.f32 %v1491, %v1497
        %v1500 = vmul.f32 %v1498, 0.7978846
        %v1501 = vmul.f32 %v1499, 0.7978846
        %v1502 = vtanh.pop %v1500
        %v1503 = vtanh.pop %v1501
        %v1504 = vadd.f32 %v1502, 1.0
        %v1505 = vadd.f32 %v1503, 1.0
        %v1506 = vmul.f32 %v1504, 0.5
        %v1507 = vmul.f32 %v1505, 0.5
        %v1508 = vmul.f32 %v1490, %v1506
        %v1509 = vmul.f32 %v1491, %v1507
        %v1510 = vld [vmem:[%s8] sm:$0x1]
        %v1512 = vlaneseq
        %v1513 = vshrl.u32 %v1512, 7
        %v1514 = vsub.s32 0, %v1513
        %v1515 = vrot.slane %v1510, %v1514
        %v1517 = vadd.f32 %v1479, %v1515
        %v1518 = vadd.f32 %v1480, %v1515
        %v1519 = vmul.f32 %v1517, %v1517
        %v1520 = vmul.f32 %v1518, %v1518
        %v1521 = vmul.f32 %v1517, %v1519
        %v1522 = vmul.f32 %v1518, %v1520
        %v1523 = vmul.f32 %v1521, 0.044715
        %v1524 = vmul.f32 %v1522, 0.044715
        %v1525 = vadd.f32 %v1517, %v1523
        %v1526 = vadd.f32 %v1518, %v1524
        %v1527 = vmul.f32 %v1525, 0.7978846
        %v1528 = vmul.f32 %v1526, 0.7978846
        %v1529 = vtanh.pop %v1527
        %v1530 = vtanh.pop %v1528
        %v1531 = vadd.f32 %v1529, 1.0
        %v1532 = vadd.f32 %v1530, 1.0
        %v1533 = vmul.f32 %v1531, 0.5
        %v1534 = vmul.f32 %v1532, 0.5
        %v1535 = vmul.f32 %v1517, %v1533
        %v1536 = vmul.f32 %v1518, %v1534
        %v1537 = vmul.f32 %v1481, 0.2
        %v1538 = vmul.f32 %v1482, 0.2
        %v1539 = vpack.c.bf16 %v1509, %v1508
        %v1540 = vld [vmem:[%s9] sm:$0xf]
        %v1541 = vld [vmem:[%s9 + $0x4] sm:$0xf]
        %v1542 = vld [vmem:[%s9 + $0x8] sm:$0xf]
        %v1543 = vld [vmem:[%s9 + $0xc] sm:$0xf]
        %v1544 = vpack.c.bf16 %v1536, %v1535
        %v1545 = vld [vmem:[%s10] sm:$0xf]
        %v1546 = vld [vmem:[%s10 + $0x4] sm:$0xf]
        %v1547 = vld [vmem:[%s10 + $0x8] sm:$0xf]
        %v1548 = vld [vmem:[%s10 + $0xc] sm:$0xf]
        %v1553 = vunpack.c.l.b16 %v1545
        %v1554 = vunpack.c.l.b16 %v1546
        %v1555 = vunpack.c.l.b16 %v1547
        %v1556 = vunpack.c.l.b16 %v1548
        %v1557 = vpack.c.b16 %v1554, %v1553
        %v1558 = vpack.c.b16 %v1556, %v1555
        %v1562 = vsel %vm832, %v1544, 0
        %1564 = vmatprep.subr.bf16.mxu0 0
        %1565 = vmatpush1.bf16.msra.mxu0 0
        %1566 = vmatprep.subr.bf16.mxu0 0
        %1567 = vmatpush1.bf16.msra.mxu0 0
        %1568 = vmatprep.subr.bf16.mxu0 0
        %1569 = vmatpush1.bf16.msra.mxu0 0
        %1570 = vmatprep.subr.bf16.mxu0 0
        %1571 = vmatpush1.bf16.msra.mxu0 0
        %1572 = vmatprep.subr.bf16.mxu0 0
        %1573 = vmatpush1.bf16.msra.mxu0 0
        %1574 = vmatprep.subr.bf16.mxu0 0
        %1575 = vmatpush1.bf16.msra.mxu0 0
        %1576 = vmatprep.subr.bf16.mxu0 0
        %1577 = vmatpush1.bf16.msra.mxu0 %v1558
        %1578 = vmatprep.subr.bf16.mxu0 0
        %1579 = vmatpush1.bf16.msra.mxu0 %v1557
        %1580 = vmatprep.subr.bf16.mxu0 0
        %1581 = vmatpush2.bf16.msra.mxu0 0
        %1582 = vmatprep.subr.bf16.mxu0 0
        %1583 = vmatpush2.bf16.msra.mxu0 0
        %1584 = vmatprep.subr.bf16.mxu0 0
        %1585 = vmatpush2.bf16.msra.mxu0 0
        %1586 = vmatprep.subr.bf16.mxu0 0
        %1587 = vmatpush2.bf16.msra.mxu0 0
        %1588 = vmatprep.subr.bf16.mxu0 0
        %1589 = vmatpush2.bf16.msra.mxu0 0
        %1590 = vmatprep.subr.bf16.mxu0 0
        %1591 = vmatpush2.bf16.msra.mxu0 0
        %1592 = vmatprep.subr.bf16.mxu0 0
        %1593 = vmatpush2.bf16.msra.mxu0 0
        %1594 = vmatprep.subr.bf16.mxu0 0
        %1595 = vmatpush2.bf16.msra.mxu0 0
        %1596 = vmatprep.mubr.bf16.mxu0 0
        %1597 = vmatmul.mubr.bf16.gmra.mxu0 %v1562
        %v1598 = vpop.f32.mrf.mxu0
        %v1599 = vadd.f32 0.0, %v1598
        %v1600 = vpop.f32.mrf.mxu0
        %v1601 = vpop.f32.mrf.mxu0
        %v1602 = vadd.f32 0.0, %v1601
        %v1603 = vpop.f32.mrf.mxu0
        %1604 = vdwg.mxu0
        %v1609 = vunpack.c.l.b16 %v1540
        %v1610 = vunpack.c.l.b16 %v1541
        %v1611 = vunpack.c.l.b16 %v1542
        %v1612 = vunpack.c.l.b16 %v1543
        %v1613 = vpack.c.b16 %v1610, %v1609
        %v1614 = vpack.c.b16 %v1612, %v1611
        %v1618 = vsel %vm832, %v1539, 0
        %1620 = vmatprep.subr.bf16.mxu0 0
        %1621 = vmatpush1.bf16.msra.mxu0 0
        %1622 = vmatprep.subr.bf16.mxu0 0
        %1623 = vmatpush1.bf16.msra.mxu0 0
        %1624 = vmatprep.subr.bf16.mxu0 0
        %1625 = vmatpush1.bf16.msra.mxu0 0
        %1626 = vmatprep.subr.bf16.mxu0 0
        %1627 = vmatpush1.bf16.msra.mxu0 0
        %1628 = vmatprep.subr.bf16.mxu0 0
        %1629 = vmatpush1.bf16.msra.mxu0 0
        %1630 = vmatprep.subr.bf16.mxu0 0
        %1631 = vmatpush1.bf16.msra.mxu0 0
        %1632 = vmatprep.subr.bf16.mxu0 0
        %1633 = vmatpush1.bf16.msra.mxu0 %v1614
        %1634 = vmatprep.subr.bf16.mxu0 0
        %1635 = vmatpush1.bf16.msra.mxu0 %v1613
        %1636 = vmatprep.subr.bf16.mxu0 0
        %1637 = vmatpush2.bf16.msra.mxu0 0
        %1638 = vmatprep.subr.bf16.mxu0 0
        %1639 = vmatpush2.bf16.msra.mxu0 0
        %1640 = vmatprep.subr.bf16.mxu0 0
        %1641 = vmatpush2.bf16.msra.mxu0 0
        %1642 = vmatprep.subr.bf16.mxu0 0
        %1643 = vmatpush2.bf16.msra.mxu0 0
        %1644 = vmatprep.subr.bf16.mxu0 0
        %1645 = vmatpush2.bf16.msra.mxu0 0
        %1646 = vmatprep.subr.bf16.mxu0 0
        %1647 = vmatpush2.bf16.msra.mxu0 0
        %1648 = vmatprep.subr.bf16.mxu0 0
        %1649 = vmatpush2.bf16.msra.mxu0 0
        %1650 = vmatprep.subr.bf16.mxu0 0
        %1651 = vmatpush2.bf16.msra.mxu0 0
        %1652 = vmatprep.mubr.bf16.mxu0 0
        %1653 = vmatmul.mubr.bf16.gmra.mxu0 %v1618
        %v1654 = vpop.f32.mrf.mxu0
        %v1655 = vadd.f32 %v1599, %v1654
        %v1656 = vpop.f32.mrf.mxu0
        %v1657 = vpop.f32.mrf.mxu0
        %v1658 = vadd.f32 %v1602, %v1657
        %v1659 = vpop.f32.mrf.mxu0
        %1660 = vdwg.mxu0
        %v1661 = vpack.c.bf16 %v1538, %v1537
        %v1662 = vld [vmem:[%s11] sm:$0xf]
        %v1663 = vld [vmem:[%s11 + $0x4] sm:$0xf]
        %v1664 = vld [vmem:[%s11 + $0x8] sm:$0xf]
        %v1665 = vld [vmem:[%s11 + $0xc] sm:$0xf]
        %v1670 = vunpack.c.l.b16 %v1662
        %v1671 = vunpack.c.l.b16 %v1663
        %v1672 = vunpack.c.l.b16 %v1664
        %v1673 = vunpack.c.l.b16 %v1665
        %v1674 = vpack.c.b16 %v1671, %v1670
        %v1675 = vpack.c.b16 %v1673, %v1672
        %v1679 = vsel %vm832, %v1661, 0
        %1681 = vmatprep.subr.bf16.mxu0 0
        %1682 = vmatpush1.bf16.msra.mxu0 0
        %1683 = vmatprep.subr.bf16.mxu0 0
        %1684 = vmatpush1.bf16.msra.mxu0 0
        %1685 = vmatprep.subr.bf16.mxu0 0
        %1686 = vmatpush1.bf16.msra.mxu0 0
        %1687 = vmatprep.subr.bf16.mxu0 0
        %1688 = vmatpush1.bf16.msra.mxu0 0
        %1689 = vmatprep.subr.bf16.mxu0 0
        %1690 = vmatpush1.bf16.msra.mxu0 0
        %1691 = vmatprep.subr.bf16.mxu0 0
        %1692 = vmatpush1.bf16.msra.mxu0 0
        %1693 = vmatprep.subr.bf16.mxu0 0
        %1694 = vmatpush1.bf16.msra.mxu0 %v1675
        %1695 = vmatprep.subr.bf16.mxu0 0
        %1696 = vmatpush1.bf16.msra.mxu0 %v1674
        %1697 = vmatprep.subr.bf16.mxu0 0
        %1698 = vmatpush2.bf16.msra.mxu0 0
        %1699 = vmatprep.subr.bf16.mxu0 0
        %1700 = vmatpush2.bf16.msra.mxu0 0
        %1701 = vmatprep.subr.bf16.mxu0 0
        %1702 = vmatpush2.bf16.msra.mxu0 0
        %1703 = vmatprep.subr.bf16.mxu0 0
        %1704 = vmatpush2.bf16.msra.mxu0 0
        %1705 = vmatprep.subr.bf16.mxu0 0
        %1706 = vmatpush2.bf16.msra.mxu0 0
        %1707 = vmatprep.subr.bf16.mxu0 0
        %1708 = vmatpush2.bf16.msra.mxu0 0
        %1709 = vmatprep.subr.bf16.mxu0 0
        %1710 = vmatpush2.bf16.msra.mxu0 0
        %1711 = vmatprep.subr.bf16.mxu0 0
        %1712 = vmatpush2.bf16.msra.mxu0 0
        %1713 = vmatprep.mubr.bf16.mxu0 0
        %1714 = vmatmul.mubr.bf16.gmra.mxu0 %v1679
        %v1715 = vpop.f32.mrf.mxu0
        %v1716 = vadd.f32 0.0, %v1715
        %v1717 = vpop.f32.mrf.mxu0
        %v1718 = vpop.f32.mrf.mxu0
        %v1719 = vadd.f32 0.0, %v1718
        %v1720 = vpop.f32.mrf.mxu0
        %1721 = vdwg.mxu0
        %v1722 = vadd.f32 %v1655, %v1716
        %v1723 = vadd.f32 %v1658, %v1719
        %v1724 = vld [vmem:[%s12] sm:$0x1]
        %v1726 = vlaneseq
        %v1727 = vshrl.u32 %v1726, 7
        %v1728 = vsub.s32 0, %v1727
        %v1729 = vrot.slane %v1724, %v1728
        %v1731 = vadd.f32 %v1722, %v1729
        %v1732 = vadd.f32 %v1723, %v1729
        %v1733 = vmul.f32 %v1731, %v1731
        %v1734 = vmul.f32 %v1732, %v1732
        %v1735 = vmul.f32 %v1731, %v1733
        %v1736 = vmul.f32 %v1732, %v1734
        %v1737 = vmul.f32 %v1735, 0.044715
        %v1738 = vmul.f32 %v1736, 0.044715
        %v1739 = vadd.f32 %v1731, %v1737
        %v1740 = vadd.f32 %v1732, %v1738
        %v1741 = vmul.f32 %v1739, 0.7978846
        %v1742 = vmul.f32 %v1740, 0.7978846
        %v1743 = vtanh.pop %v1741
        %v1744 = vtanh.pop %v1742
        %v1745 = vadd.f32 %v1743, 1.0
        %v1746 = vadd.f32 %v1744, 1.0
        %v1747 = vmul.f32 %v1745, 0.5
        %v1748 = vmul.f32 %v1746, 0.5
        %v1749 = vmul.f32 %v1731, %v1747
        %v1750 = vmul.f32 %v1732, %v1748
        %v1751 = vadd.f32 %v806, %v1749
        %v1752 = vadd.f32 %v807, %v1750
        %v1753 = vpack.c.bf16 %v966, %v965
        %v1754 = vpack.c.bf16 %v1752, %v1751
        %v1755 = vld [vmem:[%s13] sm:$0xf]
        %v1756 = vld [vmem:[%s13 + $0x4] sm:$0xf]
        %v1757 = vld [vmem:[%s13 + $0x8] sm:$0xf]
        %v1758 = vld [vmem:[%s13 + $0xc] sm:$0xf]
        %v1763 = vunpack.c.l.b16 %v1755
        %v1764 = vunpack.c.l.b16 %v1756
        %v1765 = vunpack.c.l.b16 %v1757
        %v1766 = vunpack.c.l.b16 %v1758
        %v1767 = vpack.c.b16 %v1764, %v1763
        %v1768 = vpack.c.b16 %v1766, %v1765
        %v1772 = vsel %vm832, %v1753, 0
        %1774 = vmatprep.subr.bf16.mxu0 0
        %1775 = vmatpush1.bf16.msra.mxu0 0
        %1776 = vmatprep.subr.bf16.mxu0 0
        %1777 = vmatpush1.bf16.msra.mxu0 0
        %1778 = vmatprep.subr.bf16.mxu0 0
        %1779 = vmatpush1.bf16.msra.mxu0 0
        %1780 = vmatprep.subr.bf16.mxu0 0
        %1781 = vmatpush1.bf16.msra.mxu0 0
        %1782 = vmatprep.subr.bf16.mxu0 0
        %1783 = vmatpush1.bf16.msra.mxu0 0
        %1784 = vmatprep.subr.bf16.mxu0 0
        %1785 = vmatpush1.bf16.msra.mxu0 0
        %1786 = vmatprep.subr.bf16.mxu0 0
        %1787 = vmatpush1.bf16.msra.mxu0 %v1768
        %1788 = vmatprep.subr.bf16.mxu0 0
        %1789 = vmatpush1.bf16.msra.mxu0 %v1767
        %1790 = vmatprep.subr.bf16.mxu0 0
        %1791 = vmatpush2.bf16.msra.mxu0 0
        %1792 = vmatprep.subr.bf16.mxu0 0
        %1793 = vmatpush2.bf16.msra.mxu0 0
        %1794 = vmatprep.subr.bf16.mxu0 0
        %1795 = vmatpush2.bf16.msra.mxu0 0
        %1796 = vmatprep.subr.bf16.mxu0 0
        %1797 = vmatpush2.bf16.msra.mxu0 0
        %1798 = vmatprep.subr.bf16.mxu0 0
        %1799 = vmatpush2.bf16.msra.mxu0 0
        %1800 = vmatprep.subr.bf16.mxu0 0
        %1801 = vmatpush2.bf16.msra.mxu0 0
        %1802 = vmatprep.subr.bf16.mxu0 0
        %1803 = vmatpush2.bf16.msra.mxu0 0
        %1804 = vmatprep.subr.bf16.mxu0 0
        %1805 = vmatpush2.bf16.msra.mxu0 0
        %1806 = vmatprep.mubr.bf16.mxu0 0
        %1807 = vmatmul.mubr.bf16.gmra.mxu0 %v1772
        %v1808 = vpop.f32.mrf.mxu0
        %v1809 = vadd.f32 0.0, %v1808
        %v1810 = vpop.f32.mrf.mxu0
        %v1811 = vpop.f32.mrf.mxu0
        %v1812 = vadd.f32 0.0, %v1811
        %v1813 = vpop.f32.mrf.mxu0
        %1814 = vdwg.mxu0
        %v1815 = vld [vmem:[%s14] sm:$0xf]
        %v1816 = vld [vmem:[%s14 + $0x4] sm:$0xf]
        %v1817 = vld [vmem:[%s14 + $0x8] sm:$0xf]
        %v1818 = vld [vmem:[%s14 + $0xc] sm:$0xf]
        %v1823 = vunpack.c.l.b16 %v1815
        %v1824 = vunpack.c.l.b16 %v1816
        %v1825 = vunpack.c.l.b16 %v1817
        %v1826 = vunpack.c.l.b16 %v1818
        %v1827 = vpack.c.b16 %v1824, %v1823
        %v1828 = vpack.c.b16 %v1826, %v1825
        %v1832 = vsel %vm832, %v1754, 0
        %1834 = vmatprep.subr.bf16.mxu0 0
        %1835 = vmatpush1.bf16.msra.mxu0 0
        %1836 = vmatprep.subr.bf16.mxu0 0
        %1837 = vmatpush1.bf16.msra.mxu0 0
        %1838 = vmatprep.subr.bf16.mxu0 0
        %1839 = vmatpush1.bf16.msra.mxu0 0
        %1840 = vmatprep.subr.bf16.mxu0 0
        %1841 = vmatpush1.bf16.msra.mxu0 0
        %1842 = vmatprep.subr.bf16.mxu0 0
        %1843 = vmatpush1.bf16.msra.mxu0 0
        %1844 = vmatprep.subr.bf16.mxu0 0
        %1845 = vmatpush1.bf16.msra.mxu0 0
        %1846 = vmatprep.subr.bf16.mxu0 0
        %1847 = vmatpush1.bf16.msra.mxu0 %v1828
        %1848 = vmatprep.subr.bf16.mxu0 0
        %1849 = vmatpush1.bf16.msra.mxu0 %v1827
        %1850 = vmatprep.subr.bf16.mxu0 0
        %1851 = vmatpush2.bf16.msra.mxu0 0
        %1852 = vmatprep.subr.bf16.mxu0 0
        %1853 = vmatpush2.bf16.msra.mxu0 0
        %1854 = vmatprep.subr.bf16.mxu0 0
        %1855 = vmatpush2.bf16.msra.mxu0 0
        %1856 = vmatprep.subr.bf16.mxu0 0
        %1857 = vmatpush2.bf16.msra.mxu0 0
        %1858 = vmatprep.subr.bf16.mxu0 0
        %1859 = vmatpush2.bf16.msra.mxu0 0
        %1860 = vmatprep.subr.bf16.mxu0 0
        %1861 = vmatpush2.bf16.msra.mxu0 0
        %1862 = vmatprep.subr.bf16.mxu0 0
        %1863 = vmatpush2.bf16.msra.mxu0 0
        %1864 = vmatprep.subr.bf16.mxu0 0
        %1865 = vmatpush2.bf16.msra.mxu0 0
        %1866 = vmatprep.mubr.bf16.mxu0 0
        %1867 = vmatmul.mubr.bf16.gmra.mxu0 %v1832
        %v1868 = vpop.f32.mrf.mxu0
        %v1869 = vadd.f32 0.0, %v1868
        %v1870 = vpop.f32.mrf.mxu0
        %v1871 = vpop.f32.mrf.mxu0
        %v1872 = vadd.f32 0.0, %v1871
        %v1873 = vpop.f32.mrf.mxu0
        %1874 = vdwg.mxu0
        %v1875 = vpack.c.bf16 %v1812, %v1809
        %v1876 = vpack.c.bf16 %v1872, %v1869
        %v1878 = vsel %vm832, %v1875, 0
        %v1881 = vsel %vm832, %v1876, 0
        %1883 = vmatprep.subr.bf16.mxu0 0
        %1884 = vmatpush1.bf16.xpose.msra.mxu0 0
        %1885 = vmatprep.subr.bf16.mxu0 0
        %1886 = vmatpush1.bf16.xpose.msra.mxu0 0
        %1887 = vmatprep.subr.bf16.mxu0 0
        %1888 = vmatpush1.bf16.xpose.msra.mxu0 0
        %1889 = vmatprep.subr.bf16.mxu0 0
        %1890 = vmatpush1.bf16.xpose.msra.mxu0 0
        %1891 = vmatprep.subr.bf16.mxu0 0
        %1892 = vmatpush1.bf16.xpose.msra.mxu0 0
        %1893 = vmatprep.subr.bf16.mxu0 0
        %1894 = vmatpush1.bf16.xpose.msra.mxu0 0
        %1895 = vmatprep.subr.bf16.mxu0 0
        %1896 = vmatpush1.bf16.xpose.msra.mxu0 0
        %1897 = vmatprep.subr.bf16.mxu0 0
        %1898 = vmatpush1.bf16.xpose.msra.mxu0 %v1881
        %1899 = vmatprep.subr.bf16.mxu0 0
        %1900 = vmatpush2.bf16.xpose.msra.mxu0 0
        %1901 = vmatprep.subr.bf16.mxu0 0
        %1902 = vmatpush2.bf16.xpose.msra.mxu0 0
        %1903 = vmatprep.subr.bf16.mxu0 0
        %1904 = vmatpush2.bf16.xpose.msra.mxu0 0
        %1905 = vmatprep.subr.bf16.mxu0 0
        %1906 = vmatpush2.bf16.xpose.msra.mxu0 0
        %1907 = vmatprep.subr.bf16.mxu0 0
        %1908 = vmatpush2.bf16.xpose.msra.mxu0 0
        %1909 = vmatprep.subr.bf16.mxu0 0
        %1910 = vmatpush2.bf16.xpose.msra.mxu0 0
        %1911 = vmatprep.subr.bf16.mxu0 0
        %1912 = vmatpush2.bf16.xpose.msra.mxu0 0
        %1913 = vmatprep.subr.bf16.mxu0 0
        %1914 = vmatpush2.bf16.xpose.msra.mxu0 0
        %1915 = vmatprep.mubr.bf16.mxu0 0
        %1916 = vmatmul.mubr.bf16.gmra.mxu0 %v1878
        %v1917 = vpop.f32.mrf.mxu0
        %v1918 = vadd.f32 0.0, %v1917
        %v1919 = vpop.f32.mrf.mxu0
        %v1920 = vpop.f32.mrf.mxu0
        %v1921 = vadd.f32 0.0, %v1920
        %v1922 = vpop.f32.mrf.mxu0
        %1923 = vdwg.mxu0
        %v1924 = vmul.f32 %v1918, 0.17677669
        %v1925 = vmul.f32 %v1921, 0.17677669
        %vm1926 = vcmask 130048
        %v1927 = vsel %vm1926, %v1924, -inf
        %1928 = vmax.xlane.f32.xlu0 %v1927
        %v1929 = vpop.xlane.xlu0 %1928
        %v1930 = vsel %vm1926, %v1925, -inf
        %1931 = vmax.xlane.f32.xlu0 %v1930
        %v1932 = vpop.xlane.xlu0 %1931
        %v1933 = vsub.f32 %v1924, %v1929
        %v1934 = vsub.f32 %v1925, %v1932
        %v1935 = vmul.f32 %v1933, 1.442695
        %v1936 = vpow.pop %v1935
        %v1937 = vmul.f32 %v1934, 1.442695
        %v1938 = vpow.pop %v1937
        %v1939 = vsel %vm1926, %v1936, 0.0
        %1940 = vadd.xlane.f32.xlu0 %v1939
        %v1941 = vpop.xlane.xlu0 %1940
        %v1942 = vsel %vm1926, %v1938, 0.0
        %1943 = vadd.xlane.f32.xlu0 %v1942
        %v1944 = vpop.xlane.xlu0 %1943
        %v1945 = vrcp.pop %v1941
        %v1946 = vmul.f32 %v1936, %v1945
        %v1947 = vrcp.pop %v1944
        %v1948 = vmul.f32 %v1938, %v1947
        %v1949 = vpack.c.bf16 %v1948, %v1946
        %1951 = vrot.lane.b32.xlu0 %v1876, 96
        %v1952 = vpop.permute.xlu0 %1951
        %v1955 = vsel %vm1926, %v1949, 0
        %1957 = vmatprep.subr.bf16.mxu0 0
        %1958 = vmatpush1.bf16.msra.mxu0 0
        %1959 = vmatprep.subr.bf16.mxu0 0
        %1960 = vmatpush1.bf16.msra.mxu0 0
        %1961 = vmatprep.subr.bf16.mxu0 0
        %1962 = vmatpush1.bf16.msra.mxu0 0
        %1963 = vmatprep.subr.bf16.mxu0 0
        %1964 = vmatpush1.bf16.msra.mxu0 0
        %1965 = vmatprep.subr.bf16.mxu0 0
        %1966 = vmatpush1.bf16.msra.mxu0 0
        %1967 = vmatprep.subr.bf16.mxu0 0
        %1968 = vmatpush1.bf16.msra.mxu0 0
        %1969 = vmatprep.subr.bf16.mxu0 0
        %1970 = vmatpush1.bf16.msra.mxu0 0
        %1971 = vmatprep.subr.bf16.mxu0 0
        %1972 = vmatpush1.bf16.msra.mxu0 %v1952
        %1973 = vmatprep.subr.bf16.mxu0 0
        %1974 = vmatpush2.bf16.msra.mxu0 0
        %1975 = vmatprep.subr.bf16.mxu0 0
        %1976 = vmatpush2.bf16.msra.mxu0 0
        %1977 = vmatprep.subr.bf16.mxu0 0
        %1978 = vmatpush2.bf16.msra.mxu0 0
        %1979 = vmatprep.subr.bf16.mxu0 0
        %1980 = vmatpush2.bf16.msra.mxu0 0
        %1981 = vmatprep.subr.bf16.mxu0 0
        %1982 = vmatpush2.bf16.msra.mxu0 0
        %1983 = vmatprep.subr.bf16.mxu0 0
        %1984 = vmatpush2.bf16.msra.mxu0 0
        %1985 = vmatprep.subr.bf16.mxu0 0
        %1986 = vmatpush2.bf16.msra.mxu0 0
        %1987 = vmatprep.subr.bf16.mxu0 0
        %1988 = vmatpush2.bf16.msra.mxu0 0
        %1989 = vmatprep.mubr.bf16.mxu0 0
        %1990 = vmatmul.mubr.bf16.gmra.mxu0 %v1955
        %v1991 = vpop.f32.mrf.mxu0
        %v1992 = vadd.f32 0.0, %v1991
        %v1993 = vpop.f32.mrf.mxu0
        %v1994 = vpop.f32.mrf.mxu0
        %v1995 = vadd.f32 0.0, %v1994
        %v1996 = vpop.f32.mrf.mxu0
        %1997 = vdwg.mxu0
        %v1998 = vpack.c.bf16 %v1995, %v1992
        %v1999 = vld [vmem:[%s15] sm:$0xf]
        %v2000 = vld [vmem:[%s15 + $0x4] sm:$0xf]
        %v2001 = vld [vmem:[%s15 + $0x8] sm:$0xf]
        %v2002 = vld [vmem:[%s15 + $0xc] sm:$0xf]
        %v2007 = vunpack.c.l.b16 %v1999
        %v2008 = vunpack.c.l.b16 %v2000
        %v2009 = vunpack.c.l.b16 %v2001
        %v2010 = vunpack.c.l.b16 %v2002
        %v2011 = vpack.c.b16 %v2008, %v2007
        %v2012 = vpack.c.b16 %v2010, %v2009
        %v2016 = vsel %vm832, %v1998, 0
        %2018 = vmatprep.subr.bf16.mxu0 0
        %2019 = vmatpush1.bf16.msra.mxu0 0
        %2020 = vmatprep.subr.bf16.mxu0 0
        %2021 = vmatpush1.bf16.msra.mxu0 0
        %2022 = vmatprep.subr.bf16.mxu0 0
        %2023 = vmatpush1.bf16.msra.mxu0 0
        %2024 = vmatprep.subr.bf16.mxu0 0
        %2025 = vmatpush1.bf16.msra.mxu0 0
        %2026 = vmatprep.subr.bf16.mxu0 0
        %2027 = vmatpush1.bf16.msra.mxu0 0
        %2028 = vmatprep.subr.bf16.mxu0 0
        %2029 = vmatpush1.bf16.msra.mxu0 0
        %2030 = vmatprep.subr.bf16.mxu0 0
        %2031 = vmatpush1.bf16.msra.mxu0 %v2012
        %2032 = vmatprep.subr.bf16.mxu0 0
        %2033 = vmatpush1.bf16.msra.mxu0 %v2011
        %2034 = vmatprep.subr.bf16.mxu0 0
        %2035 = vmatpush2.bf16.msra.mxu0 0
        %2036 = vmatprep.subr.bf16.mxu0 0
        %2037 = vmatpush2.bf16.msra.mxu0 0
        %2038 = vmatprep.subr.bf16.mxu0 0
        %2039 = vmatpush2.bf16.msra.mxu0 0
        %2040 = vmatprep.subr.bf16.mxu0 0
        %2041 = vmatpush2.bf16.msra.mxu0 0
        %2042 = vmatprep.subr.bf16.mxu0 0
        %2043 = vmatpush2.bf16.msra.mxu0 0
        %2044 = vmatprep.subr.bf16.mxu0 0
        %2045 = vmatpush2.bf16.msra.mxu0 0
        %2046 = vmatprep.subr.bf16.mxu0 0
        %2047 = vmatpush2.bf16.msra.mxu0 0
        %2048 = vmatprep.subr.bf16.mxu0 0
        %2049 = vmatpush2.bf16.msra.mxu0 0
        %2050 = vmatprep.mubr.bf16.mxu0 0
        %2051 = vmatmul.mubr.bf16.gmra.mxu0 %v2016
        %v2052 = vpop.f32.mrf.mxu0
        %v2053 = vadd.f32 0.0, %v2052
        %v2054 = vpop.f32.mrf.mxu0
        %v2055 = vpop.f32.mrf.mxu0
        %v2056 = vadd.f32 0.0, %v2055
        %v2057 = vpop.f32.mrf.mxu0
        %2058 = vdwg.mxu0
        %2061 = vrot.lane.b32.xlu0 %v1869, 96
        %v2062 = vpop.permute.xlu0 %2061
        %2063 = vrot.lane.b32.xlu0 %v1872, 96
        %v2064 = vpop.permute.xlu0 %2063
        %v2067 = vadd.f32 %v1809, %v2062
        %v2068 = vadd.f32 %v1812, %v2064
        %v2069 = vld [vmem:[%s16] sm:$0x1]
        %v2071 = vlaneseq
        %v2072 = vshrl.u32 %v2071, 7
        %v2073 = vsub.s32 0, %v2072
        %v2074 = vrot.slane %v2069, %v2073
        %2075 = vrot.lane.b32.xlu0 %v2074, 32
        %v2076 = vpop.permute.xlu0 %2075
        %v2078 = vadd.f32 %v2067, %v2076
        %v2079 = vadd.f32 %v2068, %v2076
        %v2080 = vxor.u32 %v2078, 2147483648
        %v2081 = vxor.u32 %v2079, 2147483648
        %v2082 = vmul.f32 %v2080, 1.442695
        %v2083 = vpow.pop %v2082
        %v2084 = vmul.f32 %v2081, 1.442695
        %v2085 = vpow.pop %v2084
        %v2086 = vadd.f32 %v2083, 1.0
        %v2087 = vadd.f32 %v2085, 1.0
        %v2088 = vrcp.pop %v2086
        %v2089 = vmul.f32 1.0, %v2088
        %v2090 = vrcp.pop %v2087
        %v2091 = vmul.f32 1.0, %v2090
        %2094 = vrot.lane.b32.xlu0 %v965, 32
        %v2095 = vpop.permute.xlu0 %2094
        %2096 = vrot.lane.b32.xlu0 %v966, 32
        %v2097 = vpop.permute.xlu0 %2096
        %v2100 = vmul.f32 %v2089, %v2095
        %v2101 = vmul.f32 %v2091, %v2097
        %v2102 = vsub.f32 1.0, %v2089
        %v2103 = vsub.f32 1.0, %v2091
        %2106 = vrot.lane.b32.xlu0 %v1751, 32
        %v2107 = vpop.permute.xlu0 %2106
        %2108 = vrot.lane.b32.xlu0 %v1752, 32
        %v2109 = vpop.permute.xlu0 %2108
        %v2112 = vmul.f32 %v2102, %v2107
        %v2113 = vmul.f32 %v2103, %v2109
        %v2114 = vadd.f32 %v2100, %v2112
        %v2115 = vadd.f32 %v2101, %v2113
        %2118 = vrot.lane.b32.xlu0 %v2053, 32
        %v2119 = vpop.permute.xlu0 %2118
        %2120 = vrot.lane.b32.xlu0 %v2056, 32
        %v2121 = vpop.permute.xlu0 %2120
        %v2124 = vadd.f32 %v2114, %v2119
        %v2125 = vadd.f32 %v2115, %v2121
        %v2126 = vsub.f32 %v965, %v1751
        %v2127 = vsub.f32 %v966, %v1752
        %v2128 = vand.u32 2147483647, %v2126
        %v2129 = vand.u32 2147483647, %v2127
        %v2130 = vpack.c.bf16 %v2129, %v2128
        %v2131 = vld [vmem:[%s17] sm:$0xf]
        %v2132 = vld [vmem:[%s17 + $0x4] sm:$0xf]
        %v2133 = vld [vmem:[%s17 + $0x8] sm:$0xf]
        %v2134 = vld [vmem:[%s17 + $0xc] sm:$0xf]
        %v2135 = vld [vmem:[%s18] sm:$0x1]
        %v2137 = vlaneseq
        %v2138 = vshrl.u32 %v2137, 7
        %v2139 = vsub.s32 0, %v2138
        %v2140 = vrot.slane %v2135, %v2139
        %v2146 = vunpack.c.l.b16 %v2131
        %v2147 = vunpack.c.l.b16 %v2132
        %v2148 = vunpack.c.l.b16 %v2133
        %v2149 = vunpack.c.l.b16 %v2134
        %v2150 = vpack.c.b16 %v2147, %v2146
        %v2151 = vpack.c.b16 %v2149, %v2148
        %v2155 = vsel %vm832, %v2130, 0
        %2157 = vmatprep.subr.bf16.mxu0 0
        %2158 = vmatpush1.bf16.msra.mxu0 0
        %2159 = vmatprep.subr.bf16.mxu0 0
        %2160 = vmatpush1.bf16.msra.mxu0 0
        %2161 = vmatprep.subr.bf16.mxu0 0
        %2162 = vmatpush1.bf16.msra.mxu0 0
        %2163 = vmatprep.subr.bf16.mxu0 0
        %2164 = vmatpush1.bf16.msra.mxu0 0
        %2165 = vmatprep.subr.bf16.mxu0 0
        %2166 = vmatpush1.bf16.msra.mxu0 0
        %2167 = vmatprep.subr.bf16.mxu0 0
        %2168 = vmatpush1.bf16.msra.mxu0 0
        %2169 = vmatprep.subr.bf16.mxu0 0
        %2170 = vmatpush1.bf16.msra.mxu0 %v2151
        %2171 = vmatprep.subr.bf16.mxu0 0
        %2172 = vmatpush1.bf16.msra.mxu0 %v2150
        %2173 = vmatprep.subr.bf16.mxu0 0
        %2174 = vmatpush2.bf16.msra.mxu0 0
        %2175 = vmatprep.subr.bf16.mxu0 0
        %2176 = vmatpush2.bf16.msra.mxu0 0
        %2177 = vmatprep.subr.bf16.mxu0 0
        %2178 = vmatpush2.bf16.msra.mxu0 0
        %2179 = vmatprep.subr.bf16.mxu0 0
        %2180 = vmatpush2.bf16.msra.mxu0 0
        %2181 = vmatprep.subr.bf16.mxu0 0
        %2182 = vmatpush2.bf16.msra.mxu0 0
        %2183 = vmatprep.subr.bf16.mxu0 0
        %2184 = vmatpush2.bf16.msra.mxu0 0
        %2185 = vmatprep.subr.bf16.mxu0 0
        %2186 = vmatpush2.bf16.msra.mxu0 0
        %2187 = vmatprep.subr.bf16.mxu0 0
        %2188 = vmatpush2.bf16.msra.mxu0 0
        %2189 = vmatprep.mubr.bf16.mxu0 0
        %2190 = vmatmul.mubr.bf16.gmra.mxu0 %v2155
        %v2191 = vpop.f32.mrf.mxu0
        %v2192 = vadd.f32 %v2140, %v2191
        %v2193 = vpop.f32.mrf.mxu0
        %v2194 = vpop.f32.mrf.mxu0
        %v2195 = vadd.f32 %v2140, %v2194
        %v2196 = vpop.f32.mrf.mxu0
        %2197 = vdwg.mxu0
        %v2198 = vmax.f32 %v2192, 0.0
        %v2199 = vmax.f32 %v2195, 0.0
        %v2200 = vld [vmem:[%s19] sm:$0x1]
        %v2202 = vlaneseq
        %v2203 = vshrl.u32 %v2202, 7
        %v2204 = vsub.s32 0, %v2203
        %v2205 = vrot.slane %v2200, %v2204
        %v2207 = vmul.f32 %v2198, %v2205
        %v2208 = vmul.f32 %v2199, %v2205
        %v2209 = vsel %vm1926, %v2207, 0.0
        %2210 = vadd.xlane.f32.xlu0 %v2209
        %v2211 = vpop.xlane.xlu0 %2210
        %v2212 = vsel %vm1926, %v2208, 0.0
        %2213 = vadd.xlane.f32.xlu0 %v2212
        %v2214 = vpop.xlane.xlu0 %2213
        %v2215 = vld [vmem:[#allocation3] sm:$0x1]
        %v2217 = vlaneseq
        %v2218 = vshrl.u32 %v2217, 7
        %v2219 = vsub.s32 0, %v2218
        %v2220 = vrot.slane %v2215, %v2219
        %v2222 = vadd.f32 %v2211, %v2220
        %v2223 = vadd.f32 %v2214, %v2220
        %v2224 = vxor.u32 %v2222, 2147483648
        %v2225 = vxor.u32 %v2223, 2147483648
        %v2226 = vmul.f32 %v2224, 1.442695
        %v2227 = vpow.pop %v2226
        %v2228 = vmul.f32 %v2225, 1.442695
        %v2229 = vpow.pop %v2228
        %v2230 = vadd.f32 %v2227, 1.0
        %v2231 = vadd.f32 %v2229, 1.0
        %v2232 = vrcp.pop %v2230
        %v2233 = vmul.f32 1.0, %v2232
        %v2234 = vrcp.pop %v2231
        %v2235 = vmul.f32 1.0, %v2234
        %v2236 = vsub.f32 1.0, %v2233
        %v2237 = vsub.f32 1.0, %v2235
        %2239 = vset.pattern.permute.xlu0 0
        %2240 = vperm.xlu0 %2239, %v2236
        %v2241 = vpop.permute.xlu0 %2240
        %2244 = vset.pattern.permute.xlu0 0
        %2245 = vperm.xlu0 %2244, %v2237
        %v2246 = vpop.permute.xlu0 %2245
        %v2248 = vmul.f32 %v965, %v2241
        %v2249 = vmul.f32 %v966, %v2246
        %2251 = vset.pattern.permute.xlu0 0
        %2252 = vperm.xlu0 %2251, %v2233
        %v2253 = vpop.permute.xlu0 %2252
        %2256 = vset.pattern.permute.xlu0 0
        %2257 = vperm.xlu0 %2256, %v2235
        %v2258 = vpop.permute.xlu0 %2257
        %v2260 = vmul.f32 %v1751, %v2253
        %v2261 = vmul.f32 %v1752, %v2258
        %v2262 = vadd.f32 %v2248, %v2260
        %v2263 = vadd.f32 %v2249, %v2261
        %2266 = vrot.lane.b32.xlu0 %v2262, 32
        %v2267 = vpop.permute.xlu0 %2266
        %2268 = vrot.lane.b32.xlu0 %v2263, 32
        %v2269 = vpop.permute.xlu0 %2268
        %v2272 = vadd.f32 %v2124, %v2267
        %v2273 = vadd.f32 %v2125, %v2269
        %v2274 = vmul.f32 %v2272, 0.5
        %v2275 = vmul.f32 %v2273, 0.5
        %v2276 = vpack.c.bf16 %v2275, %v2274
        %v2277 = vld [vmem:[%s21] sm:$0xf]
        %v2278 = vld [vmem:[%s21 + $0x4] sm:$0xf]
        %v2279 = vld [vmem:[%s21 + $0x8] sm:$0xf]
        %v2280 = vld [vmem:[%s21 + $0xc] sm:$0xf]
        %v2281 = vld [vmem:[%s22] sm:$0x1]
        %v2283 = vlaneseq
        %v2284 = vshrl.u32 %v2283, 7
        %v2285 = vsub.s32 0, %v2284
        %v2286 = vrot.slane %v2281, %v2285
        %2289 = vrot.lane.b32.xlu0 %v2276, 96
        %v2290 = vpop.permute.xlu0 %2289
        %v2295 = vunpack.c.l.b16 %v2277
        %v2296 = vunpack.c.l.b16 %v2278
        %v2297 = vunpack.c.l.b16 %v2279
        %v2298 = vunpack.c.l.b16 %v2280
        %v2299 = vpack.c.b16 %v2296, %v2295
        %v2300 = vpack.c.b16 %v2298, %v2297
        %v2304 = vsel %vm832, %v2290, 0
        %2306 = vmatprep.subr.bf16.mxu0 0
        %2307 = vmatpush1.bf16.msra.mxu0 0
        %2308 = vmatprep.subr.bf16.mxu0 0
        %2309 = vmatpush1.bf16.msra.mxu0 0
        %2310 = vmatprep.subr.bf16.mxu0 0
        %2311 = vmatpush1.bf16.msra.mxu0 0
        %2312 = vmatprep.subr.bf16.mxu0 0
        %2313 = vmatpush1.bf16.msra.mxu0 0
        %2314 = vmatprep.subr.bf16.mxu0 0
        %2315 = vmatpush1.bf16.msra.mxu0 0
        %2316 = vmatprep.subr.bf16.mxu0 0
        %2317 = vmatpush1.bf16.msra.mxu0 0
        %2318 = vmatprep.subr.bf16.mxu0 0
        %2319 = vmatpush1.bf16.msra.mxu0 %v2300
        %2320 = vmatprep.subr.bf16.mxu0 0
        %2321 = vmatpush1.bf16.msra.mxu0 %v2299
        %2322 = vmatprep.subr.bf16.mxu0 0
        %2323 = vmatpush2.bf16.msra.mxu0 0
        %2324 = vmatprep.subr.bf16.mxu0 0
        %2325 = vmatpush2.bf16.msra.mxu0 0
        %2326 = vmatprep.subr.bf16.mxu0 0
        %2327 = vmatpush2.bf16.msra.mxu0 0
        %2328 = vmatprep.subr.bf16.mxu0 0
        %2329 = vmatpush2.bf16.msra.mxu0 0
        %2330 = vmatprep.subr.bf16.mxu0 0
        %2331 = vmatpush2.bf16.msra.mxu0 0
        %2332 = vmatprep.subr.bf16.mxu0 0
        %2333 = vmatpush2.bf16.msra.mxu0 0
        %2334 = vmatprep.subr.bf16.mxu0 0
        %2335 = vmatpush2.bf16.msra.mxu0 0
        %2336 = vmatprep.subr.bf16.mxu0 0
        %2337 = vmatpush2.bf16.msra.mxu0 0
        %2338 = vmatprep.mubr.bf16.mxu0 0
        %2339 = vmatmul.mubr.bf16.gmra.mxu0 %v2304
        %v2340 = vpop.f32.mrf.mxu0
        %v2341 = vadd.f32 %v2286, %v2340
        %v2342 = vpop.f32.mrf.mxu0
        %v2343 = vpop.f32.mrf.mxu0
        %v2344 = vadd.f32 %v2286, %v2343
        %v2345 = vpop.f32.mrf.mxu0
        %2346 = vdwg.mxu0
        %v2347 = vsel %vm832, %v2341, 0.0
        %2348 = vadd.xlane.f32.xlu0 %v2347
        %v2349 = vpop.xlane.xlu0 %2348
        %v2350 = vsel %vm832, %v2344, 0.0
        %2351 = vadd.xlane.f32.xlu0 %v2350
        %v2352 = vpop.xlane.xlu0 %2351
        %v2353 = vrcp.pop 32.0
        %v2354 = vmul.f32 %v2349, %v2353
        %v2355 = vmul.f32 %v2352, %v2353
        %v2356 = vsub.f32 %v2341, %v2354
        %v2357 = vsub.f32 %v2344, %v2355
        %v2358 = vmul.f32 %v2356, %v2356
        %v2359 = vmul.f32 %v2357, %v2357
        %v2360 = vsel %vm832, %v2358, 0.0
        %2361 = vadd.xlane.f32.xlu0 %v2360
        %v2362 = vpop.xlane.xlu0 %2361
        %v2363 = vsel %vm832, %v2359, 0.0
        %2364 = vadd.xlane.f32.xlu0 %v2363
        %v2365 = vpop.xlane.xlu0 %2364
        %v2366 = vmul.f32 %v2362, %v2353
        %v2367 = vmul.f32 %v2365, %v2353
        %v2368 = vadd.f32 %v2366, 1e-05
        %v2369 = vadd.f32 %v2367, 1e-05
        %v2370 = vrsqrt.pop %v2368
        %v2371 = vrsqrt.pop %v2369
        %v2372 = vmul.f32 %v2356, %v2370
        %v2373 = vmul.f32 %v2357, %v2371
        %v2374 = vld [vmem:[%s23] sm:$0x1]
        %v2376 = vlaneseq
        %v2377 = vshrl.u32 %v2376, 7
        %v2378 = vsub.s32 0, %v2377
        %v2379 = vrot.slane %v2374, %v2378
        %v2381 = vmul.f32 %v2372, %v2379
        %v2382 = vmul.f32 %v2373, %v2379
        %v2383 = vld [vmem:[%s24] sm:$0x1]
        %v2385 = vlaneseq
        %v2386 = vshrl.u32 %v2385, 7
        %v2387 = vsub.s32 0, %v2386
        %v2388 = vrot.slane %v2383, %v2387
        %v2390 = vadd.f32 %v2381, %v2388
        %v2391 = vadd.f32 %v2382, %v2388
        %v2392 = vmax.f32 %v2390, 0.0
        %v2393 = vmax.f32 %v2391, 0.0
        %v2394 = vadd.f32 %v2392, %v806
        %v2395 = vadd.f32 %v2393, %v807
        %2396 = vst.msk [vmem:[%s787] sm:$0xff] %vm832, %v2394
        %2397 = vst.msk [vmem:[%s787 + $0x8] sm:$0xff] %vm832, %v2395
        %vm2398 = vcmask 7168
        %2399 = vst.msk [vmem:[%s804] sm:$0xff] %vm2398, %v2233
        %2400 = vst.msk [vmem:[%s804 + $0x8] sm:$0xff] %vm2398, %v2235
        %s2401 = sand.u32 %s581, 1
        %s2402 = scalar_lea.sflag [#allocation5], %s2401
        %s2403 = sand.u32 %s581, 1
        %s2404 = smul.addr %s2403, 16
        %s2405 = scalar_lea.vmem [#allocation4], %s2404
        %p2406 = scmp.lt.s32.totalorder %s43, 1
        %s2407 = scalar_select %p2406, %s43, 1
        %s2408 = smul.addr %s2407, 2
        %s2409 = smul.addr %s2408, 8
        %s2410 = scalar_lea.vmem %s26, %s2409
        // Predicated region
        $region121: #{dual_branch_block.1} parent=119 // pred_check
          %p2411 = pneg %p591
        $region122: #{dual_branch_block.1} parent=119 // pred_check_branch
          %2413 = sbr.rel (%p2411) target = $region124
        $region123: #{dual_branch_block.1} parent=119 // pred_region
          %s2415 = ssub.s32 256, 256
          %2416 = vsyncadd %s2402, %s2415
          %s2417 = smul.addr %s43, 2
          %s2418 = smul.addr %s2417, 128
          %s2419 = scalar_lea.hbm %s25, %s2418
          %s2420 = sshll.u32 %s2405, 4
          %s2421 = int_to_ptr.vmem [resolvable:$true] %s2420
          %2426 = dma.vmem_to_hbm [thread:$0]  %s2421, 256, %s2419, %s2402, 128, 128, 8
        $region124: #{dual_branch_block.1} parent=119 // pred_fallthru
          _
        // Predicated region
        $region125: #{dual_branch_block.1} parent=119 // pred_check
          %p2427 = pneg %p617
        $region126: #{dual_branch_block.1} parent=119 // pred_check_branch
          %2429 = sbr.rel (%p2427) target = $region128
        $region127: #{dual_branch_block.1} parent=119 // pred_region
          _
        $region128: #{dual_branch_block.1} parent=119 // pred_fallthru
          _
      $region120: #{dual_branch_block.1} parent=5 // pred_fallthru
        _
      %p2430 = scmp.le.s32.totalorder 2, %s38
      // Predicated region
      $region129: #{dual_branch_block.1} parent=5 // pred_check
        %p2431 = pneg %p2430
      $region130: #{dual_branch_block.1} parent=5 // pred_check_branch
        %2433 = sbr.rel (%p2431) target = $region132
      $region131: #{dual_branch_block.1} parent=5 // pred_region
        %s2434 = ssub.s32 %s38, 2
        // Predicated region
        $region133: #{dual_branch_block.1} parent=131 // pred_check
          %p2435 = pneg %p597
        $region134: #{dual_branch_block.1} parent=131 // pred_check_branch
          %2437 = sbr.rel (%p2435) target = $region136
        $region135: #{dual_branch_block.1} parent=131 // pred_region
          %s2438 = sand.u32 %s582, 1
          %s2439 = scalar_lea.sflag [#allocation5], %s2438
          %s2440 = sand.u32 %s582, 1
          %s2441 = smul.addr %s2440, 16
          %s2442 = scalar_lea.vmem [#allocation4], %s2441
          %2443 = dma.done %s2439, 256
        $region136: #{dual_branch_block.1} parent=131 // pred_fallthru
          _
        // Predicated region
        $region137: #{dual_branch_block.1} parent=131 // pred_check
          %p2444 = pneg %p623
        $region138: #{dual_branch_block.1} parent=131 // pred_check_branch
          %2446 = sbr.rel (%p2444) target = $region140
        $region139: #{dual_branch_block.1} parent=131 // pred_region
          %p2447 = scmp.lt.s32.totalorder %s44, 1
          %s2448 = scalar_select %p2447, %s44, 1
          %s2449 = smul.addr %s2448, 2
          %s2450 = smul.addr %s2449, 8
          %s2451 = scalar_lea.vmem %s26, %s2450
        $region140: #{dual_branch_block.1} parent=131 // pred_fallthru
          _
      $region132: #{dual_branch_block.1} parent=5 // pred_fallthru
        _
    $region6: #{dual_branch_block.1} parent=1 // loop_footer
      %s42 = sadd.s32 1, %s38
    $region7: #{dual_branch_block.1} parent=1 // loop_footer_branch
      %37 = sbr.rel target = $region3
    $region8: #{dual_branch_block.1} parent=1 // loop_exit
      _
    %2452 = vsyncpa [#allocation5], 1
    %s2453 = scalar_lea.sflag [#allocation5], 1
    %2454 = vsyncpa %s2453, 1

</llo_original>
